<compile_context>
chip_gen: v6e
topology: v6e:2x2x1
jax: 0.10.0
libtpu: 0.0.40
codegen_flags: <defaults>
</compile_context>

<pallas_src>
import functools
import math

import jax
import jax.numpy as jnp
from jax.experimental import pallas as pl
from jax.experimental.pallas import tpu as pltpu


def _layernorm(x, gamma, beta, eps=1e-5):
    mu = jnp.mean(x, axis=-1, keepdims=True)
    var = jnp.mean((x - mu) ** 2, axis=-1, keepdims=True)
    return (x - mu) * jax.lax.rsqrt(var + eps) * gamma + beta


def encoder_block_kernel(vl_ref, x_ref, wqkv_ref, bqkv_ref, wo_ref, bo_ref,
                         g1_ref, be1_ref, w1_ref, b1_ref, w2_ref, b2_ref,
                         g2_ref, be2_ref, o_ref, *, num_heads):
    Bt, S, H = x_ref.shape
    nh = num_heads
    hd = H // nh
    base = pl.program_id(0) * Bt

    # ---- load the (Bt, S, H) activation slab as one flat (Bt*S, H) f32 matrix ----
    x_f32 = x_ref[...].astype(jnp.float32).reshape(Bt * S, H)

    # ---- fused QKV projection: one fat MXU matmul (bf16 operands, f32 accumulate) ----
    # (1/sqrt(hd) score scale is pre-folded into the Q columns of wqkv/bqkv.)
    qkv = jnp.dot(x_f32.astype(jnp.bfloat16), wqkv_ref[...],
                  preferred_element_type=jnp.float32) + bqkv_ref[...]

    # ---- split heads with ONE reshape + ONE transpose (no per-(b,h) slices/stacks) ----
    # fused-weight column layout: [q_h0 .. q_h{nh-1} | k_h0 .. | v_h0 ..], each hd wide
    qkv4 = qkv.reshape(Bt, S, 3 * nh, hd)
    qkv4 = jnp.transpose(qkv4, (0, 2, 1, 3))                 # (Bt, 3*nh, S, hd)
    qh = qkv4[:, :nh].reshape(Bt * nh, S, hd).astype(jnp.bfloat16)
    kh = qkv4[:, nh:2 * nh].reshape(Bt * nh, S, hd).astype(jnp.bfloat16)
    vh = qkv4[:, 2 * nh:].reshape(Bt * nh, S, hd).astype(jnp.bfloat16)

    # ---- batched attention over all (batch, head) pairs at once ----
    scores = jnp.einsum("bqd,bkd->bqk", qh, kh,
                        preferred_element_type=jnp.float32).reshape(Bt, nh, S, S)

    # key-position mask built once per batch element, broadcast into all heads
    vl = jnp.stack([vl_ref[base + b] for b in range(Bt)]).reshape(Bt, 1, 1, 1)
    keypos = jax.lax.broadcasted_iota(jnp.int32, (Bt, 1, 1, S), 3)
    scores = jnp.where(keypos < vl, scores, jnp.float32(-1e6))

    # numerically-stable softmax (f32); denominator reciprocal on the EUP
    m = jnp.max(scores, axis=-1, keepdims=True)
    p = jnp.exp(scores - m)
    l = jnp.sum(p, axis=-1, keepdims=True)
    ctx = jnp.einsum("bqk,bkd->bqd",
                     p.reshape(Bt * nh, S, S).astype(jnp.bfloat16), vh,
                     preferred_element_type=jnp.float32)
    inv_l = pl.reciprocal(l, approx=True).reshape(Bt * nh, S, 1)
    ctx = ctx * inv_l

    # ---- merge heads back to (Bt*S, H): one transpose + reshape ----
    ctx = jnp.transpose(ctx.reshape(Bt, nh, S, hd), (0, 2, 1, 3)).reshape(Bt * S, H)

    # ---- output projection + residual + LayerNorm1 (dropout1 = identity) ----
    attn = jnp.dot(ctx.astype(jnp.bfloat16), wo_ref[...],
                   preferred_element_type=jnp.float32) + bo_ref[...]
    y = _layernorm(attn + x_f32, g1_ref[...], be1_ref[...])

    # ---- position-wise FFN + residual + LayerNorm2 (dropout2 = identity) ----
    h1 = jnp.dot(y.astype(jnp.bfloat16), w1_ref[...],
                 preferred_element_type=jnp.float32) + b1_ref[...]
    h1 = jnp.maximum(h1, 0.0)
    ffn = jnp.dot(h1.astype(jnp.bfloat16), w2_ref[...],
                  preferred_element_type=jnp.float32) + b2_ref[...]
    z = _layernorm(ffn + y, g2_ref[...], be2_ref[...])

    o_ref[...] = z.reshape(Bt, S, H).astype(o_ref.dtype)


# ---------------------------------------------------------------------------
# Wrapper-level sizing helpers (generation-aware)
# ---------------------------------------------------------------------------
def _physical_vmem_bytes():
    try:
        info = pltpu.get_tpu_info()
        for name in ("vmem_capacity_bytes", "vmem_size_bytes", "vmem_bytes"):
            v = getattr(info, name, None)
            if v:
                return int(v)
    except Exception:
        pass
    return 128 << 20  # v5e/v6e physical; v7x reports 64 MiB via get_tpu_info


def _vmem_cap_bytes():
    # ~75% of physical VMEM (leave headroom for compiler-internal scratch):
    # ~48 MiB on v7x (64 MiB physical), ~96 MiB on v5e/v6e (128 MiB physical).
    return max(int(_physical_vmem_bytes() * 3 // 4), 16 << 20)


def _vmem_need_bytes(Bt, S, H, F, nh, single_buffer_weights=True):
    wbuf = 1 if single_buffer_weights else 2
    weights = wbuf * 2 * (3 * H * H + H * H + 2 * H * F)          # bf16 weights
    biases = wbuf * 4 * (3 * H + 6 * H + F)                       # f32 biases + LN params
    acts = 4 * Bt * S * (8 * H + 2 * F)                           # f32 intermediates (approx)
    scores = 4 * Bt * nh * S * S * 3                              # scores + p (+ bf16 copy)
    io = 2 * 2 * 4 * Bt * S * H                                   # double-buffered x / out tiles
    return weights + biases + acts + scores + io + (2 << 20)


def _pick_bt(B, S, H, F, nh, block_b, cap):
    divs = [d for d in range(1, B + 1) if B % d == 0]
    # keep >= 2 grid steps when B allows it (x-tile prefetch overlap + v7x megacore)
    cands = [d for d in divs if d <= max(block_b, 1) and B // d >= 2] or [1]
    # among those, prefer the smallest Bt that still feeds the 256-wide MXU (Bt*S >= 256)
    preferred = [d for d in cands if d * S >= 256]
    bt = min(preferred) if preferred else max(cands)
    # shrink Bt (instead of silently clamping VMEM) until the working set fits the cap
    while bt > 1 and _vmem_need_bytes(bt, S, H, F, nh) > cap:
        smaller = [d for d in divs if d < bt]
        bt = max(smaller) if smaller else 1
    return bt


def encoder_block(x, valid_lens, params, num_heads, *, block_b=4,
                  param_dtype=jnp.bfloat16):
    B, S, H = x.shape
    assert H % num_heads == 0, "num_hiddens must be divisible by num_heads"
    F = params["w1"].shape[1]
    hd = H // num_heads
    scale = 1.0 / math.sqrt(hd)

    cap = _vmem_cap_bytes()
    Bt = _pick_bt(B, S, H, F, num_heads, block_b, cap)

    # Fuse Q|K|V into one (H, 3H) weight; fold the 1/sqrt(hd) attention scale into the
    # Q columns (exact algebraic rewrite). MXU weights stored bf16; biases stay f32.
    wqkv = jnp.concatenate(
        [params["wq"] * scale, params["wk"], params["wv"]], axis=1).astype(param_dtype)
    bqkv = jnp.concatenate(
        [params["bq"] * scale, params["bk"], params["bv"]], axis=1).astype(jnp.float32)
    wo = params["wo"].astype(param_dtype)
    bo = params["bo"].astype(jnp.float32)
    w1 = params["w1"].astype(param_dtype)
    b1 = params["b1"].astype(jnp.float32)
    w2 = params["w2"].astype(param_dtype)
    b2 = params["b2"].astype(jnp.float32)
    g1 = params["g1"].astype(jnp.float32)
    be1 = params["be1"].astype(jnp.float32)
    g2 = params["g2"].astype(jnp.float32)
    be2 = params["be2"].astype(jnp.float32)

    need = _vmem_need_bytes(Bt, S, H, F, num_heads, single_buffer_weights=True)
    vmem_limit = int(min(max(need, 32 << 20), cap))

    # Advisory cost hint for XLA's scheduler around this fat custom call.
    cost = pl.CostEstimate(
        flops=2 * B * S * (4 * H * H + 2 * H * F) + 4 * B * num_heads * S * S * hd,
        transcendentals=B * num_heads * S * S,
        bytes_accessed=2 * 4 * B * S * H + 2 * (4 * H * H + 2 * H * F) + 4 * B,
    )

    kern = functools.partial(encoder_block_kernel, num_heads=num_heads)
    valid_lens = valid_lens.astype(jnp.int32)

    def run(single_buffer_weights):
        def const_spec(shape):
            idx = lambda i, vl: (0,) * len(shape)
            if single_buffer_weights:
                # constant-index operands: keep one VMEM copy, no double-buffering
                return pl.BlockSpec(shape, idx, pipeline_mode=pl.Buffered(1))
            return pl.BlockSpec(shape, idx)

        in_specs = [
            pl.BlockSpec((Bt, S, H), lambda i, vl: (i, 0, 0)),   # x tile (pipelined)
            const_spec((H, 3 * H)), const_spec((1, 3 * H)),      # fused Wqkv, bqkv
            const_spec((H, H)), const_spec((1, H)),              # Wo, bo
            const_spec((1, H)), const_spec((1, H)),              # LN1 gamma, beta
            const_spec((H, F)), const_spec((1, F)),              # FFN W1, b1
            const_spec((F, H)), const_spec((1, H)),              # FFN W2, b2
            const_spec((1, H)), const_spec((1, H)),              # LN2 gamma, beta
        ]
        return pl.pallas_call(
            kern,
            out_shape=jax.ShapeDtypeStruct((B, S, H), x.dtype),
            grid_spec=pltpu.PrefetchScalarGridSpec(
                num_scalar_prefetch=1,
                grid=(B // Bt,),
                in_specs=in_specs,
                out_specs=pl.BlockSpec((Bt, S, H), lambda i, vl: (i, 0, 0)),
            ),
            compiler_params=pltpu.CompilerParams(
                dimension_semantics=("parallel",),   # independent batch blocks (v7x 2x TC)
                vmem_limit_bytes=vmem_limit,
            ),
            cost_estimate=cost,
        )(valid_lens, x, wqkv, bqkv, wo, bo,
          g1, be1, w1, b1, w2, b2, g2, be2)

    try:
        return run(True)
    except Exception:
        # TODO(synk): drop this fallback once pipeline_mode=pl.Buffered(1) is supported
        #             everywhere; the fallback only costs doubled weight VMEM.
        return run(False)


def reference(x, valid_lens, params, num_heads):
    """Pure-JAX f32 reference mirroring the PyTorch forward (dropout = identity)."""
    B, S, H = x.shape
    hd = H // num_heads
    scale = 1.0 / (hd ** 0.5)
    q = x @ params["wq"] + params["bq"]
    k = x @ params["wk"] + params["bk"]
    v = x @ params["wv"] + params["bv"]

    def split(t):  # (B,S,H) -> (B,nh,S,hd)
        return t.reshape(B, S, num_heads, hd).transpose(0, 2, 1, 3)

    qh, kh, vh = split(q), split(k), split(v)
    scores = jnp.einsum("bhqd,bhkd->bhqk", qh, kh) * scale
    col = jnp.arange(S)[None, None, None, :]
    mask = col < valid_lens[:, None, None, None]
    scores = jnp.where(mask, scores, -1e6)
    p = jax.nn.softmax(scores, axis=-1)
    ctx = jnp.einsum("bhqk,bhkd->bhqd", p, vh).transpose(0, 2, 1, 3).reshape(B, S, H)
    attn = ctx @ params["wo"] + params["bo"]
    y = _layernorm(attn + x, params["g1"], params["be1"])
    ffn = jnp.maximum(y @ params["w1"] + params["b1"], 0.0) @ params["w2"] + params["b2"]
    return _layernorm(ffn + y, params["g2"], params["be2"])


def init_params(key, num_hiddens, ffn_hiddens):
    H, F = num_hiddens, ffn_hiddens
    ks = jax.random.split(key, 8)
    return {
        "wq": jax.random.normal(ks[0], (H, H), jnp.float32) * 0.1,
        "bq": jnp.zeros((1, H), jnp.float32),
        "wk": jax.random.normal(ks[1], (H, H), jnp.float32) * 0.1,
        "bk": jnp.zeros((1, H), jnp.float32),
        "wv": jax.random.normal(ks[2], (H, H), jnp.float32) * 0.1,
        "bv": jnp.zeros((1, H), jnp.float32),
        "wo": jax.random.normal(ks[3], (H, H), jnp.float32) * 0.1,
        "bo": jax.random.normal(ks[4], (1, H), jnp.float32) * 0.01,
        "g1": jnp.ones((1, H), jnp.float32),
        "be1": jnp.zeros((1, H), jnp.float32),
        "w1": jax.random.normal(ks[5], (H, F), jnp.float32) * 0.1,
        "b1": jax.random.normal(ks[6], (1, F), jnp.float32) * 0.01,
        "w2": jax.random.normal(ks[7], (F, H), jnp.float32) * 0.1,
        "b2": jnp.zeros((1, H), jnp.float32),
        "g2": jnp.ones((1, H), jnp.float32),
        "be2": jnp.zeros((1, H), jnp.float32),
    }


if __name__ == "__main__":
    B, S, H, NH, F = 2, 8, 32, 4, 64
    key = jax.random.PRNGKey(0)
    kx, kp = jax.random.split(key)
    x = jax.random.normal(kx, (B, S, H), jnp.float32)
    valid_lens = jnp.array([5, 8], dtype=jnp.int32)
    params = init_params(kp, H, F)

    out = encoder_block(x, valid_lens, params, num_heads=NH)
    out = jax.block_until_ready(out)

    ref = reference(x, valid_lens, params, NH)
    assert out.shape == (B, S, H)
    # bf16 MXU operands + approx softmax reciprocal (f32 accumulation / LN / softmax)
    # -> slightly looser tolerance vs the pure-f32 reference.
    assert jnp.allclose(out, ref, atol=5e-2, rtol=5e-2), "mismatch vs JAX reference"
    print("KERNEL_OK")
</pallas_src>

<mosaic_0001>
module attributes {stable_mosaic.version = 11 : i64} {
  func.func @encoder_block_kernel(%arg0: i32, %arg1: memref<2xi32, #tpu.memory_space<smem>>, %arg2: memref<1x8x32xf32, #tpu.memory_space<vmem>>, %arg3: memref<32x96xbf16, #tpu.memory_space<vmem>>, %arg4: memref<1x96xf32, #tpu.memory_space<vmem>>, %arg5: memref<32x32xbf16, #tpu.memory_space<vmem>>, %arg6: memref<1x32xf32, #tpu.memory_space<vmem>>, %arg7: memref<1x32xf32, #tpu.memory_space<vmem>>, %arg8: memref<1x32xf32, #tpu.memory_space<vmem>>, %arg9: memref<32x64xbf16, #tpu.memory_space<vmem>>, %arg10: memref<1x64xf32, #tpu.memory_space<vmem>>, %arg11: memref<64x32xbf16, #tpu.memory_space<vmem>>, %arg12: memref<1x32xf32, #tpu.memory_space<vmem>>, %arg13: memref<1x32xf32, #tpu.memory_space<vmem>>, %arg14: memref<1x32xf32, #tpu.memory_space<vmem>>, %arg15: memref<1x8x32xf32, #tpu.memory_space<vmem>>) attributes {dimension_semantics = [#tpu.dimension_semantics<parallel>], iteration_bounds = array<i64: 2>, scalar_prefetch = 1 : i64, scratch_operands = 0 : i64, tpu.core_type = #tpu.core_type<tc>, window_params = [{transform_indices = @transform_0, window_bounds = array<i64: 1, 8, 32>}, {pipeline_mode = #tpu.pipeline_mode<synchronous>, transform_indices = @transform_1, window_bounds = array<i64: 32, 96>}, {pipeline_mode = #tpu.pipeline_mode<synchronous>, transform_indices = @transform_2, window_bounds = array<i64: 1, 96>}, {pipeline_mode = #tpu.pipeline_mode<synchronous>, transform_indices = @transform_3, window_bounds = array<i64: 32, 32>}, {pipeline_mode = #tpu.pipeline_mode<synchronous>, transform_indices = @transform_4, window_bounds = array<i64: 1, 32>}, {pipeline_mode = #tpu.pipeline_mode<synchronous>, transform_indices = @transform_5, window_bounds = array<i64: 1, 32>}, {pipeline_mode = #tpu.pipeline_mode<synchronous>, transform_indices = @transform_6, window_bounds = array<i64: 1, 32>}, {pipeline_mode = #tpu.pipeline_mode<synchronous>, transform_indices = @transform_7, window_bounds = array<i64: 32, 64>}, {pipeline_mode = #tpu.pipeline_mode<synchronous>, transform_indices = @transform_8, window_bounds = array<i64: 1, 64>}, {pipeline_mode = #tpu.pipeline_mode<synchronous>, transform_indices = @transform_9, window_bounds = array<i64: 64, 32>}, {pipeline_mode = #tpu.pipeline_mode<synchronous>, transform_indices = @transform_10, window_bounds = array<i64: 1, 32>}, {pipeline_mode = #tpu.pipeline_mode<synchronous>, transform_indices = @transform_11, window_bounds = array<i64: 1, 32>}, {pipeline_mode = #tpu.pipeline_mode<synchronous>, transform_indices = @transform_12, window_bounds = array<i64: 1, 32>}, {transform_indices = @transform_13, window_bounds = array<i64: 1, 8, 32>}]} {
    %c1_i32 = arith.constant 1 : i32
    %0 = arith.muli %arg0, %c1_i32 : i32
    %c0 = arith.constant 0 : index
    %c0_0 = arith.constant 0 : index
    %c0_1 = arith.constant 0 : index
    %1 = vector.load %arg2[%c0, %c0_0, %c0_1] : memref<1x8x32xf32, #tpu.memory_space<vmem>>, vector<1x8x32xf32>
    %2 = vector.shape_cast %1 : vector<1x8x32xf32> to vector<8x32xf32>
    %3 = arith.truncf %2 : vector<8x32xf32> to vector<8x32xbf16>
    %c0_2 = arith.constant 0 : index
    %c0_3 = arith.constant 0 : index
    %4 = vector.load %arg3[%c0_2, %c0_3] : memref<32x96xbf16, #tpu.memory_space<vmem>>, vector<32x96xbf16>
    %cst = arith.constant dense<0.000000e+00> : vector<8x96xf32>
    %5 = tpu.matmul %3, %4, %cst {dimension_numbers = #tpu.dot_dimension_numbers<[1], [0], [0], [1], [0, 0, 1, 1], [], []>} : vector<8x32xbf16>, vector<32x96xbf16>, vector<8x96xf32> -> vector<8x96xf32>
    %c0_4 = arith.constant 0 : index
    %c0_5 = arith.constant 0 : index
    %6 = vector.load %arg4[%c0_4, %c0_5] : memref<1x96xf32, #tpu.memory_space<vmem>>, vector<1x96xf32>
    %7 = vector.broadcast %6 : vector<1x96xf32> to vector<8x96xf32>
    %8 = arith.addf %5, %7 : vector<8x96xf32>
    %9 = vector.shape_cast %8 : vector<8x96xf32> to vector<1x8x12x8xf32>
    %10 = tpu.transpose %9, [0, 2, 1, 3] : vector<1x8x12x8xf32> -> vector<1x12x8x8xf32>
    %11 = vector.extract_strided_slice %10 {offsets = [0, 0, 0, 0], sizes = [1, 4, 8, 8], strides = [1, 1, 1, 1]} : vector<1x12x8x8xf32> to vector<1x4x8x8xf32>
    %12 = vector.shape_cast %11 : vector<1x4x8x8xf32> to vector<4x8x8xf32>
    %13 = arith.truncf %12 : vector<4x8x8xf32> to vector<4x8x8xbf16>
    %14 = vector.extract_strided_slice %10 {offsets = [0, 4, 0, 0], sizes = [1, 4, 8, 8], strides = [1, 1, 1, 1]} : vector<1x12x8x8xf32> to vector<1x4x8x8xf32>
    %15 = vector.shape_cast %14 : vector<1x4x8x8xf32> to vector<4x8x8xf32>
    %16 = arith.truncf %15 : vector<4x8x8xf32> to vector<4x8x8xbf16>
    %17 = vector.extract_strided_slice %10 {offsets = [0, 8, 0, 0], sizes = [1, 4, 8, 8], strides = [1, 1, 1, 1]} : vector<1x12x8x8xf32> to vector<1x4x8x8xf32>
    %18 = vector.shape_cast %17 : vector<1x4x8x8xf32> to vector<4x8x8xf32>
    %19 = arith.truncf %18 : vector<4x8x8xf32> to vector<4x8x8xbf16>
    "tpu.trace_start"() <{level = 10 : i32, message = "bqd,bkd->bqk"}> : () -> ()
    %cst_6 = arith.constant dense<0.000000e+00> : vector<4x8x8xf32>
    %20 = tpu.matmul %13, %16, %cst_6 {dimension_numbers = #tpu.dot_dimension_numbers<[2], [2], [1], [1], [0, 0, 0, 1, 1, 1], [0], [0]>} : vector<4x8x8xbf16>, vector<4x8x8xbf16>, vector<4x8x8xf32> -> vector<4x8x8xf32>
    "tpu.trace_stop"() : () -> ()
    %21 = vector.shape_cast %20 : vector<4x8x8xf32> to vector<1x4x8x8xf32>
    %c0_i32 = arith.constant 0 : i32
    %22 = arith.addi %0, %c0_i32 : i32
    %23 = arith.index_cast %22 : i32 to index
    %24 = memref.load %arg1[%23] : memref<2xi32, #tpu.memory_space<smem>>
    %25 = vector.broadcast %24 : i32 to vector<1xi32>
    %26 = vector.shape_cast %25 : vector<1xi32> to vector<1x1x1x1xi32>
    %27 = tpu.iota {dimensions = array<i32: 3>} : vector<1x1x1x8xi32>
    %28 = vector.broadcast %26 : vector<1x1x1x1xi32> to vector<1x1x1x8xi32>
    %29 = arith.cmpi slt, %27, %28 : vector<1x1x1x8xi32>
    %cst_7 = arith.constant -1.000000e+06 : f32
    %30 = vector.shape_cast %29 : vector<1x1x1x8xi1> to vector<1x1x1x8xi1>
    %31 = vector.broadcast %30 : vector<1x1x1x8xi1> to vector<1x4x8x8xi1>
    %32 = vector.broadcast %cst_7 : f32 to vector<1x4x8x8xf32>
    %33 = arith.select %31, %21, %32 : vector<1x4x8x8xi1>, vector<1x4x8x8xf32>
    %cst_8 = arith.constant dense<0xFF800000> : vector<1x4x8xf32>
    %34 = vector.multi_reduction <maximumf>, %33, %cst_8 [3] : vector<1x4x8x8xf32> to vector<1x4x8xf32>
    %35 = vector.shape_cast %34 : vector<1x4x8xf32> to vector<1x4x8x1xf32>
    %36 = vector.broadcast %35 : vector<1x4x8x1xf32> to vector<1x4x8x8xf32>
    %37 = arith.subf %33, %36 : vector<1x4x8x8xf32>
    %38 = math.exp %37 : vector<1x4x8x8xf32>
    %cst_9 = arith.constant dense<0.000000e+00> : vector<1x4x8xf32>
    %39 = vector.multi_reduction <add>, %38, %cst_9 [3] : vector<1x4x8x8xf32> to vector<1x4x8xf32>
    %40 = vector.shape_cast %39 : vector<1x4x8xf32> to vector<1x4x8x1xf32>
    %41 = vector.shape_cast %38 : vector<1x4x8x8xf32> to vector<4x8x8xf32>
    %42 = arith.truncf %41 : vector<4x8x8xf32> to vector<4x8x8xbf16>
    "tpu.trace_start"() <{level = 10 : i32, message = "bqk,bkd->bqd"}> : () -> ()
    %cst_10 = arith.constant dense<0.000000e+00> : vector<4x8x8xf32>
    %43 = tpu.matmul %42, %19, %cst_10 {dimension_numbers = #tpu.dot_dimension_numbers<[2], [1], [1], [2], [0, 0, 0, 1, 1, 2], [0], [0]>} : vector<4x8x8xbf16>, vector<4x8x8xbf16>, vector<4x8x8xf32> -> vector<4x8x8xf32>
    "tpu.trace_stop"() : () -> ()
    %44 = tpu.reciprocal %40 {approx = true} : vector<1x4x8x1xf32> -> vector<1x4x8x1xf32>
    %45 = vector.shape_cast %44 : vector<1x4x8x1xf32> to vector<4x8x1xf32>
    %46 = vector.broadcast %45 : vector<4x8x1xf32> to vector<4x8x8xf32>
    %47 = arith.mulf %43, %46 : vector<4x8x8xf32>
    %48 = vector.shape_cast %47 : vector<4x8x8xf32> to vector<1x4x8x8xf32>
    %49 = tpu.transpose %48, [0, 2, 1, 3] : vector<1x4x8x8xf32> -> vector<1x8x4x8xf32>
    %50 = vector.shape_cast %49 : vector<1x8x4x8xf32> to vector<8x32xf32>
    %51 = arith.truncf %50 : vector<8x32xf32> to vector<8x32xbf16>
    %c0_11 = arith.constant 0 : index
    %c0_12 = arith.constant 0 : index
    %52 = vector.load %arg5[%c0_11, %c0_12] : memref<32x32xbf16, #tpu.memory_space<vmem>>, vector<32x32xbf16>
    %cst_13 = arith.constant dense<0.000000e+00> : vector<8x32xf32>
    %53 = tpu.matmul %51, %52, %cst_13 {dimension_numbers = #tpu.dot_dimension_numbers<[1], [0], [0], [1], [0, 0, 1, 1], [], []>} : vector<8x32xbf16>, vector<32x32xbf16>, vector<8x32xf32> -> vector<8x32xf32>
    %c0_14 = arith.constant 0 : index
    %c0_15 = arith.constant 0 : index
    %54 = vector.load %arg6[%c0_14, %c0_15] : memref<1x32xf32, #tpu.memory_space<vmem>>, vector<1x32xf32>
    %55 = vector.broadcast %54 : vector<1x32xf32> to vector<8x32xf32>
    %56 = arith.addf %53, %55 : vector<8x32xf32>
    %57 = arith.addf %56, %2 : vector<8x32xf32>
    %c0_16 = arith.constant 0 : index
    %c0_17 = arith.constant 0 : index
    %58 = vector.load %arg7[%c0_16, %c0_17] : memref<1x32xf32, #tpu.memory_space<vmem>>, vector<1x32xf32>
    %c0_18 = arith.constant 0 : index
    %c0_19 = arith.constant 0 : index
    %59 = vector.load %arg8[%c0_18, %c0_19] : memref<1x32xf32, #tpu.memory_space<vmem>>, vector<1x32xf32>
    %cst_20 = arith.constant dense<0.000000e+00> : vector<8xf32>
    %60 = vector.multi_reduction <add>, %57, %cst_20 [1] : vector<8x32xf32> to vector<8xf32>
    %61 = vector.shape_cast %60 : vector<8xf32> to vector<8x1xf32>
    %cst_21 = arith.constant 3.200000e+01 : f32
    %62 = vector.broadcast %cst_21 : f32 to vector<8x1xf32>
    %63 = arith.divf %61, %62 : vector<8x1xf32>
    %64 = vector.broadcast %63 : vector<8x1xf32> to vector<8x32xf32>
    %65 = arith.subf %57, %64 : vector<8x32xf32>
    %66 = arith.mulf %65, %65 : vector<8x32xf32>
    %cst_22 = arith.constant dense<0.000000e+00> : vector<8xf32>
    %67 = vector.multi_reduction <add>, %66, %cst_22 [1] : vector<8x32xf32> to vector<8xf32>
    %68 = vector.shape_cast %67 : vector<8xf32> to vector<8x1xf32>
    %cst_23 = arith.constant 3.200000e+01 : f32
    %69 = vector.broadcast %cst_23 : f32 to vector<8x1xf32>
    %70 = arith.divf %68, %69 : vector<8x1xf32>
    %71 = vector.broadcast %63 : vector<8x1xf32> to vector<8x32xf32>
    %72 = arith.subf %57, %71 : vector<8x32xf32>
    %cst_24 = arith.constant 9.99999974E-6 : f32
    %73 = vector.broadcast %cst_24 : f32 to vector<8x1xf32>
    %74 = arith.addf %70, %73 : vector<8x1xf32>
    %75 = math.rsqrt %74 : vector<8x1xf32>
    %76 = vector.broadcast %75 : vector<8x1xf32> to vector<8x32xf32>
    %77 = arith.mulf %72, %76 : vector<8x32xf32>
    %78 = vector.broadcast %58 : vector<1x32xf32> to vector<8x32xf32>
    %79 = arith.mulf %77, %78 : vector<8x32xf32>
    %80 = vector.broadcast %59 : vector<1x32xf32> to vector<8x32xf32>
    %81 = arith.addf %79, %80 : vector<8x32xf32>
    %82 = arith.truncf %81 : vector<8x32xf32> to vector<8x32xbf16>
    %c0_25 = arith.constant 0 : index
    %c0_26 = arith.constant 0 : index
    %83 = vector.load %arg9[%c0_25, %c0_26] : memref<32x64xbf16, #tpu.memory_space<vmem>>, vector<32x64xbf16>
    %cst_27 = arith.constant dense<0.000000e+00> : vector<8x64xf32>
    %84 = tpu.matmul %82, %83, %cst_27 {dimension_numbers = #tpu.dot_dimension_numbers<[1], [0], [0], [1], [0, 0, 1, 1], [], []>} : vector<8x32xbf16>, vector<32x64xbf16>, vector<8x64xf32> -> vector<8x64xf32>
    %c0_28 = arith.constant 0 : index
    %c0_29 = arith.constant 0 : index
    %85 = vector.load %arg10[%c0_28, %c0_29] : memref<1x64xf32, #tpu.memory_space<vmem>>, vector<1x64xf32>
    %86 = vector.broadcast %85 : vector<1x64xf32> to vector<8x64xf32>
    %87 = arith.addf %84, %86 : vector<8x64xf32>
    %cst_30 = arith.constant 0.000000e+00 : f32
    %88 = vector.broadcast %cst_30 : f32 to vector<8x64xf32>
    %89 = arith.maximumf %87, %88 : vector<8x64xf32>
    %90 = arith.truncf %89 : vector<8x64xf32> to vector<8x64xbf16>
    %c0_31 = arith.constant 0 : index
    %c0_32 = arith.constant 0 : index
    %91 = vector.load %arg11[%c0_31, %c0_32] : memref<64x32xbf16, #tpu.memory_space<vmem>>, vector<64x32xbf16>
    %cst_33 = arith.constant dense<0.000000e+00> : vector<8x32xf32>
    %92 = tpu.matmul %90, %91, %cst_33 {dimension_numbers = #tpu.dot_dimension_numbers<[1], [0], [0], [1], [0, 0, 1, 1], [], []>} : vector<8x64xbf16>, vector<64x32xbf16>, vector<8x32xf32> -> vector<8x32xf32>
    %c0_34 = arith.constant 0 : index
    %c0_35 = arith.constant 0 : index
    %93 = vector.load %arg12[%c0_34, %c0_35] : memref<1x32xf32, #tpu.memory_space<vmem>>, vector<1x32xf32>
    %94 = vector.broadcast %93 : vector<1x32xf32> to vector<8x32xf32>
    %95 = arith.addf %92, %94 : vector<8x32xf32>
    %96 = arith.addf %95, %81 : vector<8x32xf32>
    %c0_36 = arith.constant 0 : index
    %c0_37 = arith.constant 0 : index
    %97 = vector.load %arg13[%c0_36, %c0_37] : memref<1x32xf32, #tpu.memory_space<vmem>>, vector<1x32xf32>
    %c0_38 = arith.constant 0 : index
    %c0_39 = arith.constant 0 : index
    %98 = vector.load %arg14[%c0_38, %c0_39] : memref<1x32xf32, #tpu.memory_space<vmem>>, vector<1x32xf32>
    %cst_40 = arith.constant dense<0.000000e+00> : vector<8xf32>
    %99 = vector.multi_reduction <add>, %96, %cst_40 [1] : vector<8x32xf32> to vector<8xf32>
    %100 = vector.shape_cast %99 : vector<8xf32> to vector<8x1xf32>
    %cst_41 = arith.constant 3.200000e+01 : f32
    %101 = vector.broadcast %cst_41 : f32 to vector<8x1xf32>
    %102 = arith.divf %100, %101 : vector<8x1xf32>
    %103 = vector.broadcast %102 : vector<8x1xf32> to vector<8x32xf32>
    %104 = arith.subf %96, %103 : vector<8x32xf32>
    %105 = arith.mulf %104, %104 : vector<8x32xf32>
    %cst_42 = arith.constant dense<0.000000e+00> : vector<8xf32>
    %106 = vector.multi_reduction <add>, %105, %cst_42 [1] : vector<8x32xf32> to vector<8xf32>
    %107 = vector.shape_cast %106 : vector<8xf32> to vector<8x1xf32>
    %cst_43 = arith.constant 3.200000e+01 : f32
    %108 = vector.broadcast %cst_43 : f32 to vector<8x1xf32>
    %109 = arith.divf %107, %108 : vector<8x1xf32>
    %110 = vector.broadcast %102 : vector<8x1xf32> to vector<8x32xf32>
    %111 = arith.subf %96, %110 : vector<8x32xf32>
    %cst_44 = arith.constant 9.99999974E-6 : f32
    %112 = vector.broadcast %cst_44 : f32 to vector<8x1xf32>
    %113 = arith.addf %109, %112 : vector<8x1xf32>
    %114 = math.rsqrt %113 : vector<8x1xf32>
    %115 = vector.broadcast %114 : vector<8x1xf32> to vector<8x32xf32>
    %116 = arith.mulf %111, %115 : vector<8x32xf32>
    %117 = vector.broadcast %97 : vector<1x32xf32> to vector<8x32xf32>
    %118 = arith.mulf %116, %117 : vector<8x32xf32>
    %119 = vector.broadcast %98 : vector<1x32xf32> to vector<8x32xf32>
    %120 = arith.addf %118, %119 : vector<8x32xf32>
    %121 = vector.shape_cast %120 : vector<8x32xf32> to vector<1x8x32xf32>
    %c0_45 = arith.constant 0 : index
    %c0_46 = arith.constant 0 : index
    %c0_47 = arith.constant 0 : index
    %122 = vector.load %arg15[%c0_45, %c0_46, %c0_47] : memref<1x8x32xf32, #tpu.memory_space<vmem>>, vector<1x8x32xf32>
    tpu.vector_store %arg15[%c0_45, %c0_46, %c0_47], %121 {strides = array<i32>} : memref<1x8x32xf32, #tpu.memory_space<vmem>>, vector<1x8x32xf32>,
    return
  }
  func.func @transform_0(%arg0: i32, %arg1: memref<2xi32, #tpu.memory_space<smem>>) -> (i32, i32, i32) {
    %c0_i32 = arith.constant 0 : i32
    %c0_i32_0 = arith.constant 0 : i32
    %c0_i32_1 = arith.constant 0 : i32
    return %arg0, %c0_i32, %c0_i32_0 : i32, i32, i32
  }
  func.func @transform_1(%arg0: i32, %arg1: memref<2xi32, #tpu.memory_space<smem>>) -> (i32, i32) {
    %c0_i32 = arith.constant 0 : i32
    %c0_i32_0 = arith.constant 0 : i32
    %c0_i32_1 = arith.constant 0 : i32
    return %c0_i32, %c0_i32_0 : i32, i32
  }
  func.func @transform_2(%arg0: i32, %arg1: memref<2xi32, #tpu.memory_space<smem>>) -> (i32, i32) {
    %c0_i32 = arith.constant 0 : i32
    %c0_i32_0 = arith.constant 0 : i32
    %c0_i32_1 = arith.constant 0 : i32
    return %c0_i32, %c0_i32_0 : i32, i32
  }
  func.func @transform_3(%arg0: i32, %arg1: memref<2xi32, #tpu.memory_space<smem>>) -> (i32, i32) {
    %c0_i32 = arith.constant 0 : i32
    %c0_i32_0 = arith.constant 0 : i32
    %c0_i32_1 = arith.constant 0 : i32
    return %c0_i32, %c0_i32_0 : i32, i32
  }
  func.func @transform_4(%arg0: i32, %arg1: memref<2xi32, #tpu.memory_space<smem>>) -> (i32, i32) {
    %c0_i32 = arith.constant 0 : i32
    %c0_i32_0 = arith.constant 0 : i32
    %c0_i32_1 = arith.constant 0 : i32
    return %c0_i32, %c0_i32_0 : i32, i32
  }
  func.func @transform_5(%arg0: i32, %arg1: memref<2xi32, #tpu.memory_space<smem>>) -> (i32, i32) {
    %c0_i32 = arith.constant 0 : i32
    %c0_i32_0 = arith.constant 0 : i32
    %c0_i32_1 = arith.constant 0 : i32
    return %c0_i32, %c0_i32_0 : i32, i32
  }
  func.func @transform_6(%arg0: i32, %arg1: memref<2xi32, #tpu.memory_space<smem>>) -> (i32, i32) {
    %c0_i32 = arith.constant 0 : i32
    %c0_i32_0 = arith.constant 0 : i32
    %c0_i32_1 = arith.constant 0 : i32
    return %c0_i32, %c0_i32_0 : i32, i32
  }
  func.func @transform_7(%arg0: i32, %arg1: memref<2xi32, #tpu.memory_space<smem>>) -> (i32, i32) {
    %c0_i32 = arith.constant 0 : i32
    %c0_i32_0 = arith.constant 0 : i32
    %c0_i32_1 = arith.constant 0 : i32
    return %c0_i32, %c0_i32_0 : i32, i32
  }
  func.func @transform_8(%arg0: i32, %arg1: memref<2xi32, #tpu.memory_space<smem>>) -> (i32, i32) {
    %c0_i32 = arith.constant 0 : i32
    %c0_i32_0 = arith.constant 0 : i32
    %c0_i32_1 = arith.constant 0 : i32
    return %c0_i32, %c0_i32_0 : i32, i32
  }
  func.func @transform_9(%arg0: i32, %arg1: memref<2xi32, #tpu.memory_space<smem>>) -> (i32, i32) {
    %c0_i32 = arith.constant 0 : i32
    %c0_i32_0 = arith.constant 0 : i32
    %c0_i32_1 = arith.constant 0 : i32
    return %c0_i32, %c0_i32_0 : i32, i32
  }
  func.func @transform_10(%arg0: i32, %arg1: memref<2xi32, #tpu.memory_space<smem>>) -> (i32, i32) {
    %c0_i32 = arith.constant 0 : i32
    %c0_i32_0 = arith.constant 0 : i32
    %c0_i32_1 = arith.constant 0 : i32
    return %c0_i32, %c0_i32_0 : i32, i32
  }
  func.func @transform_11(%arg0: i32, %arg1: memref<2xi32, #tpu.memory_space<smem>>) -> (i32, i32) {
    %c0_i32 = arith.constant 0 : i32
    %c0_i32_0 = arith.constant 0 : i32
    %c0_i32_1 = arith.constant 0 : i32
    return %c0_i32, %c0_i32_0 : i32, i32
  }
  func.func @transform_12(%arg0: i32, %arg1: memref<2xi32, #tpu.memory_space<smem>>) -> (i32, i32) {
    %c0_i32 = arith.constant 0 : i32
    %c0_i32_0 = arith.constant 0 : i32
    %c0_i32_1 = arith.constant 0 : i32
    return %c0_i32, %c0_i32_0 : i32, i32
  }
  func.func @transform_13(%arg0: i32, %arg1: memref<2xi32, #tpu.memory_space<smem>>) -> (i32, i32, i32) {
    %c0_i32 = arith.constant 0 : i32
    %c0_i32_0 = arith.constant 0 : i32
    %c0_i32_1 = arith.constant 0 : i32
    return %arg0, %c0_i32, %c0_i32_0 : i32, i32, i32
  }
}

module attributes {stable_mosaic.version = 11 : i64} {
  func.func @encoder_block_kernel(%arg0: i32, %arg1: memref<2xi32, #tpu.memory_space<smem>>, %arg2: memref<1x8x32xf32, #tpu.memory_space<vmem>>, %arg3: memref<32x96xbf16, #tpu.memory_space<vmem>>, %arg4: memref<1x96xf32, #tpu.memory_space<vmem>>, %arg5: memref<32x32xbf16, #tpu.memory_space<vmem>>, %arg6: memref<1x32xf32, #tpu.memory_space<vmem>>, %arg7: memref<1x32xf32, #tpu.memory_space<vmem>>, %arg8: memref<1x32xf32, #tpu.memory_space<vmem>>, %arg9: memref<32x64xbf16, #tpu.memory_space<vmem>>, %arg10: memref<1x64xf32, #tpu.memory_space<vmem>>, %arg11: memref<64x32xbf16, #tpu.memory_space<vmem>>, %arg12: memref<1x32xf32, #tpu.memory_space<vmem>>, %arg13: memref<1x32xf32, #tpu.memory_space<vmem>>, %arg14: memref<1x32xf32, #tpu.memory_space<vmem>>, %arg15: memref<1x8x32xf32, #tpu.memory_space<vmem>>) attributes {dimension_semantics = [#tpu.dimension_semantics<parallel>], iteration_bounds = array<i64: 2>, scalar_prefetch = 1 : i64, scratch_operands = 0 : i64, tpu.core_type = #tpu.core_type<tc>, window_params = [{transform_indices = @transform_0, window_bounds = array<i64: 1, 8, 32>}, {pipeline_mode = #tpu.pipeline_mode<synchronous>, transform_indices = @transform_1, window_bounds = array<i64: 32, 96>}, {pipeline_mode = #tpu.pipeline_mode<synchronous>, transform_indices = @transform_2, window_bounds = array<i64: 1, 96>}, {pipeline_mode = #tpu.pipeline_mode<synchronous>, transform_indices = @transform_3, window_bounds = array<i64: 32, 32>}, {pipeline_mode = #tpu.pipeline_mode<synchronous>, transform_indices = @transform_4, window_bounds = array<i64: 1, 32>}, {pipeline_mode = #tpu.pipeline_mode<synchronous>, transform_indices = @transform_5, window_bounds = array<i64: 1, 32>}, {pipeline_mode = #tpu.pipeline_mode<synchronous>, transform_indices = @transform_6, window_bounds = array<i64: 1, 32>}, {pipeline_mode = #tpu.pipeline_mode<synchronous>, transform_indices = @transform_7, window_bounds = array<i64: 32, 64>}, {pipeline_mode = #tpu.pipeline_mode<synchronous>, transform_indices = @transform_8, window_bounds = array<i64: 1, 64>}, {pipeline_mode = #tpu.pipeline_mode<synchronous>, transform_indices = @transform_9, window_bounds = array<i64: 64, 32>}, {pipeline_mode = #tpu.pipeline_mode<synchronous>, transform_indices = @transform_10, window_bounds = array<i64: 1, 32>}, {pipeline_mode = #tpu.pipeline_mode<synchronous>, transform_indices = @transform_11, window_bounds = array<i64: 1, 32>}, {pipeline_mode = #tpu.pipeline_mode<synchronous>, transform_indices = @transform_12, window_bounds = array<i64: 1, 32>}, {transform_indices = @transform_13, window_bounds = array<i64: 1, 8, 32>}]} {
    %c1_i32 = arith.constant 1 : i32
    %0 = arith.muli %arg0, %c1_i32 : i32
    %c0 = arith.constant 0 : index
    %c0_0 = arith.constant 0 : index
    %c0_1 = arith.constant 0 : index
    %1 = vector.load %arg2[%c0, %c0_0, %c0_1] : memref<1x8x32xf32, #tpu.memory_space<vmem>>, vector<1x8x32xf32>
    %2 = vector.shape_cast %1 : vector<1x8x32xf32> to vector<8x32xf32>
    %3 = arith.truncf %2 : vector<8x32xf32> to vector<8x32xbf16>
    %c0_2 = arith.constant 0 : index
    %c0_3 = arith.constant 0 : index
    %4 = vector.load %arg3[%c0_2, %c0_3] : memref<32x96xbf16, #tpu.memory_space<vmem>>, vector<32x96xbf16>
    %cst = arith.constant dense<0.000000e+00> : vector<8x96xf32>
    %5 = tpu.matmul %3, %4, %cst {dimension_numbers = #tpu.dot_dimension_numbers<[1], [0], [0], [1], [0, 0, 1, 1], [], []>} : vector<8x32xbf16>, vector<32x96xbf16>, vector<8x96xf32> -> vector<8x96xf32>
    %c0_4 = arith.constant 0 : index
    %c0_5 = arith.constant 0 : index
    %6 = vector.load %arg4[%c0_4, %c0_5] : memref<1x96xf32, #tpu.memory_space<vmem>>, vector<1x96xf32>
    %7 = vector.broadcast %6 : vector<1x96xf32> to vector<8x96xf32>
    %8 = arith.addf %5, %7 : vector<8x96xf32>
    %9 = vector.shape_cast %8 : vector<8x96xf32> to vector<1x8x12x8xf32>
    %10 = tpu.transpose %9, [0, 2, 1, 3] : vector<1x8x12x8xf32> -> vector<1x12x8x8xf32>
    %11 = vector.extract_strided_slice %10 {offsets = [0, 0, 0, 0], sizes = [1, 4, 8, 8], strides = [1, 1, 1, 1]} : vector<1x12x8x8xf32> to vector<1x4x8x8xf32>
    %12 = vector.shape_cast %11 : vector<1x4x8x8xf32> to vector<4x8x8xf32>
    %13 = arith.truncf %12 : vector<4x8x8xf32> to vector<4x8x8xbf16>
    %14 = vector.extract_strided_slice %10 {offsets = [0, 4, 0, 0], sizes = [1, 4, 8, 8], strides = [1, 1, 1, 1]} : vector<1x12x8x8xf32> to vector<1x4x8x8xf32>
    %15 = vector.shape_cast %14 : vector<1x4x8x8xf32> to vector<4x8x8xf32>
    %16 = arith.truncf %15 : vector<4x8x8xf32> to vector<4x8x8xbf16>
    %17 = vector.extract_strided_slice %10 {offsets = [0, 8, 0, 0], sizes = [1, 4, 8, 8], strides = [1, 1, 1, 1]} : vector<1x12x8x8xf32> to vector<1x4x8x8xf32>
    %18 = vector.shape_cast %17 : vector<1x4x8x8xf32> to vector<4x8x8xf32>
    %19 = arith.truncf %18 : vector<4x8x8xf32> to vector<4x8x8xbf16>
    "tpu.trace_start"() <{level = 10 : i32, message = "bqd,bkd->bqk"}> : () -> ()
    %cst_6 = arith.constant dense<0.000000e+00> : vector<4x8x8xf32>
    %20 = tpu.matmul %13, %16, %cst_6 {dimension_numbers = #tpu.dot_dimension_numbers<[2], [2], [1], [1], [0, 0, 0, 1, 1, 1], [0], [0]>} : vector<4x8x8xbf16>, vector<4x8x8xbf16>, vector<4x8x8xf32> -> vector<4x8x8xf32>
    "tpu.trace_stop"() : () -> ()
    %21 = vector.shape_cast %20 : vector<4x8x8xf32> to vector<1x4x8x8xf32>
    %c0_i32 = arith.constant 0 : i32
    %22 = arith.addi %0, %c0_i32 : i32
    %23 = arith.index_cast %22 : i32 to index
    %24 = memref.load %arg1[%23] : memref<2xi32, #tpu.memory_space<smem>>
    %25 = vector.broadcast %24 : i32 to vector<1xi32>
    %26 = vector.shape_cast %25 : vector<1xi32> to vector<1x1x1x1xi32>
    %27 = tpu.iota {dimensions = array<i32: 3>} : vector<1x1x1x8xi32>
    %28 = vector.broadcast %26 : vector<1x1x1x1xi32> to vector<1x1x1x8xi32>
    %29 = arith.cmpi slt, %27, %28 : vector<1x1x1x8xi32>
    %cst_7 = arith.constant -1.000000e+06 : f32
    %30 = vector.shape_cast %29 : vector<1x1x1x8xi1> to vector<1x1x1x8xi1>
    %31 = vector.broadcast %30 : vector<1x1x1x8xi1> to vector<1x4x8x8xi1>
    %32 = vector.broadcast %cst_7 : f32 to vector<1x4x8x8xf32>
    %33 = arith.select %31, %21, %32 : vector<1x4x8x8xi1>, vector<1x4x8x8xf32>
    %cst_8 = arith.constant dense<0xFF800000> : vector<1x4x8xf32>
    %34 = vector.multi_reduction <maximumf>, %33, %cst_8 [3] : vector<1x4x8x8xf32> to vector<1x4x8xf32>
    %35 = vector.shape_cast %34 : vector<1x4x8xf32> to vector<1x4x8x1xf32>
    %36 = vector.broadcast %35 : vector<1x4x8x1xf32> to vector<1x4x8x8xf32>
    %37 = arith.subf %33, %36 : vector<1x4x8x8xf32>
    %38 = math.exp %37 : vector<1x4x8x8xf32>
    %cst_9 = arith.constant dense<0.000000e+00> : vector<1x4x8xf32>
    %39 = vector.multi_reduction <add>, %38, %cst_9 [3] : vector<1x4x8x8xf32> to vector<1x4x8xf32>
    %40 = vector.shape_cast %39 : vector<1x4x8xf32> to vector<1x4x8x1xf32>
    %41 = vector.shape_cast %38 : vector<1x4x8x8xf32> to vector<4x8x8xf32>
    %42 = arith.truncf %41 : vector<4x8x8xf32> to vector<4x8x8xbf16>
    "tpu.trace_start"() <{level = 10 : i32, message = "bqk,bkd->bqd"}> : () -> ()
    %cst_10 = arith.constant dense<0.000000e+00> : vector<4x8x8xf32>
    %43 = tpu.matmul %42, %19, %cst_10 {dimension_numbers = #tpu.dot_dimension_numbers<[2], [1], [1], [2], [0, 0, 0, 1, 1, 2], [0], [0]>} : vector<4x8x8xbf16>, vector<4x8x8xbf16>, vector<4x8x8xf32> -> vector<4x8x8xf32>
    "tpu.trace_stop"() : () -> ()
    %44 = tpu.reciprocal %40 {approx = true} : vector<1x4x8x1xf32> -> vector<1x4x8x1xf32>
    %45 = vector.shape_cast %44 : vector<1x4x8x1xf32> to vector<4x8x1xf32>
    %46 = vector.broadcast %45 : vector<4x8x1xf32> to vector<4x8x8xf32>
    %47 = arith.mulf %43, %46 : vector<4x8x8xf32>
    %48 = vector.shape_cast %47 : vector<4x8x8xf32> to vector<1x4x8x8xf32>
    %49 = tpu.transpose %48, [0, 2, 1, 3] : vector<1x4x8x8xf32> -> vector<1x8x4x8xf32>
    %50 = vector.shape_cast %49 : vector<1x8x4x8xf32> to vector<8x32xf32>
    %51 = arith.truncf %50 : vector<8x32xf32> to vector<8x32xbf16>
    %c0_11 = arith.constant 0 : index
    %c0_12 = arith.constant 0 : index
    %52 = vector.load %arg5[%c0_11, %c0_12] : memref<32x32xbf16, #tpu.memory_space<vmem>>, vector<32x32xbf16>
    %cst_13 = arith.constant dense<0.000000e+00> : vector<8x32xf32>
    %53 = tpu.matmul %51, %52, %cst_13 {dimension_numbers = #tpu.dot_dimension_numbers<[1], [0], [0], [1], [0, 0, 1, 1], [], []>} : vector<8x32xbf16>, vector<32x32xbf16>, vector<8x32xf32> -> vector<8x32xf32>
    %c0_14 = arith.constant 0 : index
    %c0_15 = arith.constant 0 : index
    %54 = vector.load %arg6[%c0_14, %c0_15] : memref<1x32xf32, #tpu.memory_space<vmem>>, vector<1x32xf32>
    %55 = vector.broadcast %54 : vector<1x32xf32> to vector<8x32xf32>
    %56 = arith.addf %53, %55 : vector<8x32xf32>
    %57 = arith.addf %56, %2 : vector<8x32xf32>
    %c0_16 = arith.constant 0 : index
    %c0_17 = arith.constant 0 : index
    %58 = vector.load %arg7[%c0_16, %c0_17] : memref<1x32xf32, #tpu.memory_space<vmem>>, vector<1x32xf32>
    %c0_18 = arith.constant 0 : index
    %c0_19 = arith.constant 0 : index
    %59 = vector.load %arg8[%c0_18, %c0_19] : memref<1x32xf32, #tpu.memory_space<vmem>>, vector<1x32xf32>
    %cst_20 = arith.constant dense<0.000000e+00> : vector<8xf32>
    %60 = vector.multi_reduction <add>, %57, %cst_20 [1] : vector<8x32xf32> to vector<8xf32>
    %61 = vector.shape_cast %60 : vector<8xf32> to vector<8x1xf32>
    %cst_21 = arith.constant 3.200000e+01 : f32
    %62 = vector.broadcast %cst_21 : f32 to vector<8x1xf32>
    %63 = arith.divf %61, %62 : vector<8x1xf32>
    %64 = vector.broadcast %63 : vector<8x1xf32> to vector<8x32xf32>
    %65 = arith.subf %57, %64 : vector<8x32xf32>
    %66 = arith.mulf %65, %65 : vector<8x32xf32>
    %cst_22 = arith.constant dense<0.000000e+00> : vector<8xf32>
    %67 = vector.multi_reduction <add>, %66, %cst_22 [1] : vector<8x32xf32> to vector<8xf32>
    %68 = vector.shape_cast %67 : vector<8xf32> to vector<8x1xf32>
    %cst_23 = arith.constant 3.200000e+01 : f32
    %69 = vector.broadcast %cst_23 : f32 to vector<8x1xf32>
    %70 = arith.divf %68, %69 : vector<8x1xf32>
    %71 = vector.broadcast %63 : vector<8x1xf32> to vector<8x32xf32>
    %72 = arith.subf %57, %71 : vector<8x32xf32>
    %cst_24 = arith.constant 9.99999974E-6 : f32
    %73 = vector.broadcast %cst_24 : f32 to vector<8x1xf32>
    %74 = arith.addf %70, %73 : vector<8x1xf32>
    %75 = math.rsqrt %74 : vector<8x1xf32>
    %76 = vector.broadcast %75 : vector<8x1xf32> to vector<8x32xf32>
    %77 = arith.mulf %72, %76 : vector<8x32xf32>
    %78 = vector.broadcast %58 : vector<1x32xf32> to vector<8x32xf32>
    %79 = arith.mulf %77, %78 : vector<8x32xf32>
    %80 = vector.broadcast %59 : vector<1x32xf32> to vector<8x32xf32>
    %81 = arith.addf %79, %80 : vector<8x32xf32>
    %82 = arith.truncf %81 : vector<8x32xf32> to vector<8x32xbf16>
    %c0_25 = arith.constant 0 : index
    %c0_26 = arith.constant 0 : index
    %83 = vector.load %arg9[%c0_25, %c0_26] : memref<32x64xbf16, #tpu.memory_space<vmem>>, vector<32x64xbf16>
    %cst_27 = arith.constant dense<0.000000e+00> : vector<8x64xf32>
    %84 = tpu.matmul %82, %83, %cst_27 {dimension_numbers = #tpu.dot_dimension_numbers<[1], [0], [0], [1], [0, 0, 1, 1], [], []>} : vector<8x32xbf16>, vector<32x64xbf16>, vector<8x64xf32> -> vector<8x64xf32>
    %c0_28 = arith.constant 0 : index
    %c0_29 = arith.constant 0 : index
    %85 = vector.load %arg10[%c0_28, %c0_29] : memref<1x64xf32, #tpu.memory_space<vmem>>, vector<1x64xf32>
    %86 = vector.broadcast %85 : vector<1x64xf32> to vector<8x64xf32>
    %87 = arith.addf %84, %86 : vector<8x64xf32>
    %cst_30 = arith.constant 0.000000e+00 : f32
    %88 = vector.broadcast %cst_30 : f32 to vector<8x64xf32>
    %89 = arith.maximumf %87, %88 : vector<8x64xf32>
    %90 = arith.truncf %89 : vector<8x64xf32> to vector<8x64xbf16>
    %c0_31 = arith.constant 0 : index
    %c0_32 = arith.constant 0 : index
    %91 = vector.load %arg11[%c0_31, %c0_32] : memref<64x32xbf16, #tpu.memory_space<vmem>>, vector<64x32xbf16>
    %cst_33 = arith.constant dense<0.000000e+00> : vector<8x32xf32>
    %92 = tpu.matmul %90, %91, %cst_33 {dimension_numbers = #tpu.dot_dimension_numbers<[1], [0], [0], [1], [0, 0, 1, 1], [], []>} : vector<8x64xbf16>, vector<64x32xbf16>, vector<8x32xf32> -> vector<8x32xf32>
    %c0_34 = arith.constant 0 : index
    %c0_35 = arith.constant 0 : index
    %93 = vector.load %arg12[%c0_34, %c0_35] : memref<1x32xf32, #tpu.memory_space<vmem>>, vector<1x32xf32>
    %94 = vector.broadcast %93 : vector<1x32xf32> to vector<8x32xf32>
    %95 = arith.addf %92, %94 : vector<8x32xf32>
    %96 = arith.addf %95, %81 : vector<8x32xf32>
    %c0_36 = arith.constant 0 : index
    %c0_37 = arith.constant 0 : index
    %97 = vector.load %arg13[%c0_36, %c0_37] : memref<1x32xf32, #tpu.memory_space<vmem>>, vector<1x32xf32>
    %c0_38 = arith.constant 0 : index
    %c0_39 = arith.constant 0 : index
    %98 = vector.load %arg14[%c0_38, %c0_39] : memref<1x32xf32, #tpu.memory_space<vmem>>, vector<1x32xf32>
    %cst_40 = arith.constant dense<0.000000e+00> : vector<8xf32>
    %99 = vector.multi_reduction <add>, %96, %cst_40 [1] : vector<8x32xf32> to vector<8xf32>
    %100 = vector.shape_cast %99 : vector<8xf32> to vector<8x1xf32>
    %cst_41 = arith.constant 3.200000e+01 : f32
    %101 = vector.broadcast %cst_41 : f32 to vector<8x1xf32>
    %102 = arith.divf %100, %101 : vector<8x1xf32>
    %103 = vector.broadcast %102 : vector<8x1xf32> to vector<8x32xf32>
    %104 = arith.subf %96, %103 : vector<8x32xf32>
    %105 = arith.mulf %104, %104 : vector<8x32xf32>
    %cst_42 = arith.constant dense<0.000000e+00> : vector<8xf32>
    %106 = vector.multi_reduction <add>, %105, %cst_42 [1] : vector<8x32xf32> to vector<8xf32>
    %107 = vector.shape_cast %106 : vector<8xf32> to vector<8x1xf32>
    %cst_43 = arith.constant 3.200000e+01 : f32
    %108 = vector.broadcast %cst_43 : f32 to vector<8x1xf32>
    %109 = arith.divf %107, %108 : vector<8x1xf32>
    %110 = vector.broadcast %102 : vector<8x1xf32> to vector<8x32xf32>
    %111 = arith.subf %96, %110 : vector<8x32xf32>
    %cst_44 = arith.constant 9.99999974E-6 : f32
    %112 = vector.broadcast %cst_44 : f32 to vector<8x1xf32>
    %113 = arith.addf %109, %112 : vector<8x1xf32>
    %114 = math.rsqrt %113 : vector<8x1xf32>
    %115 = vector.broadcast %114 : vector<8x1xf32> to vector<8x32xf32>
    %116 = arith.mulf %111, %115 : vector<8x32xf32>
    %117 = vector.broadcast %97 : vector<1x32xf32> to vector<8x32xf32>
    %118 = arith.mulf %116, %117 : vector<8x32xf32>
    %119 = vector.broadcast %98 : vector<1x32xf32> to vector<8x32xf32>
    %120 = arith.addf %118, %119 : vector<8x32xf32>
    %121 = vector.shape_cast %120 : vector<8x32xf32> to vector<1x8x32xf32>
    %c0_45 = arith.constant 0 : index
    %c0_46 = arith.constant 0 : index
    %c0_47 = arith.constant 0 : index
    %122 = vector.load %arg15[%c0_45, %c0_46, %c0_47] : memref<1x8x32xf32, #tpu.memory_space<vmem>>, vector<1x8x32xf32>
    tpu.vector_store %arg15[%c0_45, %c0_46, %c0_47], %121 {strides = array<i32>} : memref<1x8x32xf32, #tpu.memory_space<vmem>>, vector<1x8x32xf32>,
    return
  }
  func.func @transform_0(%arg0: i32, %arg1: memref<2xi32, #tpu.memory_space<smem>>) -> (i32, i32, i32) {
    %c0_i32 = arith.constant 0 : i32
    %c0_i32_0 = arith.constant 0 : i32
    %c0_i32_1 = arith.constant 0 : i32
    return %arg0, %c0_i32, %c0_i32_0 : i32, i32, i32
  }
  func.func @transform_1(%arg0: i32, %arg1: memref<2xi32, #tpu.memory_space<smem>>) -> (i32, i32) {
    %c0_i32 = arith.constant 0 : i32
    %c0_i32_0 = arith.constant 0 : i32
    %c0_i32_1 = arith.constant 0 : i32
    return %c0_i32, %c0_i32_0 : i32, i32
  }
  func.func @transform_2(%arg0: i32, %arg1: memref<2xi32, #tpu.memory_space<smem>>) -> (i32, i32) {
    %c0_i32 = arith.constant 0 : i32
    %c0_i32_0 = arith.constant 0 : i32
    %c0_i32_1 = arith.constant 0 : i32
    return %c0_i32, %c0_i32_0 : i32, i32
  }
  func.func @transform_3(%arg0: i32, %arg1: memref<2xi32, #tpu.memory_space<smem>>) -> (i32, i32) {
    %c0_i32 = arith.constant 0 : i32
    %c0_i32_0 = arith.constant 0 : i32
    %c0_i32_1 = arith.constant 0 : i32
    return %c0_i32, %c0_i32_0 : i32, i32
  }
  func.func @transform_4(%arg0: i32, %arg1: memref<2xi32, #tpu.memory_space<smem>>) -> (i32, i32) {
    %c0_i32 = arith.constant 0 : i32
    %c0_i32_0 = arith.constant 0 : i32
    %c0_i32_1 = arith.constant 0 : i32
    return %c0_i32, %c0_i32_0 : i32, i32
  }
  func.func @transform_5(%arg0: i32, %arg1: memref<2xi32, #tpu.memory_space<smem>>) -> (i32, i32) {
    %c0_i32 = arith.constant 0 : i32
    %c0_i32_0 = arith.constant 0 : i32
    %c0_i32_1 = arith.constant 0 : i32
    return %c0_i32, %c0_i32_0 : i32, i32
  }
  func.func @transform_6(%arg0: i32, %arg1: memref<2xi32, #tpu.memory_space<smem>>) -> (i32, i32) {
    %c0_i32 = arith.constant 0 : i32
    %c0_i32_0 = arith.constant 0 : i32
    %c0_i32_1 = arith.constant 0 : i32
    return %c0_i32, %c0_i32_0 : i32, i32
  }
  func.func @transform_7(%arg0: i32, %arg1: memref<2xi32, #tpu.memory_space<smem>>) -> (i32, i32) {
    %c0_i32 = arith.constant 0 : i32
    %c0_i32_0 = arith.constant 0 : i32
    %c0_i32_1 = arith.constant 0 : i32
    return %c0_i32, %c0_i32_0 : i32, i32
  }
  func.func @transform_8(%arg0: i32, %arg1: memref<2xi32, #tpu.memory_space<smem>>) -> (i32, i32) {
    %c0_i32 = arith.constant 0 : i32
    %c0_i32_0 = arith.constant 0 : i32
    %c0_i32_1 = arith.constant 0 : i32
    return %c0_i32, %c0_i32_0 : i32, i32
  }
  func.func @transform_9(%arg0: i32, %arg1: memref<2xi32, #tpu.memory_space<smem>>) -> (i32, i32) {
    %c0_i32 = arith.constant 0 : i32
    %c0_i32_0 = arith.constant 0 : i32
    %c0_i32_1 = arith.constant 0 : i32
    return %c0_i32, %c0_i32_0 : i32, i32
  }
  func.func @transform_10(%arg0: i32, %arg1: memref<2xi32, #tpu.memory_space<smem>>) -> (i32, i32) {
    %c0_i32 = arith.constant 0 : i32
    %c0_i32_0 = arith.constant 0 : i32
    %c0_i32_1 = arith.constant 0 : i32
    return %c0_i32, %c0_i32_0 : i32, i32
  }
  func.func @transform_11(%arg0: i32, %arg1: memref<2xi32, #tpu.memory_space<smem>>) -> (i32, i32) {
    %c0_i32 = arith.constant 0 : i32
    %c0_i32_0 = arith.constant 0 : i32
    %c0_i32_1 = arith.constant 0 : i32
    return %c0_i32, %c0_i32_0 : i32, i32
  }
  func.func @transform_12(%arg0: i32, %arg1: memref<2xi32, #tpu.memory_space<smem>>) -> (i32, i32) {
    %c0_i32 = arith.constant 0 : i32
    %c0_i32_0 = arith.constant 0 : i32
    %c0_i32_1 = arith.constant 0 : i32
    return %c0_i32, %c0_i32_0 : i32, i32
  }
  func.func @transform_13(%arg0: i32, %arg1: memref<2xi32, #tpu.memory_space<smem>>) -> (i32, i32, i32) {
    %c0_i32 = arith.constant 0 : i32
    %c0_i32_0 = arith.constant 0 : i32
    %c0_i32_1 = arith.constant 0 : i32
    return %arg0, %c0_i32, %c0_i32_0 : i32, i32, i32
  }
}

</mosaic_0001>

<llo_original>
// kernel: tpu_custom_call.1
$region0: #{tpu_custom_call.1}
  #allocation0 [shape = 'u32[]', space=smem, size = 0x4, offset = 0x4, fixed_abs, tag = 'smem constant byte address 0x4 - core index']
  #allocation1 [shape = 'u32[144,128]{1,0:T(1,128)}', space=vmem, size = 0x12000, scoped, tag = 'internal scratch']
  #allocation2 [shape = 's32[1]{0}', space=sflag, size = 0x4, scoped, tag = 'scoped memory for tpu_custom_call.1']
  #allocation3 [shape = 'u8[512]{0}', space=smem, size = 0x200, scoped, tag = 'prefetched SMEM operand 0']
  %s0 = inlined_call_operand.hbm [shape: s32[2], index: 0, kind: input, shape index: {}]
  %s1 = inlined_call_operand.vmem [shape: f32[2,8,32], index: 1, kind: input, shape index: {}]
  %s2 = inlined_call_operand.vmem [shape: bf16[32,96], index: 2, kind: input, shape index: {}]
  %s3 = inlined_call_operand.vmem [shape: f32[1,96], index: 3, kind: input, shape index: {}]
  %s4 = inlined_call_operand.vmem [shape: bf16[32,32], index: 4, kind: input, shape index: {}]
  %s5 = inlined_call_operand.vmem [shape: f32[1,32], index: 5, kind: input, shape index: {}]
  %s6 = inlined_call_operand.hbm [shape: f32[1,32], index: 6, kind: input, shape index: {}]
  %s7 = inlined_call_operand.hbm [shape: f32[1,32], index: 7, kind: input, shape index: {}]
  %s8 = inlined_call_operand.hbm [shape: bf16[32,64], index: 8, kind: input, shape index: {}]
  %s9 = inlined_call_operand.hbm [shape: f32[1,64], index: 9, kind: input, shape index: {}]
  %s10 = inlined_call_operand.vmem [shape: bf16[64,32], index: 10, kind: input, shape index: {}]
  %s11 = inlined_call_operand.vmem [shape: f32[1,32], index: 11, kind: input, shape index: {}]
  %s12 = inlined_call_operand.vmem [shape: f32[1,32], index: 12, kind: input, shape index: {}]
  %s13 = inlined_call_operand.vmem [shape: f32[1,32], index: 13, kind: input, shape index: {}]
  %s14 = inlined_call_operand.hbm [shape: f32[2,8,32], index: 14, kind: output, shape index: {}]
  %s15 = sld [smem:[#allocation0]]
  $region101: #{tpu_custom_call.1} parent=0
    _
  %s17 = ssub.s32 1, %s15
  %s18 = scalar_select 0, %s17, %s15
  %20 = dma.hbm_to_smem %s0, 16, [#allocation3], [#allocation2]
  %21 = dma.done [#allocation2], 16
  %22 = sfence
  $region1: #{tpu_custom_call.1} parent=0
    #allocation4 [shape = 'u8[512]{0}', space=vmem, size = 0x400, scoped, tag = 'input window, operand 6, single buffered']
    #allocation5 [shape = 's32[2]{0}', space=sflag, size = 0x8, scoped, tag = 'scoped memory for tpu_custom_call.1']
    #allocation6 [shape = 's32[2]{0}', space=sflag, size = 0x8, scoped, tag = 'scoped memory for tpu_custom_call.1']
    #allocation7 [shape = 'u8[512]{0}', space=vmem, size = 0x400, scoped, tag = 'input window, operand 7, single buffered']
    #allocation8 [shape = 's32[1]{0}', space=sflag, size = 0x4, scoped, tag = 'scoped memory for tpu_custom_call.1']
    #allocation9 [shape = 'u8[8192]{0}', space=vmem, size = 0x2000, scoped, tag = 'input window, operand 8, single buffered']
    #allocation10 [shape = 'u8[512]{0}', space=vmem, size = 0x400, scoped, tag = 'input window, operand 9, single buffered']
    #allocation11 [shape = 's32[1]{0}', space=sflag, size = 0x4, scoped, tag = 'scoped memory for tpu_custom_call.1']
    #allocation12 [shape = 'u8[8192]{0}', space=vmem, size = 0x2000, scoped, tag = 'output window, operand 0']
    %23 = vsyncpa [#allocation5], 0
    %24 = vsyncpa [#allocation8], 0
    %25 = vsyncpa [#allocation11], 0
    %26 = vsyncpa [#allocation6], 0
    %s27 = scalar_lea.sflag [#allocation6], 1
    %28 = vsyncpa %s27, 0
    loop: start=0, step=1, limit=4
    $region2: #{tpu_custom_call.1} parent=1 // loop_pre_header
      _
    $region3: #{tpu_custom_call.1} parent=1 // loop_header
      %s30 = sphi 0, %s34
      %p31 = scmp.ge.s32.totalorder %s30, 4
      %s40 = sphi 0, %s42
      %s43 = sphi 0, %s40
      %s44 = sphi 0, %s43
      %s60 = sphi 0, %s44
      %s64 = sphi 0, %s64
      %s66 = sphi 0, %s64
      %s67 = sphi 0, %s66
      %s81 = sphi 0, %s67
      %s85 = sphi 0, %s85
      %s87 = sphi 0, %s85
      %s88 = sphi 0, %s87
      %s102 = sphi 0, %s88
      %s106 = sphi 0, %s106
      %s108 = sphi 0, %s106
      %s109 = sphi 0, %s108
      %s123 = sphi 0, %s109
      %s127 = sphi 0, %s127
      %s129 = sphi 0, %s127
      %s130 = sphi 0, %s129
      %s144 = sphi 0, %s130
      %s148 = sphi 0, %s148
      %s150 = sphi 0, %s148
      %s151 = sphi 0, %s150
      %s165 = sphi 0, %s151
      %s169 = sphi 0, %s169
      %s171 = sphi 0, %s169
      %s172 = sphi 0, %s171
      %s186 = sphi 0, %s172
      %s190 = sphi 0, %s190
      %s192 = sphi 0, %s190
      %s193 = sphi 0, %s192
      %s207 = sphi 0, %s193
      %s211 = sphi 0, %s211
      %s213 = sphi 0, %s211
      %s214 = sphi 0, %s213
      %s228 = sphi 0, %s214
      %s232 = sphi 0, %s232
      %s234 = sphi 0, %s232
      %s235 = sphi 0, %s234
      %s249 = sphi 0, %s235
      %s253 = sphi 0, %s253
      %s255 = sphi 0, %s253
      %s256 = sphi 0, %s255
      %s270 = sphi 0, %s256
      %s274 = sphi 0, %s274
      %s276 = sphi 0, %s274
      %s277 = sphi 0, %s276
      %s291 = sphi 0, %s277
      %s295 = sphi 0, %s295
      %s297 = sphi 0, %s295
      %s298 = sphi 0, %s297
      %s312 = sphi 0, %s298
      %s318 = sphi 0, %s320
      %s321 = sphi 0, %s318
      %s322 = sphi 0, %s321
      %s338 = sphi 0, %s322
    $region4: #{tpu_custom_call.1} parent=1 // loop_header_branch
      %33 = sbr.rel (%p31) target = $region8
    $region5: #{tpu_custom_call.1} parent=1 // loop_body
      %s35 = ssub.s32 %s30, 1
      %s36 = ssub.s32 %s30, 2
      %s37 = sadd.s32 %s30, 1
      %s38 = ssub.s32 %s30, %s37
      %p39 = scmp.eq.s32.totalorder %s38, 0
      %s41 = sadd.s32 %s40, 1
      %s42 = scalar_select %p39, %s40, %s41
      %p45 = pneg %p39
      %p46 = scmp.eq.s32.totalorder %s30, 1
      %p47 = por %p45, %p46
      %p48 = scmp.ne.s32.totalorder %s40, %s43
      %p49 = scmp.eq.s32.totalorder %s30, 0
      %p50 = por %p48, %p49
      %p51 = scmp.ne.s32.totalorder %s40, %s43
      %p52 = scmp.eq.s32.totalorder %s35, 1
      %p53 = por %p51, %p52
      %p54 = scmp.ne.s32.totalorder %s43, %s44
      %p55 = scmp.eq.s32.totalorder %s35, 0
      %p56 = por %p54, %p55
      %p57 = scmp.ne.s32.totalorder %s43, %s44
      %p58 = scmp.eq.s32.totalorder %s36, 1
      %p59 = por %p57, %p58
      %p61 = scmp.ne.s32.totalorder %s44, %s60
      %p62 = scmp.eq.s32.totalorder %s36, 0
      %p63 = por %p61, %p62
      %s65 = sadd.s32 %s64, 1
      %p68 = scmp.eq.s32.totalorder %s30, 1
      %p69 = scmp.ne.s32.totalorder %s64, %s66
      %p70 = scmp.eq.s32.totalorder %s30, 0
      %p71 = por %p69, %p70
      %p72 = scmp.ne.s32.totalorder %s64, %s66
      %p73 = scmp.eq.s32.totalorder %s35, 1
      %p74 = por %p72, %p73
      %p75 = scmp.ne.s32.totalorder %s66, %s67
      %p76 = scmp.eq.s32.totalorder %s35, 0
      %p77 = por %p75, %p76
      %p78 = scmp.ne.s32.totalorder %s66, %s67
      %p79 = scmp.eq.s32.totalorder %s36, 1
      %p80 = por %p78, %p79
      %p82 = scmp.ne.s32.totalorder %s67, %s81
      %p83 = scmp.eq.s32.totalorder %s36, 0
      %p84 = por %p82, %p83
      %s86 = sadd.s32 %s85, 1
      %p89 = scmp.eq.s32.totalorder %s30, 1
      %p90 = scmp.ne.s32.totalorder %s85, %s87
      %p91 = scmp.eq.s32.totalorder %s30, 0
      %p92 = por %p90, %p91
      %p93 = scmp.ne.s32.totalorder %s85, %s87
      %p94 = scmp.eq.s32.totalorder %s35, 1
      %p95 = por %p93, %p94
      %p96 = scmp.ne.s32.totalorder %s87, %s88
      %p97 = scmp.eq.s32.totalorder %s35, 0
      %p98 = por %p96, %p97
      %p99 = scmp.ne.s32.totalorder %s87, %s88
      %p100 = scmp.eq.s32.totalorder %s36, 1
      %p101 = por %p99, %p100
      %p103 = scmp.ne.s32.totalorder %s88, %s102
      %p104 = scmp.eq.s32.totalorder %s36, 0
      %p105 = por %p103, %p104
      %s107 = sadd.s32 %s106, 1
      %p110 = scmp.eq.s32.totalorder %s30, 1
      %p111 = scmp.ne.s32.totalorder %s106, %s108
      %p112 = scmp.eq.s32.totalorder %s30, 0
      %p113 = por %p111, %p112
      %p114 = scmp.ne.s32.totalorder %s106, %s108
      %p115 = scmp.eq.s32.totalorder %s35, 1
      %p116 = por %p114, %p115
      %p117 = scmp.ne.s32.totalorder %s108, %s109
      %p118 = scmp.eq.s32.totalorder %s35, 0
      %p119 = por %p117, %p118
      %p120 = scmp.ne.s32.totalorder %s108, %s109
      %p121 = scmp.eq.s32.totalorder %s36, 1
      %p122 = por %p120, %p121
      %p124 = scmp.ne.s32.totalorder %s109, %s123
      %p125 = scmp.eq.s32.totalorder %s36, 0
      %p126 = por %p124, %p125
      %s128 = sadd.s32 %s127, 1
      %p131 = scmp.eq.s32.totalorder %s30, 1
      %p132 = scmp.ne.s32.totalorder %s127, %s129
      %p133 = scmp.eq.s32.totalorder %s30, 0
      %p134 = por %p132, %p133
      %p135 = scmp.ne.s32.totalorder %s127, %s129
      %p136 = scmp.eq.s32.totalorder %s35, 1
      %p137 = por %p135, %p136
      %p138 = scmp.ne.s32.totalorder %s129, %s130
      %p139 = scmp.eq.s32.totalorder %s35, 0
      %p140 = por %p138, %p139
      %p141 = scmp.ne.s32.totalorder %s129, %s130
      %p142 = scmp.eq.s32.totalorder %s36, 1
      %p143 = por %p141, %p142
      %p145 = scmp.ne.s32.totalorder %s130, %s144
      %p146 = scmp.eq.s32.totalorder %s36, 0
      %p147 = por %p145, %p146
      %s149 = sadd.s32 %s148, 1
      %p152 = scmp.eq.s32.totalorder %s30, 1
      %p153 = scmp.ne.s32.totalorder %s148, %s150
      %p154 = scmp.eq.s32.totalorder %s30, 0
      %p155 = por %p153, %p154
      %p156 = scmp.ne.s32.totalorder %s148, %s150
      %p157 = scmp.eq.s32.totalorder %s35, 1
      %p158 = por %p156, %p157
      %p159 = scmp.ne.s32.totalorder %s150, %s151
      %p160 = scmp.eq.s32.totalorder %s35, 0
      %p161 = por %p159, %p160
      %p162 = scmp.ne.s32.totalorder %s150, %s151
      %p163 = scmp.eq.s32.totalorder %s36, 1
      %p164 = por %p162, %p163
      %p166 = scmp.ne.s32.totalorder %s151, %s165
      %p167 = scmp.eq.s32.totalorder %s36, 0
      %p168 = por %p166, %p167
      %s170 = sadd.s32 %s169, 1
      %p173 = scmp.eq.s32.totalorder %s30, 1
      %p174 = scmp.ne.s32.totalorder %s169, %s171
      %p175 = scmp.eq.s32.totalorder %s30, 0
      %p176 = por %p174, %p175
      %p177 = scmp.ne.s32.totalorder %s169, %s171
      %p178 = scmp.eq.s32.totalorder %s35, 1
      %p179 = por %p177, %p178
      %p180 = scmp.ne.s32.totalorder %s171, %s172
      %p181 = scmp.eq.s32.totalorder %s35, 0
      %p182 = por %p180, %p181
      %p183 = scmp.ne.s32.totalorder %s171, %s172
      %p184 = scmp.eq.s32.totalorder %s36, 1
      %p185 = por %p183, %p184
      %p187 = scmp.ne.s32.totalorder %s172, %s186
      %p188 = scmp.eq.s32.totalorder %s36, 0
      %p189 = por %p187, %p188
      %s191 = sadd.s32 %s190, 1
      %p194 = scmp.eq.s32.totalorder %s30, 1
      %p195 = scmp.ne.s32.totalorder %s190, %s192
      %p196 = scmp.eq.s32.totalorder %s30, 0
      %p197 = por %p195, %p196
      %p198 = scmp.ne.s32.totalorder %s190, %s192
      %p199 = scmp.eq.s32.totalorder %s35, 1
      %p200 = por %p198, %p199
      %p201 = scmp.ne.s32.totalorder %s192, %s193
      %p202 = scmp.eq.s32.totalorder %s35, 0
      %p203 = por %p201, %p202
      %p204 = scmp.ne.s32.totalorder %s192, %s193
      %p205 = scmp.eq.s32.totalorder %s36, 1
      %p206 = por %p204, %p205
      %p208 = scmp.ne.s32.totalorder %s193, %s207
      %p209 = scmp.eq.s32.totalorder %s36, 0
      %p210 = por %p208, %p209
      %s212 = sadd.s32 %s211, 1
      %p215 = scmp.eq.s32.totalorder %s30, 1
      %p216 = scmp.ne.s32.totalorder %s211, %s213
      %p217 = scmp.eq.s32.totalorder %s30, 0
      %p218 = por %p216, %p217
      %p219 = scmp.ne.s32.totalorder %s211, %s213
      %p220 = scmp.eq.s32.totalorder %s35, 1
      %p221 = por %p219, %p220
      %p222 = scmp.ne.s32.totalorder %s213, %s214
      %p223 = scmp.eq.s32.totalorder %s35, 0
      %p224 = por %p222, %p223
      %p225 = scmp.ne.s32.totalorder %s213, %s214
      %p226 = scmp.eq.s32.totalorder %s36, 1
      %p227 = por %p225, %p226
      %p229 = scmp.ne.s32.totalorder %s214, %s228
      %p230 = scmp.eq.s32.totalorder %s36, 0
      %p231 = por %p229, %p230
      %s233 = sadd.s32 %s232, 1
      %p236 = scmp.eq.s32.totalorder %s30, 1
      %p237 = scmp.ne.s32.totalorder %s232, %s234
      %p238 = scmp.eq.s32.totalorder %s30, 0
      %p239 = por %p237, %p238
      %p240 = scmp.ne.s32.totalorder %s232, %s234
      %p241 = scmp.eq.s32.totalorder %s35, 1
      %p242 = por %p240, %p241
      %p243 = scmp.ne.s32.totalorder %s234, %s235
      %p244 = scmp.eq.s32.totalorder %s35, 0
      %p245 = por %p243, %p244
      %p246 = scmp.ne.s32.totalorder %s234, %s235
      %p247 = scmp.eq.s32.totalorder %s36, 1
      %p248 = por %p246, %p247
      %p250 = scmp.ne.s32.totalorder %s235, %s249
      %p251 = scmp.eq.s32.totalorder %s36, 0
      %p252 = por %p250, %p251
      %s254 = sadd.s32 %s253, 1
      %p257 = scmp.eq.s32.totalorder %s30, 1
      %p258 = scmp.ne.s32.totalorder %s253, %s255
      %p259 = scmp.eq.s32.totalorder %s30, 0
      %p260 = por %p258, %p259
      %p261 = scmp.ne.s32.totalorder %s253, %s255
      %p262 = scmp.eq.s32.totalorder %s35, 1
      %p263 = por %p261, %p262
      %p264 = scmp.ne.s32.totalorder %s255, %s256
      %p265 = scmp.eq.s32.totalorder %s35, 0
      %p266 = por %p264, %p265
      %p267 = scmp.ne.s32.totalorder %s255, %s256
      %p268 = scmp.eq.s32.totalorder %s36, 1
      %p269 = por %p267, %p268
      %p271 = scmp.ne.s32.totalorder %s256, %s270
      %p272 = scmp.eq.s32.totalorder %s36, 0
      %p273 = por %p271, %p272
      %s275 = sadd.s32 %s274, 1
      %p278 = scmp.eq.s32.totalorder %s30, 1
      %p279 = scmp.ne.s32.totalorder %s274, %s276
      %p280 = scmp.eq.s32.totalorder %s30, 0
      %p281 = por %p279, %p280
      %p282 = scmp.ne.s32.totalorder %s274, %s276
      %p283 = scmp.eq.s32.totalorder %s35, 1
      %p284 = por %p282, %p283
      %p285 = scmp.ne.s32.totalorder %s276, %s277
      %p286 = scmp.eq.s32.totalorder %s35, 0
      %p287 = por %p285, %p286
      %p288 = scmp.ne.s32.totalorder %s276, %s277
      %p289 = scmp.eq.s32.totalorder %s36, 1
      %p290 = por %p288, %p289
      %p292 = scmp.ne.s32.totalorder %s277, %s291
      %p293 = scmp.eq.s32.totalorder %s36, 0
      %p294 = por %p292, %p293
      %s296 = sadd.s32 %s295, 1
      %p299 = scmp.eq.s32.totalorder %s30, 1
      %p300 = scmp.ne.s32.totalorder %s295, %s297
      %p301 = scmp.eq.s32.totalorder %s30, 0
      %p302 = por %p300, %p301
      %p303 = scmp.ne.s32.totalorder %s295, %s297
      %p304 = scmp.eq.s32.totalorder %s35, 1
      %p305 = por %p303, %p304
      %p306 = scmp.ne.s32.totalorder %s297, %s298
      %p307 = scmp.eq.s32.totalorder %s35, 0
      %p308 = por %p306, %p307
      %p309 = scmp.ne.s32.totalorder %s297, %s298
      %p310 = scmp.eq.s32.totalorder %s36, 1
      %p311 = por %p309, %p310
      %p313 = scmp.ne.s32.totalorder %s298, %s312
      %p314 = scmp.eq.s32.totalorder %s36, 0
      %p315 = por %p313, %p314
      %s316 = ssub.s32 %s30, %s37
      %p317 = scmp.eq.s32.totalorder %s316, 0
      %s319 = sadd.s32 %s318, 1
      %s320 = scalar_select %p317, %s318, %s319
      %p323 = pneg %p317
      %p324 = scmp.eq.s32.totalorder %s30, 1
      %p325 = por %p323, %p324
      %p326 = scmp.ne.s32.totalorder %s318, %s321
      %p327 = scmp.eq.s32.totalorder %s30, 0
      %p328 = por %p326, %p327
      %p329 = scmp.ne.s32.totalorder %s318, %s321
      %p330 = scmp.eq.s32.totalorder %s35, 1
      %p331 = por %p329, %p330
      %p332 = scmp.ne.s32.totalorder %s321, %s322
      %p333 = scmp.eq.s32.totalorder %s35, 0
      %p334 = por %p332, %p333
      %p335 = scmp.ne.s32.totalorder %s321, %s322
      %p336 = scmp.eq.s32.totalorder %s36, 1
      %p337 = por %p335, %p336
      %p339 = scmp.ne.s32.totalorder %s322, %s338
      %p340 = scmp.eq.s32.totalorder %s36, 0
      %p341 = por %p339, %p340
      %p342 = scmp.le.s32.totalorder 1, %s30
      %p343 = scmp.lt.s32.totalorder %s30, 3
      %p344 = pnand %p342, %p343
      %p345 = pneg %p344
      // Predicated region
      $region9: #{tpu_custom_call.1} parent=5 // pred_check
        _
      $region10: #{tpu_custom_call.1} parent=5 // pred_check_branch
        %347 = sbr.rel (%p344) target = $region12
      $region11: #{tpu_custom_call.1} parent=5 // pred_region
        %s348 = ssub.s32 %s30, 1
        // Predicated region
        $region13: #{tpu_custom_call.1} parent=11 // pred_check
          %p349 = pneg %p77
        $region14: #{tpu_custom_call.1} parent=11 // pred_check_branch
          %351 = sbr.rel (%p349) target = $region16
        $region15: #{tpu_custom_call.1} parent=11 // pred_region
          _
        $region16: #{tpu_custom_call.1} parent=11 // pred_fallthru
          _
        // Predicated region
        $region17: #{tpu_custom_call.1} parent=11 // pred_check
          %p352 = pneg %p98
        $region18: #{tpu_custom_call.1} parent=11 // pred_check_branch
          %354 = sbr.rel (%p352) target = $region20
        $region19: #{tpu_custom_call.1} parent=11 // pred_region
          _
        $region20: #{tpu_custom_call.1} parent=11 // pred_fallthru
          _
        // Predicated region
        $region21: #{tpu_custom_call.1} parent=11 // pred_check
          %p355 = pneg %p119
        $region22: #{tpu_custom_call.1} parent=11 // pred_check_branch
          %357 = sbr.rel (%p355) target = $region24
        $region23: #{tpu_custom_call.1} parent=11 // pred_region
          _
        $region24: #{tpu_custom_call.1} parent=11 // pred_fallthru
          _
        // Predicated region
        $region25: #{tpu_custom_call.1} parent=11 // pred_check
          %p358 = pneg %p140
        $region26: #{tpu_custom_call.1} parent=11 // pred_check_branch
          %360 = sbr.rel (%p358) target = $region28
        $region27: #{tpu_custom_call.1} parent=11 // pred_region
          _
        $region28: #{tpu_custom_call.1} parent=11 // pred_fallthru
          _
        // Predicated region
        $region29: #{tpu_custom_call.1} parent=11 // pred_check
          %p361 = pneg %p161
        $region30: #{tpu_custom_call.1} parent=11 // pred_check_branch
          %363 = sbr.rel (%p361) target = $region32
        $region31: #{tpu_custom_call.1} parent=11 // pred_region
          %s365 = ssub.s32 16, 16
          %366 = vsyncadd [#allocation5], %s365
          %s368 = sshll.u32 [#allocation4], 4
          %s369 = int_to_ptr.vmem [resolvable:$true] %s368
          %371 = dma.hbm_to_vmem [thread:$0]  %s6, 16, %s369, [#allocation5]
        $region32: #{tpu_custom_call.1} parent=11 // pred_fallthru
          _
        // Predicated region
        $region33: #{tpu_custom_call.1} parent=11 // pred_check
          %p372 = pneg %p182
        $region34: #{tpu_custom_call.1} parent=11 // pred_check_branch
          %374 = sbr.rel (%p372) target = $region36
        $region35: #{tpu_custom_call.1} parent=11 // pred_region
          %s376 = ssub.s32 16, 16
          %377 = vsyncadd [#allocation8], %s376
          %s379 = sshll.u32 [#allocation7], 4
          %s380 = int_to_ptr.vmem [resolvable:$true] %s379
          %382 = dma.hbm_to_vmem [thread:$0]  %s7, 16, %s380, [#allocation8]
        $region36: #{tpu_custom_call.1} parent=11 // pred_fallthru
          _
        // Predicated region
        $region37: #{tpu_custom_call.1} parent=11 // pred_check
          %p383 = pneg %p203
        $region38: #{tpu_custom_call.1} parent=11 // pred_check_branch
          %385 = sbr.rel (%p383) target = $region40
        $region39: #{tpu_custom_call.1} parent=11 // pred_region
          %s387 = ssub.s32 256, 256
          %388 = vsyncadd [#allocation8], %s387
          %s389 = sshll.u32 [#allocation9], 4
          %s390 = int_to_ptr.vmem [resolvable:$true] %s389
          %395 = dma.hbm_to_vmem [thread:$0]  %s8, 256, %s390, [#allocation8], 64, 64, 4
        $region40: #{tpu_custom_call.1} parent=11 // pred_fallthru
          _
        // Predicated region
        $region41: #{tpu_custom_call.1} parent=11 // pred_check
          %p396 = pneg %p224
        $region42: #{tpu_custom_call.1} parent=11 // pred_check_branch
          %398 = sbr.rel (%p396) target = $region44
        $region43: #{tpu_custom_call.1} parent=11 // pred_region
          %s400 = ssub.s32 16, 16
          %401 = vsyncadd [#allocation11], %s400
          %s403 = sshll.u32 [#allocation10], 4
          %s404 = int_to_ptr.vmem [resolvable:$true] %s403
          %406 = dma.hbm_to_vmem [thread:$0]  %s9, 16, %s404, [#allocation11]
        $region44: #{tpu_custom_call.1} parent=11 // pred_fallthru
          _
        // Predicated region
        $region45: #{tpu_custom_call.1} parent=11 // pred_check
          %p407 = pneg %p245
        $region46: #{tpu_custom_call.1} parent=11 // pred_check_branch
          %409 = sbr.rel (%p407) target = $region48
        $region47: #{tpu_custom_call.1} parent=11 // pred_region
          _
        $region48: #{tpu_custom_call.1} parent=11 // pred_fallthru
          _
        // Predicated region
        $region49: #{tpu_custom_call.1} parent=11 // pred_check
          %p410 = pneg %p266
        $region50: #{tpu_custom_call.1} parent=11 // pred_check_branch
          %412 = sbr.rel (%p410) target = $region52
        $region51: #{tpu_custom_call.1} parent=11 // pred_region
          _
        $region52: #{tpu_custom_call.1} parent=11 // pred_fallthru
          _
        // Predicated region
        $region53: #{tpu_custom_call.1} parent=11 // pred_check
          %p413 = pneg %p287
        $region54: #{tpu_custom_call.1} parent=11 // pred_check_branch
          %415 = sbr.rel (%p413) target = $region56
        $region55: #{tpu_custom_call.1} parent=11 // pred_region
          _
        $region56: #{tpu_custom_call.1} parent=11 // pred_fallthru
          _
        // Predicated region
        $region57: #{tpu_custom_call.1} parent=11 // pred_check
          %p416 = pneg %p308
        $region58: #{tpu_custom_call.1} parent=11 // pred_check_branch
          %418 = sbr.rel (%p416) target = $region60
        $region59: #{tpu_custom_call.1} parent=11 // pred_region
          _
        $region60: #{tpu_custom_call.1} parent=11 // pred_fallthru
          _
      $region12: #{tpu_custom_call.1} parent=5 // pred_fallthru
        _
      %p419 = scmp.lt.s32.totalorder %s30, 2
      // Predicated region
      $region61: #{tpu_custom_call.1} parent=5 // pred_check
        %p420 = pneg %p419
      $region62: #{tpu_custom_call.1} parent=5 // pred_check_branch
        %422 = sbr.rel (%p420) target = $region64
      $region63: #{tpu_custom_call.1} parent=5 // pred_region
        // Predicated region
        $region65: #{tpu_custom_call.1} parent=63 // pred_check
          %p423 = pneg %p50
        $region66: #{tpu_custom_call.1} parent=63 // pred_check_branch
          %425 = sbr.rel (%p423) target = $region68
        $region67: #{tpu_custom_call.1} parent=63 // pred_region
          %p426 = scmp.lt.s32.totalorder %s30, 1
          %s427 = scalar_select %p426, %s30, 1
          %s428 = smul.addr %s427, 8
          %s429 = scalar_lea.vmem %s1, %s428
        $region68: #{tpu_custom_call.1} parent=63 // pred_fallthru
          _
      $region64: #{tpu_custom_call.1} parent=5 // pred_fallthru
        _
      %p430 = scmp.le.s32.totalorder 1, %s30
      %p431 = scmp.lt.s32.totalorder %s30, 3
      %p432 = pnand %p430, %p431
      %p433 = pneg %p432
      // Predicated region
      $region69: #{tpu_custom_call.1} parent=5 // pred_check
        _
      $region70: #{tpu_custom_call.1} parent=5 // pred_check_branch
        %435 = sbr.rel (%p432) target = $region72
      $region71: #{tpu_custom_call.1} parent=5 // pred_region
        %s436 = ssub.s32 %s30, 1
        // Predicated region
        $region73: #{tpu_custom_call.1} parent=71 // pred_check
          %p437 = pneg %p161
        $region74: #{tpu_custom_call.1} parent=71 // pred_check_branch
          %439 = sbr.rel (%p437) target = $region76
        $region75: #{tpu_custom_call.1} parent=71 // pred_region
          %440 = dma.done [#allocation5], 16
        $region76: #{tpu_custom_call.1} parent=71 // pred_fallthru
          _
        // Predicated region
        $region77: #{tpu_custom_call.1} parent=71 // pred_check
          %p441 = pneg %p182
        $region78: #{tpu_custom_call.1} parent=71 // pred_check_branch
          %443 = sbr.rel (%p441) target = $region80
        $region79: #{tpu_custom_call.1} parent=71 // pred_region
          %444 = dma.done [#allocation8], 16
        $region80: #{tpu_custom_call.1} parent=71 // pred_fallthru
          _
        // Predicated region
        $region81: #{tpu_custom_call.1} parent=71 // pred_check
          %p445 = pneg %p203
        $region82: #{tpu_custom_call.1} parent=71 // pred_check_branch
          %447 = sbr.rel (%p445) target = $region84
        $region83: #{tpu_custom_call.1} parent=71 // pred_region
          %448 = dma.done [#allocation8], 256
        $region84: #{tpu_custom_call.1} parent=71 // pred_fallthru
          _
        // Predicated region
        $region85: #{tpu_custom_call.1} parent=71 // pred_check
          %p449 = pneg %p224
        $region86: #{tpu_custom_call.1} parent=71 // pred_check_branch
          %451 = sbr.rel (%p449) target = $region88
        $region87: #{tpu_custom_call.1} parent=71 // pred_region
          %452 = dma.done [#allocation11], 16
        $region88: #{tpu_custom_call.1} parent=71 // pred_fallthru
          _
        %p453 = scmp.lt.s32.totalorder %s35, 1
        %s454 = scalar_select %p453, %s35, 1
        %s455 = smul.addr %s454, 8
        %s456 = scalar_lea.vmem %s1, %s455
        %p457 = pneg %p56
        %p458 = pneg %p53
        %p459 = pneg %p77
        %p460 = pneg %p74
        %p461 = pneg %p98
        %p462 = pneg %p95
        %p463 = pneg %p119
        %p464 = pneg %p116
        %p465 = pneg %p140
        %p466 = pneg %p137
        %p467 = pneg %p161
        %p468 = pneg %p158
        %p469 = pneg %p182
        %p470 = pneg %p179
        %p471 = pneg %p203
        %p472 = pneg %p200
        %p473 = pneg %p224
        %p474 = pneg %p221
        %p475 = pneg %p245
        %p476 = pneg %p242
        %p477 = pneg %p266
        %p478 = pneg %p263
        %p479 = pneg %p287
        %p480 = pneg %p284
        %p481 = pneg %p308
        %p482 = pneg %p305
        %p483 = pneg %p334
        %p484 = pneg %p331
        %s485 = sand.u32 %s321, 1
        %s486 = scalar_lea.sflag [#allocation6], %s485
        %s487 = sand.u32 %s321, 1
        %s488 = smul.addr %s487, 8
        %s489 = scalar_lea.vmem [#allocation12], %s488
        %p490 = scmp.lt.s32.totalorder %s35, 1
        %s491 = scalar_select %p490, %s35, 1
        %s492 = smul.addr %s491, 8
        %s493 = scalar_lea.vmem %s1, %s492
        %v495 = vld [vmem:[%s493] sm:$0xff]
        %v496 = vpack.c.bf16 %v495, %v495
        %v497 = vld [vmem:[%s2] sm:$0xf]
        %v498 = vld [vmem:[%s2 + $0x4] sm:$0xf]
        %v499 = vld [vmem:[%s2 + $0x8] sm:$0xf]
        %v500 = vld [vmem:[%s2 + $0xc] sm:$0xf]
        %v501 = vld [vmem:[%s3] sm:$0x1]
        %v503 = vlaneseq
        %v504 = vshrl.u32 %v503, 7
        %v505 = vsub.s32 0, %v504
        %v506 = vrot.slane %v501, %v505
        %v512 = vunpack.c.l.b16 %v497
        %v513 = vunpack.c.l.b16 %v498
        %v514 = vunpack.c.l.b16 %v499
        %v515 = vunpack.c.l.b16 %v500
        %v516 = vpack.c.b16 %v513, %v512
        %v517 = vpack.c.b16 %v515, %v514
        %vm520 = vcmask 261120
        %v522 = vsel %vm520, %v496, 0
        %524 = vmatprep.subr.bf16.mxu0 0
        %525 = vmatpush1.bf16.msra.mxu0 0
        %526 = vmatprep.subr.bf16.mxu0 0
        %527 = vmatpush1.bf16.msra.mxu0 0
        %528 = vmatprep.subr.bf16.mxu0 0
        %529 = vmatpush1.bf16.msra.mxu0 0
        %530 = vmatprep.subr.bf16.mxu0 0
        %531 = vmatpush1.bf16.msra.mxu0 0
        %532 = vmatprep.subr.bf16.mxu0 0
        %533 = vmatpush1.bf16.msra.mxu0 0
        %534 = vmatprep.subr.bf16.mxu0 0
        %535 = vmatpush1.bf16.msra.mxu0 0
        %536 = vmatprep.subr.bf16.mxu0 0
        %537 = vmatpush1.bf16.msra.mxu0 %v517
        %538 = vmatprep.subr.bf16.mxu0 0
        %539 = vmatpush1.bf16.msra.mxu0 %v516
        %540 = vmatprep.subr.bf16.mxu0 0
        %541 = vmatpush2.bf16.msra.mxu0 0
        %542 = vmatprep.subr.bf16.mxu0 0
        %543 = vmatpush2.bf16.msra.mxu0 0
        %544 = vmatprep.subr.bf16.mxu0 0
        %545 = vmatpush2.bf16.msra.mxu0 0
        %546 = vmatprep.subr.bf16.mxu0 0
        %547 = vmatpush2.bf16.msra.mxu0 0
        %548 = vmatprep.subr.bf16.mxu0 0
        %549 = vmatpush2.bf16.msra.mxu0 0
        %550 = vmatprep.subr.bf16.mxu0 0
        %551 = vmatpush2.bf16.msra.mxu0 0
        %552 = vmatprep.subr.bf16.mxu0 0
        %553 = vmatpush2.bf16.msra.mxu0 0
        %554 = vmatprep.subr.bf16.mxu0 0
        %555 = vmatpush2.bf16.msra.mxu0 0
        %556 = vmatprep.mubr.bf16.mxu0 0
        %557 = vmatmul.mubr.bf16.gmra.mxu0 %v522
        %v558 = vpop.f32.mrf.mxu0
        %v559 = vadd.f32 %v506, %v558
        %v560 = vpop.f32.mrf.mxu0
        %v561 = vpop.f32.mrf.mxu0
        %v562 = vpop.f32.mrf.mxu0
        %563 = vdwg.mxu0
        %565 = vrot.lane.b32.xlu0 %v559, 120
        %v566 = vpop.permute.xlu0 %565
        %568 = vrot.lane.b32.xlu0 %v559, 112
        %v569 = vpop.permute.xlu0 %568
        %571 = vrot.lane.b32.xlu0 %v559, 104
        %v572 = vpop.permute.xlu0 %571
        %574 = vrot.lane.b32.xlu0 %v559, 96
        %v575 = vpop.permute.xlu0 %574
        %577 = vrot.lane.b32.xlu0 %v559, 88
        %v578 = vpop.permute.xlu0 %577
        %580 = vrot.lane.b32.xlu0 %v559, 80
        %v581 = vpop.permute.xlu0 %580
        %583 = vrot.lane.b32.xlu0 %v559, 72
        %v584 = vpop.permute.xlu0 %583
        %586 = vrot.lane.b32.xlu0 %v559, 64
        %v587 = vpop.permute.xlu0 %586
        %589 = vrot.lane.b32.xlu0 %v559, 56
        %v590 = vpop.permute.xlu0 %589
        %592 = vrot.lane.b32.xlu0 %v559, 48
        %v593 = vpop.permute.xlu0 %592
        %595 = vrot.lane.b32.xlu0 %v559, 40
        %v596 = vpop.permute.xlu0 %595
        %v598 = vcombine.low %v559, %v569
        %v599 = vcombine.high %v559, %v569
        %v601 = vunpack.c.l.s4 1983009808
        %v602 = vunpack.c.0.s8 %v601
        %v603 = vlaneseq
        %v604 = vshrl.u32 %v603, 7
        %v605 = vsub.s32 %v602, %v604
        %v606 = vrot.slane %v598, %v605
        %v608 = vunpack.c.l.s4 1983009808
        %v609 = vunpack.c.0.s8 %v608
        %v610 = vlaneseq
        %v611 = vshrl.u32 %v610, 7
        %v612 = vsub.s32 %v609, %v611
        %v613 = vrot.slane %v599, %v612
        %v614 = vcombine.low %v566, %v572
        %v615 = vcombine.high %v566, %v572
        %v617 = vunpack.c.l.s4 1983009808
        %v618 = vunpack.c.0.s8 %v617
        %v619 = vlaneseq
        %v620 = vshrl.u32 %v619, 7
        %v621 = vsub.s32 %v618, %v620
        %v622 = vrot.slane %v614, %v621
        %v624 = vunpack.c.l.s4 1983009808
        %v625 = vunpack.c.0.s8 %v624
        %v626 = vlaneseq
        %v627 = vshrl.u32 %v626, 7
        %v628 = vsub.s32 %v625, %v627
        %v629 = vrot.slane %v615, %v628
        %v630 = vcombine.low %v575, %v581
        %v631 = vcombine.high %v575, %v581
        %v633 = vunpack.c.l.s4 1983009808
        %v634 = vunpack.c.0.s8 %v633
        %v635 = vlaneseq
        %v636 = vshrl.u32 %v635, 7
        %v637 = vsub.s32 %v634, %v636
        %v638 = vrot.slane %v630, %v637
        %v640 = vunpack.c.l.s4 1983009808
        %v641 = vunpack.c.0.s8 %v640
        %v642 = vlaneseq
        %v643 = vshrl.u32 %v642, 7
        %v644 = vsub.s32 %v641, %v643
        %v645 = vrot.slane %v631, %v644
        %v646 = vcombine.low %v578, %v584
        %v647 = vcombine.high %v578, %v584
        %v649 = vunpack.c.l.s4 1983009808
        %v650 = vunpack.c.0.s8 %v649
        %v651 = vlaneseq
        %v652 = vshrl.u32 %v651, 7
        %v653 = vsub.s32 %v650, %v652
        %v654 = vrot.slane %v646, %v653
        %v656 = vunpack.c.l.s4 1983009808
        %v657 = vunpack.c.0.s8 %v656
        %v658 = vlaneseq
        %v659 = vshrl.u32 %v658, 7
        %v660 = vsub.s32 %v657, %v659
        %v661 = vrot.slane %v647, %v660
        %v662 = vcombine.low %v606, %v622
        %v663 = vcombine.high %v606, %v622
        %v665 = vunpack.c.l.s4 1934713408
        %v666 = vunpack.c.0.s8 %v665
        %v667 = vlaneseq
        %v668 = vshrl.u32 %v667, 7
        %v669 = vsub.s32 %v666, %v668
        %v670 = vrot.slane %v662, %v669
        %v672 = vunpack.c.l.s4 1934713408
        %v673 = vunpack.c.0.s8 %v672
        %v674 = vlaneseq
        %v675 = vshrl.u32 %v674, 7
        %v676 = vsub.s32 %v673, %v675
        %v677 = vrot.slane %v663, %v676
        %v678 = vcombine.low %v613, %v629
        %v679 = vcombine.high %v613, %v629
        %v681 = vunpack.c.l.s4 1934713408
        %v682 = vunpack.c.0.s8 %v681
        %v683 = vlaneseq
        %v684 = vshrl.u32 %v683, 7
        %v685 = vsub.s32 %v682, %v684
        %v686 = vrot.slane %v678, %v685
        %v688 = vunpack.c.l.s4 1934713408
        %v689 = vunpack.c.0.s8 %v688
        %v690 = vlaneseq
        %v691 = vshrl.u32 %v690, 7
        %v692 = vsub.s32 %v689, %v691
        %v693 = vrot.slane %v679, %v692
        %v694 = vcombine.low %v638, %v654
        %v695 = vcombine.high %v638, %v654
        %v697 = vunpack.c.l.s4 1934713408
        %v698 = vunpack.c.0.s8 %v697
        %v699 = vlaneseq
        %v700 = vshrl.u32 %v699, 7
        %v701 = vsub.s32 %v698, %v700
        %v702 = vrot.slane %v694, %v701
        %v704 = vunpack.c.l.s4 1934713408
        %v705 = vunpack.c.0.s8 %v704
        %v706 = vlaneseq
        %v707 = vshrl.u32 %v706, 7
        %v708 = vsub.s32 %v705, %v707
        %v709 = vrot.slane %v695, %v708
        %v710 = vcombine.low %v645, %v661
        %v711 = vcombine.high %v645, %v661
        %v713 = vunpack.c.l.s4 1934713408
        %v714 = vunpack.c.0.s8 %v713
        %v715 = vlaneseq
        %v716 = vshrl.u32 %v715, 7
        %v717 = vsub.s32 %v714, %v716
        %v718 = vrot.slane %v710, %v717
        %v720 = vunpack.c.l.s4 1934713408
        %v721 = vunpack.c.0.s8 %v720
        %v722 = vlaneseq
        %v723 = vshrl.u32 %v722, 7
        %v724 = vsub.s32 %v721, %v723
        %v725 = vrot.slane %v711, %v724
        %v726 = vcombine.low %v670, %v702
        %v727 = vcombine.high %v670, %v702
        %v728 = vcombine.low %v677, %v709
        %v729 = vcombine.high %v677, %v709
        %v730 = vcombine.low %v686, %v718
        %v731 = vcombine.high %v686, %v718
        %v732 = vcombine.low %v693, %v725
        %v733 = vcombine.high %v693, %v725
        %v734 = vcombine.low %v587, %v593
        %v735 = vcombine.high %v587, %v593
        %v737 = vunpack.c.l.s4 1983009808
        %v738 = vunpack.c.0.s8 %v737
        %v739 = vlaneseq
        %v740 = vshrl.u32 %v739, 7
        %v741 = vsub.s32 %v738, %v740
        %v742 = vrot.slane %v734, %v741
        %v744 = vunpack.c.l.s4 1983009808
        %v745 = vunpack.c.0.s8 %v744
        %v746 = vlaneseq
        %v747 = vshrl.u32 %v746, 7
        %v748 = vsub.s32 %v745, %v747
        %v749 = vrot.slane %v735, %v748
        %v750 = vcombine.low %v590, %v596
        %v751 = vcombine.high %v590, %v596
        %v753 = vunpack.c.l.s4 1983009808
        %v754 = vunpack.c.0.s8 %v753
        %v755 = vlaneseq
        %v756 = vshrl.u32 %v755, 7
        %v757 = vsub.s32 %v754, %v756
        %v758 = vrot.slane %v750, %v757
        %v760 = vunpack.c.l.s4 1983009808
        %v761 = vunpack.c.0.s8 %v760
        %v762 = vlaneseq
        %v763 = vshrl.u32 %v762, 7
        %v764 = vsub.s32 %v761, %v763
        %v765 = vrot.slane %v751, %v764
        %v766 = vcombine.low %v742, %v758
        %v767 = vcombine.high %v742, %v758
        %v769 = vunpack.c.l.s4 1934713408
        %v770 = vunpack.c.0.s8 %v769
        %v771 = vlaneseq
        %v772 = vshrl.u32 %v771, 7
        %v773 = vsub.s32 %v770, %v772
        %v774 = vrot.slane %v766, %v773
        %v776 = vunpack.c.l.s4 1934713408
        %v777 = vunpack.c.0.s8 %v776
        %v778 = vlaneseq
        %v779 = vshrl.u32 %v778, 7
        %v780 = vsub.s32 %v777, %v779
        %v781 = vrot.slane %v767, %v780
        %v782 = vcombine.low %v749, %v765
        %v783 = vcombine.high %v749, %v765
        %v785 = vunpack.c.l.s4 1934713408
        %v786 = vunpack.c.0.s8 %v785
        %v787 = vlaneseq
        %v788 = vshrl.u32 %v787, 7
        %v789 = vsub.s32 %v786, %v788
        %v790 = vrot.slane %v782, %v789
        %v792 = vunpack.c.l.s4 1934713408
        %v793 = vunpack.c.0.s8 %v792
        %v794 = vlaneseq
        %v795 = vshrl.u32 %v794, 7
        %v796 = vsub.s32 %v793, %v795
        %v797 = vrot.slane %v783, %v796
        %v798 = vcombine.high %v774, 0.0
        %v799 = vcombine.high %v781, 0.0
        %v800 = vcombine.high %v790, 0.0
        %v801 = vcombine.high %v797, 0.0
        %v802 = vcombine.low %v726, %v728
        %v803 = vcombine.high %v726, %v728
        %v805 = vunpack.c.l.s4 1983009808
        %v806 = vunpack.c.0.s8 %v805
        %v807 = vlaneseq
        %v808 = vshrl.u32 %v807, 7
        %v809 = vsub.s32 %v806, %v808
        %v810 = vrot.slane %v802, %v809
        %v812 = vunpack.c.l.s4 1983009808
        %v813 = vunpack.c.0.s8 %v812
        %v814 = vlaneseq
        %v815 = vshrl.u32 %v814, 7
        %v816 = vsub.s32 %v813, %v815
        %v817 = vrot.slane %v803, %v816
        %v818 = vcombine.low %v727, %v729
        %v819 = vcombine.high %v727, %v729
        %v821 = vunpack.c.l.s4 1983009808
        %v822 = vunpack.c.0.s8 %v821
        %v823 = vlaneseq
        %v824 = vshrl.u32 %v823, 7
        %v825 = vsub.s32 %v822, %v824
        %v826 = vrot.slane %v818, %v825
        %v828 = vunpack.c.l.s4 1983009808
        %v829 = vunpack.c.0.s8 %v828
        %v830 = vlaneseq
        %v831 = vshrl.u32 %v830, 7
        %v832 = vsub.s32 %v829, %v831
        %v833 = vrot.slane %v819, %v832
        %v834 = vcombine.low %v730, %v732
        %v835 = vcombine.high %v730, %v732
        %v837 = vunpack.c.l.s4 1983009808
        %v838 = vunpack.c.0.s8 %v837
        %v839 = vlaneseq
        %v840 = vshrl.u32 %v839, 7
        %v841 = vsub.s32 %v838, %v840
        %v842 = vrot.slane %v834, %v841
        %v844 = vunpack.c.l.s4 1983009808
        %v845 = vunpack.c.0.s8 %v844
        %v846 = vlaneseq
        %v847 = vshrl.u32 %v846, 7
        %v848 = vsub.s32 %v845, %v847
        %v849 = vrot.slane %v835, %v848
        %v850 = vcombine.low %v731, %v733
        %v851 = vcombine.high %v731, %v733
        %v853 = vunpack.c.l.s4 1983009808
        %v854 = vunpack.c.0.s8 %v853
        %v855 = vlaneseq
        %v856 = vshrl.u32 %v855, 7
        %v857 = vsub.s32 %v854, %v856
        %v858 = vrot.slane %v850, %v857
        %v860 = vunpack.c.l.s4 1983009808
        %v861 = vunpack.c.0.s8 %v860
        %v862 = vlaneseq
        %v863 = vshrl.u32 %v862, 7
        %v864 = vsub.s32 %v861, %v863
        %v865 = vrot.slane %v851, %v864
        %v866 = vcombine.low %v810, %v826
        %v867 = vcombine.high %v810, %v826
        %v869 = vunpack.c.l.s4 1934713408
        %v870 = vunpack.c.0.s8 %v869
        %v871 = vlaneseq
        %v872 = vshrl.u32 %v871, 7
        %v873 = vsub.s32 %v870, %v872
        %v874 = vrot.slane %v866, %v873
        %v876 = vunpack.c.l.s4 1934713408
        %v877 = vunpack.c.0.s8 %v876
        %v878 = vlaneseq
        %v879 = vshrl.u32 %v878, 7
        %v880 = vsub.s32 %v877, %v879
        %v881 = vrot.slane %v867, %v880
        %v882 = vcombine.low %v817, %v833
        %v883 = vcombine.high %v817, %v833
        %v885 = vunpack.c.l.s4 1934713408
        %v886 = vunpack.c.0.s8 %v885
        %v887 = vlaneseq
        %v888 = vshrl.u32 %v887, 7
        %v889 = vsub.s32 %v886, %v888
        %v890 = vrot.slane %v882, %v889
        %v892 = vunpack.c.l.s4 1934713408
        %v893 = vunpack.c.0.s8 %v892
        %v894 = vlaneseq
        %v895 = vshrl.u32 %v894, 7
        %v896 = vsub.s32 %v893, %v895
        %v897 = vrot.slane %v883, %v896
        %v898 = vcombine.low %v842, %v858
        %v899 = vcombine.high %v842, %v858
        %v901 = vunpack.c.l.s4 1934713408
        %v902 = vunpack.c.0.s8 %v901
        %v903 = vlaneseq
        %v904 = vshrl.u32 %v903, 7
        %v905 = vsub.s32 %v902, %v904
        %v906 = vrot.slane %v898, %v905
        %v908 = vunpack.c.l.s4 1934713408
        %v909 = vunpack.c.0.s8 %v908
        %v910 = vlaneseq
        %v911 = vshrl.u32 %v910, 7
        %v912 = vsub.s32 %v909, %v911
        %v913 = vrot.slane %v899, %v912
        %v914 = vcombine.low %v849, %v865
        %v915 = vcombine.high %v849, %v865
        %v917 = vunpack.c.l.s4 1934713408
        %v918 = vunpack.c.0.s8 %v917
        %v919 = vlaneseq
        %v920 = vshrl.u32 %v919, 7
        %v921 = vsub.s32 %v918, %v920
        %v922 = vrot.slane %v914, %v921
        %v924 = vunpack.c.l.s4 1934713408
        %v925 = vunpack.c.0.s8 %v924
        %v926 = vlaneseq
        %v927 = vshrl.u32 %v926, 7
        %v928 = vsub.s32 %v925, %v927
        %v929 = vrot.slane %v915, %v928
        %v930 = vcombine.low %v874, %v906
        %v931 = vcombine.high %v874, %v906
        %v932 = vcombine.low %v881, %v913
        %v933 = vcombine.high %v881, %v913
        %v934 = vcombine.low %v890, %v922
        %v935 = vcombine.high %v890, %v922
        %v936 = vcombine.low %v897, %v929
        %v937 = vcombine.high %v897, %v929
        %v938 = vcombine.low %v774, %v781
        %v940 = vunpack.c.l.s4 1983009808
        %v941 = vunpack.c.0.s8 %v940
        %v942 = vlaneseq
        %v943 = vshrl.u32 %v942, 7
        %v944 = vsub.s32 %v941, %v943
        %v945 = vrot.slane %v938, %v944
        %v946 = vcombine.low %v798, %v799
        %v948 = vunpack.c.l.s4 1983009808
        %v949 = vunpack.c.0.s8 %v948
        %v950 = vlaneseq
        %v951 = vshrl.u32 %v950, 7
        %v952 = vsub.s32 %v949, %v951
        %v953 = vrot.slane %v946, %v952
        %v954 = vcombine.low %v790, %v797
        %v956 = vunpack.c.l.s4 1983009808
        %v957 = vunpack.c.0.s8 %v956
        %v958 = vlaneseq
        %v959 = vshrl.u32 %v958, 7
        %v960 = vsub.s32 %v957, %v959
        %v961 = vrot.slane %v954, %v960
        %v962 = vcombine.low %v800, %v801
        %v964 = vunpack.c.l.s4 1983009808
        %v965 = vunpack.c.0.s8 %v964
        %v966 = vlaneseq
        %v967 = vshrl.u32 %v966, 7
        %v968 = vsub.s32 %v965, %v967
        %v969 = vrot.slane %v962, %v968
        %v970 = vcombine.low %v945, %v953
        %v971 = vcombine.high %v945, %v953
        %v973 = vunpack.c.l.s4 1934713408
        %v974 = vunpack.c.0.s8 %v973
        %v975 = vlaneseq
        %v976 = vshrl.u32 %v975, 7
        %v977 = vsub.s32 %v974, %v976
        %v978 = vrot.slane %v970, %v977
        %v980 = vunpack.c.l.s4 1934713408
        %v981 = vunpack.c.0.s8 %v980
        %v982 = vlaneseq
        %v983 = vshrl.u32 %v982, 7
        %v984 = vsub.s32 %v981, %v983
        %v985 = vrot.slane %v971, %v984
        %v986 = vcombine.low %v961, %v969
        %v987 = vcombine.high %v961, %v969
        %v989 = vunpack.c.l.s4 1934713408
        %v990 = vunpack.c.0.s8 %v989
        %v991 = vlaneseq
        %v992 = vshrl.u32 %v991, 7
        %v993 = vsub.s32 %v990, %v992
        %v994 = vrot.slane %v986, %v993
        %v996 = vunpack.c.l.s4 1934713408
        %v997 = vunpack.c.0.s8 %v996
        %v998 = vlaneseq
        %v999 = vshrl.u32 %v998, 7
        %v1000 = vsub.s32 %v997, %v999
        %v1001 = vrot.slane %v987, %v1000
        %v1002 = vcombine.low %v978, %v994
        %v1003 = vcombine.high %v978, %v994
        %v1004 = vcombine.low %v985, %v1001
        %v1005 = vcombine.high %v985, %v1001
        %v1006 = vpack.c.bf16 %v930, %v930
        %v1007 = vpack.c.bf16 %v931, %v931
        %v1008 = vpack.c.bf16 %v932, %v932
        %v1009 = vpack.c.bf16 %v933, %v933
        %v1010 = vpack.c.bf16 %v934, %v934
        %v1011 = vpack.c.bf16 %v935, %v935
        %v1012 = vpack.c.bf16 %v936, %v936
        %v1013 = vpack.c.bf16 %v937, %v937
        %v1014 = vpack.c.bf16 %v1002, %v1002
        %v1015 = vpack.c.bf16 %v1003, %v1003
        %v1016 = vpack.c.bf16 %v1004, %v1004
        %v1017 = vpack.c.bf16 %v1005, %v1005
        %vm1018 = vcmask 64512
        %v1020 = vsel %vm1018, %v1006, 0
        %v1023 = vsel %vm1018, %v1010, 0
        %1025 = vmatprep.subr.bf16.mxu0 0
        %1026 = vmatpush1.bf16.xpose.msra.mxu0 0
        %1027 = vmatprep.subr.bf16.mxu0 0
        %1028 = vmatpush1.bf16.xpose.msra.mxu0 0
        %1029 = vmatprep.subr.bf16.mxu0 0
        %1030 = vmatpush1.bf16.xpose.msra.mxu0 0
        %1031 = vmatprep.subr.bf16.mxu0 0
        %1032 = vmatpush1.bf16.xpose.msra.mxu0 0
        %1033 = vmatprep.subr.bf16.mxu0 0
        %1034 = vmatpush1.bf16.xpose.msra.mxu0 0
        %1035 = vmatprep.subr.bf16.mxu0 0
        %1036 = vmatpush1.bf16.xpose.msra.mxu0 0
        %1037 = vmatprep.subr.bf16.mxu0 0
        %1038 = vmatpush1.bf16.xpose.msra.mxu0 0
        %1039 = vmatprep.subr.bf16.mxu0 0
        %1040 = vmatpush1.bf16.xpose.msra.mxu0 %v1023
        %1041 = vmatprep.subr.bf16.mxu0 0
        %1042 = vmatpush2.bf16.xpose.msra.mxu0 0
        %1043 = vmatprep.subr.bf16.mxu0 0
        %1044 = vmatpush2.bf16.xpose.msra.mxu0 0
        %1045 = vmatprep.subr.bf16.mxu0 0
        %1046 = vmatpush2.bf16.xpose.msra.mxu0 0
        %1047 = vmatprep.subr.bf16.mxu0 0
        %1048 = vmatpush2.bf16.xpose.msra.mxu0 0
        %1049 = vmatprep.subr.bf16.mxu0 0
        %1050 = vmatpush2.bf16.xpose.msra.mxu0 0
        %1051 = vmatprep.subr.bf16.mxu0 0
        %1052 = vmatpush2.bf16.xpose.msra.mxu0 0
        %1053 = vmatprep.subr.bf16.mxu0 0
        %1054 = vmatpush2.bf16.xpose.msra.mxu0 0
        %1055 = vmatprep.subr.bf16.mxu0 0
        %1056 = vmatpush2.bf16.xpose.msra.mxu0 0
        %1057 = vmatprep.mubr.bf16.mxu0 0
        %1058 = vmatmul.mubr.bf16.gmra.mxu0 %v1020
        %v1059 = vpop.f32.mrf.mxu0
        %v1060 = vadd.f32 0.0, %v1059
        %v1061 = vpop.f32.mrf.mxu0
        %v1062 = vpop.f32.mrf.mxu0
        %v1063 = vpop.f32.mrf.mxu0
        %1064 = vdwg.mxu0
        %v1066 = vsel %vm1018, %v1007, 0
        %v1069 = vsel %vm1018, %v1011, 0
        %1071 = vmatprep.subr.bf16.mxu0 0
        %1072 = vmatpush1.bf16.xpose.msra.mxu0 0
        %1073 = vmatprep.subr.bf16.mxu0 0
        %1074 = vmatpush1.bf16.xpose.msra.mxu0 0
        %1075 = vmatprep.subr.bf16.mxu0 0
        %1076 = vmatpush1.bf16.xpose.msra.mxu0 0
        %1077 = vmatprep.subr.bf16.mxu0 0
        %1078 = vmatpush1.bf16.xpose.msra.mxu0 0
        %1079 = vmatprep.subr.bf16.mxu0 0
        %1080 = vmatpush1.bf16.xpose.msra.mxu0 0
        %1081 = vmatprep.subr.bf16.mxu0 0
        %1082 = vmatpush1.bf16.xpose.msra.mxu0 0
        %1083 = vmatprep.subr.bf16.mxu0 0
        %1084 = vmatpush1.bf16.xpose.msra.mxu0 0
        %1085 = vmatprep.subr.bf16.mxu0 0
        %1086 = vmatpush1.bf16.xpose.msra.mxu0 %v1069
        %1087 = vmatprep.subr.bf16.mxu0 0
        %1088 = vmatpush2.bf16.xpose.msra.mxu0 0
        %1089 = vmatprep.subr.bf16.mxu0 0
        %1090 = vmatpush2.bf16.xpose.msra.mxu0 0
        %1091 = vmatprep.subr.bf16.mxu0 0
        %1092 = vmatpush2.bf16.xpose.msra.mxu0 0
        %1093 = vmatprep.subr.bf16.mxu0 0
        %1094 = vmatpush2.bf16.xpose.msra.mxu0 0
        %1095 = vmatprep.subr.bf16.mxu0 0
        %1096 = vmatpush2.bf16.xpose.msra.mxu0 0
        %1097 = vmatprep.subr.bf16.mxu0 0
        %1098 = vmatpush2.bf16.xpose.msra.mxu0 0
        %1099 = vmatprep.subr.bf16.mxu0 0
        %1100 = vmatpush2.bf16.xpose.msra.mxu0 0
        %1101 = vmatprep.subr.bf16.mxu0 0
        %1102 = vmatpush2.bf16.xpose.msra.mxu0 0
        %1103 = vmatprep.mubr.bf16.mxu0 0
        %1104 = vmatmul.mubr.bf16.gmra.mxu0 %v1066
        %v1105 = vpop.f32.mrf.mxu0
        %v1106 = vadd.f32 0.0, %v1105
        %v1107 = vpop.f32.mrf.mxu0
        %v1108 = vpop.f32.mrf.mxu0
        %v1109 = vpop.f32.mrf.mxu0
        %1110 = vdwg.mxu0
        %v1112 = vsel %vm1018, %v1008, 0
        %v1115 = vsel %vm1018, %v1012, 0
        %1117 = vmatprep.subr.bf16.mxu0 0
        %1118 = vmatpush1.bf16.xpose.msra.mxu0 0
        %1119 = vmatprep.subr.bf16.mxu0 0
        %1120 = vmatpush1.bf16.xpose.msra.mxu0 0
        %1121 = vmatprep.subr.bf16.mxu0 0
        %1122 = vmatpush1.bf16.xpose.msra.mxu0 0
        %1123 = vmatprep.subr.bf16.mxu0 0
        %1124 = vmatpush1.bf16.xpose.msra.mxu0 0
        %1125 = vmatprep.subr.bf16.mxu0 0
        %1126 = vmatpush1.bf16.xpose.msra.mxu0 0
        %1127 = vmatprep.subr.bf16.mxu0 0
        %1128 = vmatpush1.bf16.xpose.msra.mxu0 0
        %1129 = vmatprep.subr.bf16.mxu0 0
        %1130 = vmatpush1.bf16.xpose.msra.mxu0 0
        %1131 = vmatprep.subr.bf16.mxu0 0
        %1132 = vmatpush1.bf16.xpose.msra.mxu0 %v1115
        %1133 = vmatprep.subr.bf16.mxu0 0
        %1134 = vmatpush2.bf16.xpose.msra.mxu0 0
        %1135 = vmatprep.subr.bf16.mxu0 0
        %1136 = vmatpush2.bf16.xpose.msra.mxu0 0
        %1137 = vmatprep.subr.bf16.mxu0 0
        %1138 = vmatpush2.bf16.xpose.msra.mxu0 0
        %1139 = vmatprep.subr.bf16.mxu0 0
        %1140 = vmatpush2.bf16.xpose.msra.mxu0 0
        %1141 = vmatprep.subr.bf16.mxu0 0
        %1142 = vmatpush2.bf16.xpose.msra.mxu0 0
        %1143 = vmatprep.subr.bf16.mxu0 0
        %1144 = vmatpush2.bf16.xpose.msra.mxu0 0
        %1145 = vmatprep.subr.bf16.mxu0 0
        %1146 = vmatpush2.bf16.xpose.msra.mxu0 0
        %1147 = vmatprep.subr.bf16.mxu0 0
        %1148 = vmatpush2.bf16.xpose.msra.mxu0 0
        %1149 = vmatprep.mubr.bf16.mxu0 0
        %1150 = vmatmul.mubr.bf16.gmra.mxu0 %v1112
        %v1151 = vpop.f32.mrf.mxu0
        %v1152 = vadd.f32 0.0, %v1151
        %v1153 = vpop.f32.mrf.mxu0
        %v1154 = vpop.f32.mrf.mxu0
        %v1155 = vpop.f32.mrf.mxu0
        %1156 = vdwg.mxu0
        %v1158 = vsel %vm1018, %v1009, 0
        %v1161 = vsel %vm1018, %v1013, 0
        %1163 = vmatprep.subr.bf16.mxu0 0
        %1164 = vmatpush1.bf16.xpose.msra.mxu0 0
        %1165 = vmatprep.subr.bf16.mxu0 0
        %1166 = vmatpush1.bf16.xpose.msra.mxu0 0
        %1167 = vmatprep.subr.bf16.mxu0 0
        %1168 = vmatpush1.bf16.xpose.msra.mxu0 0
        %1169 = vmatprep.subr.bf16.mxu0 0
        %1170 = vmatpush1.bf16.xpose.msra.mxu0 0
        %1171 = vmatprep.subr.bf16.mxu0 0
        %1172 = vmatpush1.bf16.xpose.msra.mxu0 0
        %1173 = vmatprep.subr.bf16.mxu0 0
        %1174 = vmatpush1.bf16.xpose.msra.mxu0 0
        %1175 = vmatprep.subr.bf16.mxu0 0
        %1176 = vmatpush1.bf16.xpose.msra.mxu0 0
        %1177 = vmatprep.subr.bf16.mxu0 0
        %1178 = vmatpush1.bf16.xpose.msra.mxu0 %v1161
        %1179 = vmatprep.subr.bf16.mxu0 0
        %1180 = vmatpush2.bf16.xpose.msra.mxu0 0
        %1181 = vmatprep.subr.bf16.mxu0 0
        %1182 = vmatpush2.bf16.xpose.msra.mxu0 0
        %1183 = vmatprep.subr.bf16.mxu0 0
        %1184 = vmatpush2.bf16.xpose.msra.mxu0 0
        %1185 = vmatprep.subr.bf16.mxu0 0
        %1186 = vmatpush2.bf16.xpose.msra.mxu0 0
        %1187 = vmatprep.subr.bf16.mxu0 0
        %1188 = vmatpush2.bf16.xpose.msra.mxu0 0
        %1189 = vmatprep.subr.bf16.mxu0 0
        %1190 = vmatpush2.bf16.xpose.msra.mxu0 0
        %1191 = vmatprep.subr.bf16.mxu0 0
        %1192 = vmatpush2.bf16.xpose.msra.mxu0 0
        %1193 = vmatprep.subr.bf16.mxu0 0
        %1194 = vmatpush2.bf16.xpose.msra.mxu0 0
        %1195 = vmatprep.mubr.bf16.mxu0 0
        %1196 = vmatmul.mubr.bf16.gmra.mxu0 %v1158
        %v1197 = vpop.f32.mrf.mxu0
        %v1198 = vadd.f32 0.0, %v1197
        %v1199 = vpop.f32.mrf.mxu0
        %v1200 = vpop.f32.mrf.mxu0
        %v1201 = vpop.f32.mrf.mxu0
        %1202 = vdwg.mxu0
        %s1203 = sld [smem:[#allocation3 + %s35]]
        %v1204 = vlaneseq
        %v1205 = vand.u32 %v1204, 127
        %v1206 = vstv %s1203
        %vm1207 = vcmp.lt.s32.totalorder %v1205, %v1206
        %v1208 = vsel %vm1207, 1, 0
        %vm1209 = vcmp.eq.s32.totalorder %v1208, 1
        %v1210 = vsel %vm1209, %v1060, -1000000.0
        %v1211 = vsel %vm1209, %v1106, -1000000.0
        %v1212 = vsel %vm1209, %v1152, -1000000.0
        %v1213 = vsel %vm1209, %v1198, -1000000.0
        %v1214 = vsel %vm1018, %v1210, -inf
        %1215 = vmax.xlane.f32.xlu0 %v1214
        %v1216 = vpop.xlane.xlu0 %1215
        %v1217 = vsel %vm1018, %v1211, -inf
        %1218 = vmax.xlane.f32.xlu0 %v1217
        %v1219 = vpop.xlane.xlu0 %1218
        %v1220 = vsel %vm1018, %v1212, -inf
        %1221 = vmax.xlane.f32.xlu0 %v1220
        %v1222 = vpop.xlane.xlu0 %1221
        %v1223 = vsel %vm1018, %v1213, -inf
        %1224 = vmax.xlane.f32.xlu0 %v1223
        %v1225 = vpop.xlane.xlu0 %1224
        %v1226 = vsub.f32 %v1210, %v1216
        %v1227 = vsub.f32 %v1211, %v1219
        %v1228 = vsub.f32 %v1212, %v1222
        %v1229 = vsub.f32 %v1213, %v1225
        %v1230 = vmul.f32 %v1226, 1.442695
        %v1231 = vpow.pop %v1230
        %v1232 = vmul.f32 %v1227, 1.442695
        %v1233 = vpow.pop %v1232
        %v1234 = vmul.f32 %v1228, 1.442695
        %v1235 = vpow.pop %v1234
        %v1236 = vmul.f32 %v1229, 1.442695
        %v1237 = vpow.pop %v1236
        %v1238 = vsel %vm1018, %v1231, 0.0
        %1239 = vadd.xlane.f32.xlu0 %v1238
        %v1240 = vpop.xlane.xlu0 %1239
        %v1241 = vsel %vm1018, %v1233, 0.0
        %1242 = vadd.xlane.f32.xlu0 %v1241
        %v1243 = vpop.xlane.xlu0 %1242
        %v1244 = vsel %vm1018, %v1235, 0.0
        %1245 = vadd.xlane.f32.xlu0 %v1244
        %v1246 = vpop.xlane.xlu0 %1245
        %v1247 = vsel %vm1018, %v1237, 0.0
        %1248 = vadd.xlane.f32.xlu0 %v1247
        %v1249 = vpop.xlane.xlu0 %1248
        %v1250 = vpack.c.bf16 %v1231, %v1231
        %v1251 = vpack.c.bf16 %v1233, %v1233
        %v1252 = vpack.c.bf16 %v1235, %v1235
        %v1253 = vpack.c.bf16 %v1237, %v1237
        %v1255 = vsel %vm1018, %v1250, 0
        %vm1257 = vcmask 1043456
        %v1259 = vsel %vm1257, %v1014, 0
        %1261 = vmatprep.subr.bf16.mxu0 0
        %1262 = vmatpush1.bf16.msra.mxu0 0
        %1263 = vmatprep.subr.bf16.mxu0 0
        %1264 = vmatpush1.bf16.msra.mxu0 0
        %1265 = vmatprep.subr.bf16.mxu0 0
        %1266 = vmatpush1.bf16.msra.mxu0 0
        %1267 = vmatprep.subr.bf16.mxu0 0
        %1268 = vmatpush1.bf16.msra.mxu0 0
        %1269 = vmatprep.subr.bf16.mxu0 0
        %1270 = vmatpush1.bf16.msra.mxu0 0
        %1271 = vmatprep.subr.bf16.mxu0 0
        %1272 = vmatpush1.bf16.msra.mxu0 0
        %1273 = vmatprep.subr.bf16.mxu0 0
        %1274 = vmatpush1.bf16.msra.mxu0 0
        %1275 = vmatprep.subr.bf16.mxu0 0
        %1276 = vmatpush1.bf16.msra.mxu0 %v1259
        %1277 = vmatprep.subr.bf16.mxu0 0
        %1278 = vmatpush2.bf16.msra.mxu0 0
        %1279 = vmatprep.subr.bf16.mxu0 0
        %1280 = vmatpush2.bf16.msra.mxu0 0
        %1281 = vmatprep.subr.bf16.mxu0 0
        %1282 = vmatpush2.bf16.msra.mxu0 0
        %1283 = vmatprep.subr.bf16.mxu0 0
        %1284 = vmatpush2.bf16.msra.mxu0 0
        %1285 = vmatprep.subr.bf16.mxu0 0
        %1286 = vmatpush2.bf16.msra.mxu0 0
        %1287 = vmatprep.subr.bf16.mxu0 0
        %1288 = vmatpush2.bf16.msra.mxu0 0
        %1289 = vmatprep.subr.bf16.mxu0 0
        %1290 = vmatpush2.bf16.msra.mxu0 0
        %1291 = vmatprep.subr.bf16.mxu0 0
        %1292 = vmatpush2.bf16.msra.mxu0 0
        %1293 = vmatprep.mubr.bf16.mxu0 0
        %1294 = vmatmul.mubr.bf16.gmra.mxu0 %v1255
        %v1295 = vpop.f32.mrf.mxu0
        %v1296 = vadd.f32 0.0, %v1295
        %v1297 = vpop.f32.mrf.mxu0
        %v1298 = vpop.f32.mrf.mxu0
        %v1299 = vpop.f32.mrf.mxu0
        %1300 = vdwg.mxu0
        %v1302 = vsel %vm1018, %v1251, 0
        %v1305 = vsel %vm1257, %v1015, 0
        %1307 = vmatprep.subr.bf16.mxu0 0
        %1308 = vmatpush1.bf16.msra.mxu0 0
        %1309 = vmatprep.subr.bf16.mxu0 0
        %1310 = vmatpush1.bf16.msra.mxu0 0
        %1311 = vmatprep.subr.bf16.mxu0 0
        %1312 = vmatpush1.bf16.msra.mxu0 0
        %1313 = vmatprep.subr.bf16.mxu0 0
        %1314 = vmatpush1.bf16.msra.mxu0 0
        %1315 = vmatprep.subr.bf16.mxu0 0
        %1316 = vmatpush1.bf16.msra.mxu0 0
        %1317 = vmatprep.subr.bf16.mxu0 0
        %1318 = vmatpush1.bf16.msra.mxu0 0
        %1319 = vmatprep.subr.bf16.mxu0 0
        %1320 = vmatpush1.bf16.msra.mxu0 0
        %1321 = vmatprep.subr.bf16.mxu0 0
        %1322 = vmatpush1.bf16.msra.mxu0 %v1305
        %1323 = vmatprep.subr.bf16.mxu0 0
        %1324 = vmatpush2.bf16.msra.mxu0 0
        %1325 = vmatprep.subr.bf16.mxu0 0
        %1326 = vmatpush2.bf16.msra.mxu0 0
        %1327 = vmatprep.subr.bf16.mxu0 0
        %1328 = vmatpush2.bf16.msra.mxu0 0
        %1329 = vmatprep.subr.bf16.mxu0 0
        %1330 = vmatpush2.bf16.msra.mxu0 0
        %1331 = vmatprep.subr.bf16.mxu0 0
        %1332 = vmatpush2.bf16.msra.mxu0 0
        %1333 = vmatprep.subr.bf16.mxu0 0
        %1334 = vmatpush2.bf16.msra.mxu0 0
        %1335 = vmatprep.subr.bf16.mxu0 0
        %1336 = vmatpush2.bf16.msra.mxu0 0
        %1337 = vmatprep.subr.bf16.mxu0 0
        %1338 = vmatpush2.bf16.msra.mxu0 0
        %1339 = vmatprep.mubr.bf16.mxu0 0
        %1340 = vmatmul.mubr.bf16.gmra.mxu0 %v1302
        %v1341 = vpop.f32.mrf.mxu0
        %v1342 = vadd.f32 0.0, %v1341
        %v1343 = vpop.f32.mrf.mxu0
        %v1344 = vpop.f32.mrf.mxu0
        %v1345 = vpop.f32.mrf.mxu0
        %1346 = vdwg.mxu0
        %v1348 = vsel %vm1018, %v1252, 0
        %v1351 = vsel %vm1257, %v1016, 0
        %1353 = vmatprep.subr.bf16.mxu0 0
        %1354 = vmatpush1.bf16.msra.mxu0 0
        %1355 = vmatprep.subr.bf16.mxu0 0
        %1356 = vmatpush1.bf16.msra.mxu0 0
        %1357 = vmatprep.subr.bf16.mxu0 0
        %1358 = vmatpush1.bf16.msra.mxu0 0
        %1359 = vmatprep.subr.bf16.mxu0 0
        %1360 = vmatpush1.bf16.msra.mxu0 0
        %1361 = vmatprep.subr.bf16.mxu0 0
        %1362 = vmatpush1.bf16.msra.mxu0 0
        %1363 = vmatprep.subr.bf16.mxu0 0
        %1364 = vmatpush1.bf16.msra.mxu0 0
        %1365 = vmatprep.subr.bf16.mxu0 0
        %1366 = vmatpush1.bf16.msra.mxu0 0
        %1367 = vmatprep.subr.bf16.mxu0 0
        %1368 = vmatpush1.bf16.msra.mxu0 %v1351
        %1369 = vmatprep.subr.bf16.mxu0 0
        %1370 = vmatpush2.bf16.msra.mxu0 0
        %1371 = vmatprep.subr.bf16.mxu0 0
        %1372 = vmatpush2.bf16.msra.mxu0 0
        %1373 = vmatprep.subr.bf16.mxu0 0
        %1374 = vmatpush2.bf16.msra.mxu0 0
        %1375 = vmatprep.subr.bf16.mxu0 0
        %1376 = vmatpush2.bf16.msra.mxu0 0
        %1377 = vmatprep.subr.bf16.mxu0 0
        %1378 = vmatpush2.bf16.msra.mxu0 0
        %1379 = vmatprep.subr.bf16.mxu0 0
        %1380 = vmatpush2.bf16.msra.mxu0 0
        %1381 = vmatprep.subr.bf16.mxu0 0
        %1382 = vmatpush2.bf16.msra.mxu0 0
        %1383 = vmatprep.subr.bf16.mxu0 0
        %1384 = vmatpush2.bf16.msra.mxu0 0
        %1385 = vmatprep.mubr.bf16.mxu0 0
        %1386 = vmatmul.mubr.bf16.gmra.mxu0 %v1348
        %v1387 = vpop.f32.mrf.mxu0
        %v1388 = vadd.f32 0.0, %v1387
        %v1389 = vpop.f32.mrf.mxu0
        %v1390 = vpop.f32.mrf.mxu0
        %v1391 = vpop.f32.mrf.mxu0
        %1392 = vdwg.mxu0
        %v1394 = vsel %vm1018, %v1253, 0
        %v1397 = vsel %vm1257, %v1017, 0
        %1399 = vmatprep.subr.bf16.mxu0 0
        %1400 = vmatpush1.bf16.msra.mxu0 0
        %1401 = vmatprep.subr.bf16.mxu0 0
        %1402 = vmatpush1.bf16.msra.mxu0 0
        %1403 = vmatprep.subr.bf16.mxu0 0
        %1404 = vmatpush1.bf16.msra.mxu0 0
        %1405 = vmatprep.subr.bf16.mxu0 0
        %1406 = vmatpush1.bf16.msra.mxu0 0
        %1407 = vmatprep.subr.bf16.mxu0 0
        %1408 = vmatpush1.bf16.msra.mxu0 0
        %1409 = vmatprep.subr.bf16.mxu0 0
        %1410 = vmatpush1.bf16.msra.mxu0 0
        %1411 = vmatprep.subr.bf16.mxu0 0
        %1412 = vmatpush1.bf16.msra.mxu0 0
        %1413 = vmatprep.subr.bf16.mxu0 0
        %1414 = vmatpush1.bf16.msra.mxu0 %v1397
        %1415 = vmatprep.subr.bf16.mxu0 0
        %1416 = vmatpush2.bf16.msra.mxu0 0
        %1417 = vmatprep.subr.bf16.mxu0 0
        %1418 = vmatpush2.bf16.msra.mxu0 0
        %1419 = vmatprep.subr.bf16.mxu0 0
        %1420 = vmatpush2.bf16.msra.mxu0 0
        %1421 = vmatprep.subr.bf16.mxu0 0
        %1422 = vmatpush2.bf16.msra.mxu0 0
        %1423 = vmatprep.subr.bf16.mxu0 0
        %1424 = vmatpush2.bf16.msra.mxu0 0
        %1425 = vmatprep.subr.bf16.mxu0 0
        %1426 = vmatpush2.bf16.msra.mxu0 0
        %1427 = vmatprep.subr.bf16.mxu0 0
        %1428 = vmatpush2.bf16.msra.mxu0 0
        %1429 = vmatprep.subr.bf16.mxu0 0
        %1430 = vmatpush2.bf16.msra.mxu0 0
        %1431 = vmatprep.mubr.bf16.mxu0 0
        %1432 = vmatmul.mubr.bf16.gmra.mxu0 %v1394
        %v1433 = vpop.f32.mrf.mxu0
        %v1434 = vadd.f32 0.0, %v1433
        %v1435 = vpop.f32.mrf.mxu0
        %v1436 = vpop.f32.mrf.mxu0
        %v1437 = vpop.f32.mrf.mxu0
        %1438 = vdwg.mxu0
        %v1439 = vrcp.pop %v1240
        %v1440 = vrcp.pop %v1243
        %v1441 = vrcp.pop %v1246
        %v1442 = vrcp.pop %v1249
        %v1443 = vmul.f32 %v1296, %v1439
        %v1444 = vmul.f32 %v1342, %v1440
        %v1445 = vmul.f32 %v1388, %v1441
        %v1446 = vmul.f32 %v1434, %v1442
        %v1447 = vcombine.low %v1443, %v1445
        %v1448 = vcombine.high %v1443, %v1445
        %v1450 = vunpack.c.l.s4 1983009808
        %v1451 = vunpack.c.0.s8 %v1450
        %v1452 = vlaneseq
        %v1453 = vshrl.u32 %v1452, 7
        %v1454 = vsub.s32 %v1451, %v1453
        %v1455 = vrot.slane %v1447, %v1454
        %v1457 = vunpack.c.l.s4 1983009808
        %v1458 = vunpack.c.0.s8 %v1457
        %v1459 = vlaneseq
        %v1460 = vshrl.u32 %v1459, 7
        %v1461 = vsub.s32 %v1458, %v1460
        %v1462 = vrot.slane %v1448, %v1461
        %v1463 = vcombine.low %v1444, %v1446
        %v1464 = vcombine.high %v1444, %v1446
        %v1466 = vunpack.c.l.s4 1983009808
        %v1467 = vunpack.c.0.s8 %v1466
        %v1468 = vlaneseq
        %v1469 = vshrl.u32 %v1468, 7
        %v1470 = vsub.s32 %v1467, %v1469
        %v1471 = vrot.slane %v1463, %v1470
        %v1473 = vunpack.c.l.s4 1983009808
        %v1474 = vunpack.c.0.s8 %v1473
        %v1475 = vlaneseq
        %v1476 = vshrl.u32 %v1475, 7
        %v1477 = vsub.s32 %v1474, %v1476
        %v1478 = vrot.slane %v1464, %v1477
        %v1479 = vcombine.low %v1455, %v1471
        %v1480 = vcombine.high %v1455, %v1471
        %v1482 = vunpack.c.l.s4 1934713408
        %v1483 = vunpack.c.0.s8 %v1482
        %v1484 = vlaneseq
        %v1485 = vshrl.u32 %v1484, 7
        %v1486 = vsub.s32 %v1483, %v1485
        %v1487 = vrot.slane %v1479, %v1486
        %v1489 = vunpack.c.l.s4 1934713408
        %v1490 = vunpack.c.0.s8 %v1489
        %v1491 = vlaneseq
        %v1492 = vshrl.u32 %v1491, 7
        %v1493 = vsub.s32 %v1490, %v1492
        %v1494 = vrot.slane %v1480, %v1493
        %v1495 = vcombine.low %v1462, %v1478
        %v1496 = vcombine.high %v1462, %v1478
        %v1498 = vunpack.c.l.s4 1934713408
        %v1499 = vunpack.c.0.s8 %v1498
        %v1500 = vlaneseq
        %v1501 = vshrl.u32 %v1500, 7
        %v1502 = vsub.s32 %v1499, %v1501
        %v1503 = vrot.slane %v1495, %v1502
        %v1505 = vunpack.c.l.s4 1934713408
        %v1506 = vunpack.c.0.s8 %v1505
        %v1507 = vlaneseq
        %v1508 = vshrl.u32 %v1507, 7
        %v1509 = vsub.s32 %v1506, %v1508
        %v1510 = vrot.slane %v1496, %v1509
        %v1511 = vcombine.high %v1487, 0.0
        %v1512 = vcombine.high %v1494, 0.0
        %v1513 = vcombine.high %v1503, 0.0
        %v1514 = vcombine.high %v1510, 0.0
        %v1515 = vcombine.low %v1487, %v1494
        %v1517 = vunpack.c.l.s4 1983009808
        %v1518 = vunpack.c.0.s8 %v1517
        %v1519 = vlaneseq
        %v1520 = vshrl.u32 %v1519, 7
        %v1521 = vsub.s32 %v1518, %v1520
        %v1522 = vrot.slane %v1515, %v1521
        %v1523 = vcombine.low %v1511, %v1512
        %v1525 = vunpack.c.l.s4 1983009808
        %v1526 = vunpack.c.0.s8 %v1525
        %v1527 = vlaneseq
        %v1528 = vshrl.u32 %v1527, 7
        %v1529 = vsub.s32 %v1526, %v1528
        %v1530 = vrot.slane %v1523, %v1529
        %v1531 = vcombine.low %v1503, %v1510
        %v1533 = vunpack.c.l.s4 1983009808
        %v1534 = vunpack.c.0.s8 %v1533
        %v1535 = vlaneseq
        %v1536 = vshrl.u32 %v1535, 7
        %v1537 = vsub.s32 %v1534, %v1536
        %v1538 = vrot.slane %v1531, %v1537
        %v1539 = vcombine.low %v1513, %v1514
        %v1541 = vunpack.c.l.s4 1983009808
        %v1542 = vunpack.c.0.s8 %v1541
        %v1543 = vlaneseq
        %v1544 = vshrl.u32 %v1543, 7
        %v1545 = vsub.s32 %v1542, %v1544
        %v1546 = vrot.slane %v1539, %v1545
        %v1547 = vcombine.low %v1522, %v1530
        %v1548 = vcombine.high %v1522, %v1530
        %v1550 = vunpack.c.l.s4 1934713408
        %v1551 = vunpack.c.0.s8 %v1550
        %v1552 = vlaneseq
        %v1553 = vshrl.u32 %v1552, 7
        %v1554 = vsub.s32 %v1551, %v1553
        %v1555 = vrot.slane %v1547, %v1554
        %v1557 = vunpack.c.l.s4 1934713408
        %v1558 = vunpack.c.0.s8 %v1557
        %v1559 = vlaneseq
        %v1560 = vshrl.u32 %v1559, 7
        %v1561 = vsub.s32 %v1558, %v1560
        %v1562 = vrot.slane %v1548, %v1561
        %v1563 = vcombine.low %v1538, %v1546
        %v1564 = vcombine.high %v1538, %v1546
        %v1566 = vunpack.c.l.s4 1934713408
        %v1567 = vunpack.c.0.s8 %v1566
        %v1568 = vlaneseq
        %v1569 = vshrl.u32 %v1568, 7
        %v1570 = vsub.s32 %v1567, %v1569
        %v1571 = vrot.slane %v1563, %v1570
        %v1573 = vunpack.c.l.s4 1934713408
        %v1574 = vunpack.c.0.s8 %v1573
        %v1575 = vlaneseq
        %v1576 = vshrl.u32 %v1575, 7
        %v1577 = vsub.s32 %v1574, %v1576
        %v1578 = vrot.slane %v1564, %v1577
        %v1579 = vcombine.low %v1555, %v1571
        %v1580 = vcombine.high %v1555, %v1571
        %v1581 = vcombine.low %v1562, %v1578
        %v1582 = vcombine.high %v1562, %v1578
        %1584 = vrot.lane.b32.xlu0 %v1580, 8
        %v1585 = vpop.permute.xlu0 %1584
        %1588 = vrot.lane.b32.xlu0 %v1581, 16
        %v1589 = vpop.permute.xlu0 %1588
        %1592 = vrot.lane.b32.xlu0 %v1582, 24
        %v1593 = vpop.permute.xlu0 %1592
        %v1595 = vsel %vm1018, %v1579, %v1585
        %vm1596 = vcmask 130048
        %v1597 = vsel %vm1596, %v1595, %v1589
        %vm1598 = vcmask 195584
        %v1599 = vsel %vm1598, %v1597, %v1593
        %v1600 = vpack.c.bf16 %v1599, %v1599
        %v1601 = vld [vmem:[%s4] sm:$0xf]
        %v1602 = vld [vmem:[%s4 + $0x4] sm:$0xf]
        %v1603 = vld [vmem:[%s4 + $0x8] sm:$0xf]
        %v1604 = vld [vmem:[%s4 + $0xc] sm:$0xf]
        %v1605 = vld [vmem:[%s5] sm:$0x1]
        %v1607 = vlaneseq
        %v1608 = vshrl.u32 %v1607, 7
        %v1609 = vsub.s32 0, %v1608
        %v1610 = vrot.slane %v1605, %v1609
        %v1616 = vunpack.c.l.b16 %v1601
        %v1617 = vunpack.c.l.b16 %v1602
        %v1618 = vunpack.c.l.b16 %v1603
        %v1619 = vunpack.c.l.b16 %v1604
        %v1620 = vpack.c.b16 %v1617, %v1616
        %v1621 = vpack.c.b16 %v1619, %v1618
        %v1625 = vsel %vm520, %v1600, 0
        %1627 = vmatprep.subr.bf16.mxu0 0
        %1628 = vmatpush1.bf16.msra.mxu0 0
        %1629 = vmatprep.subr.bf16.mxu0 0
        %1630 = vmatpush1.bf16.msra.mxu0 0
        %1631 = vmatprep.subr.bf16.mxu0 0
        %1632 = vmatpush1.bf16.msra.mxu0 0
        %1633 = vmatprep.subr.bf16.mxu0 0
        %1634 = vmatpush1.bf16.msra.mxu0 0
        %1635 = vmatprep.subr.bf16.mxu0 0
        %1636 = vmatpush1.bf16.msra.mxu0 0
        %1637 = vmatprep.subr.bf16.mxu0 0
        %1638 = vmatpush1.bf16.msra.mxu0 0
        %1639 = vmatprep.subr.bf16.mxu0 0
        %1640 = vmatpush1.bf16.msra.mxu0 %v1621
        %1641 = vmatprep.subr.bf16.mxu0 0
        %1642 = vmatpush1.bf16.msra.mxu0 %v1620
        %1643 = vmatprep.subr.bf16.mxu0 0
        %1644 = vmatpush2.bf16.msra.mxu0 0
        %1645 = vmatprep.subr.bf16.mxu0 0
        %1646 = vmatpush2.bf16.msra.mxu0 0
        %1647 = vmatprep.subr.bf16.mxu0 0
        %1648 = vmatpush2.bf16.msra.mxu0 0
        %1649 = vmatprep.subr.bf16.mxu0 0
        %1650 = vmatpush2.bf16.msra.mxu0 0
        %1651 = vmatprep.subr.bf16.mxu0 0
        %1652 = vmatpush2.bf16.msra.mxu0 0
        %1653 = vmatprep.subr.bf16.mxu0 0
        %1654 = vmatpush2.bf16.msra.mxu0 0
        %1655 = vmatprep.subr.bf16.mxu0 0
        %1656 = vmatpush2.bf16.msra.mxu0 0
        %1657 = vmatprep.subr.bf16.mxu0 0
        %1658 = vmatpush2.bf16.msra.mxu0 0
        %1659 = vmatprep.mubr.bf16.mxu0 0
        %1660 = vmatmul.mubr.bf16.gmra.mxu0 %v1625
        %v1661 = vpop.f32.mrf.mxu0
        %v1662 = vadd.f32 %v1610, %v1661
        %v1663 = vpop.f32.mrf.mxu0
        %v1664 = vpop.f32.mrf.mxu0
        %v1665 = vpop.f32.mrf.mxu0
        %1666 = vdwg.mxu0
        %v1667 = vadd.f32 %v1662, %v495
        %v1668 = vld [vmem:[#allocation4] sm:$0x1]
        %v1669 = vld [vmem:[#allocation7] sm:$0x1]
        %v1670 = vsel %vm520, %v1667, 0.0
        %1671 = vadd.xlane.f32.xlu0 %v1670
        %v1672 = vpop.xlane.xlu0 %1671
        %v1673 = vrcp.pop 32.0
        %v1674 = vmul.f32 %v1672, %v1673
        %v1675 = vsub.f32 %v1667, %v1674
        %v1676 = vmul.f32 %v1675, %v1675
        %v1677 = vsel %vm520, %v1676, 0.0
        %1678 = vadd.xlane.f32.xlu0 %v1677
        %v1679 = vpop.xlane.xlu0 %1678
        %v1680 = vmul.f32 %v1679, %v1673
        %v1681 = vadd.f32 %v1680, 1e-05
        %v1682 = vrsqrt.pop %v1681
        %v1683 = vmul.f32 %v1675, %v1682
        %v1685 = vlaneseq
        %v1686 = vshrl.u32 %v1685, 7
        %v1687 = vsub.s32 0, %v1686
        %v1688 = vrot.slane %v1668, %v1687
        %v1690 = vmul.f32 %v1683, %v1688
        %v1692 = vlaneseq
        %v1693 = vshrl.u32 %v1692, 7
        %v1694 = vsub.s32 0, %v1693
        %v1695 = vrot.slane %v1669, %v1694
        %v1697 = vadd.f32 %v1690, %v1695
        %v1698 = vpack.c.bf16 %v1697, %v1697
        %v1699 = vld [vmem:[#allocation9] sm:$0xf]
        %v1700 = vld [vmem:[#allocation9 + $0x4] sm:$0xf]
        %v1701 = vld [vmem:[#allocation9 + $0x8] sm:$0xf]
        %v1702 = vld [vmem:[#allocation9 + $0xc] sm:$0xf]
        %v1703 = vld [vmem:[#allocation10] sm:$0x1]
        %v1705 = vlaneseq
        %v1706 = vshrl.u32 %v1705, 7
        %v1707 = vsub.s32 0, %v1706
        %v1708 = vrot.slane %v1703, %v1707
        %v1714 = vunpack.c.l.b16 %v1699
        %v1715 = vunpack.c.l.b16 %v1700
        %v1716 = vunpack.c.l.b16 %v1701
        %v1717 = vunpack.c.l.b16 %v1702
        %v1718 = vpack.c.b16 %v1715, %v1714
        %v1719 = vpack.c.b16 %v1717, %v1716
        %v1723 = vsel %vm520, %v1698, 0
        %1725 = vmatprep.subr.bf16.mxu0 0
        %1726 = vmatpush1.bf16.msra.mxu0 0
        %1727 = vmatprep.subr.bf16.mxu0 0
        %1728 = vmatpush1.bf16.msra.mxu0 0
        %1729 = vmatprep.subr.bf16.mxu0 0
        %1730 = vmatpush1.bf16.msra.mxu0 0
        %1731 = vmatprep.subr.bf16.mxu0 0
        %1732 = vmatpush1.bf16.msra.mxu0 0
        %1733 = vmatprep.subr.bf16.mxu0 0
        %1734 = vmatpush1.bf16.msra.mxu0 0
        %1735 = vmatprep.subr.bf16.mxu0 0
        %1736 = vmatpush1.bf16.msra.mxu0 0
        %1737 = vmatprep.subr.bf16.mxu0 0
        %1738 = vmatpush1.bf16.msra.mxu0 %v1719
        %1739 = vmatprep.subr.bf16.mxu0 0
        %1740 = vmatpush1.bf16.msra.mxu0 %v1718
        %1741 = vmatprep.subr.bf16.mxu0 0
        %1742 = vmatpush2.bf16.msra.mxu0 0
        %1743 = vmatprep.subr.bf16.mxu0 0
        %1744 = vmatpush2.bf16.msra.mxu0 0
        %1745 = vmatprep.subr.bf16.mxu0 0
        %1746 = vmatpush2.bf16.msra.mxu0 0
        %1747 = vmatprep.subr.bf16.mxu0 0
        %1748 = vmatpush2.bf16.msra.mxu0 0
        %1749 = vmatprep.subr.bf16.mxu0 0
        %1750 = vmatpush2.bf16.msra.mxu0 0
        %1751 = vmatprep.subr.bf16.mxu0 0
        %1752 = vmatpush2.bf16.msra.mxu0 0
        %1753 = vmatprep.subr.bf16.mxu0 0
        %1754 = vmatpush2.bf16.msra.mxu0 0
        %1755 = vmatprep.subr.bf16.mxu0 0
        %1756 = vmatpush2.bf16.msra.mxu0 0
        %1757 = vmatprep.mubr.bf16.mxu0 0
        %1758 = vmatmul.mubr.bf16.gmra.mxu0 %v1723
        %v1759 = vpop.f32.mrf.mxu0
        %v1760 = vadd.f32 %v1708, %v1759
        %v1761 = vpop.f32.mrf.mxu0
        %v1762 = vpop.f32.mrf.mxu0
        %v1763 = vpop.f32.mrf.mxu0
        %1764 = vdwg.mxu0
        %v1765 = vmax.f32 %v1760, 0.0
        %v1766 = vpack.c.bf16 %v1765, %v1765
        %v1767 = vld [vmem:[%s10] sm:$0xf]
        %v1768 = vld [vmem:[%s10 + $0x4] sm:$0xf]
        %v1769 = vld [vmem:[%s10 + $0x8] sm:$0xf]
        %v1770 = vld [vmem:[%s10 + $0xc] sm:$0xf]
        %v1771 = vld [vmem:[%s10 + $0x10] sm:$0xf]
        %v1772 = vld [vmem:[%s10 + $0x14] sm:$0xf]
        %v1773 = vld [vmem:[%s10 + $0x18] sm:$0xf]
        %v1774 = vld [vmem:[%s10 + $0x1c] sm:$0xf]
        %v1775 = vld [vmem:[%s11] sm:$0x1]
        %v1777 = vlaneseq
        %v1778 = vshrl.u32 %v1777, 7
        %v1779 = vsub.s32 0, %v1778
        %v1780 = vrot.slane %v1775, %v1779
        %v1790 = vunpack.c.l.b16 %v1767
        %v1791 = vunpack.c.l.b16 %v1768
        %v1792 = vunpack.c.l.b16 %v1769
        %v1793 = vunpack.c.l.b16 %v1770
        %v1794 = vunpack.c.l.b16 %v1771
        %v1795 = vunpack.c.l.b16 %v1772
        %v1796 = vunpack.c.l.b16 %v1773
        %v1797 = vunpack.c.l.b16 %v1774
        %v1798 = vpack.c.b16 %v1791, %v1790
        %v1799 = vpack.c.b16 %v1793, %v1792
        %v1800 = vpack.c.b16 %v1795, %v1794
        %v1801 = vpack.c.b16 %v1797, %v1796
        %vm1806 = vcmask 523264
        %v1808 = vsel %vm1806, %v1766, 0
        %1810 = vmatprep.subr.bf16.mxu0 0
        %1811 = vmatpush1.bf16.msra.mxu0 0
        %1812 = vmatprep.subr.bf16.mxu0 0
        %1813 = vmatpush1.bf16.msra.mxu0 0
        %1814 = vmatprep.subr.bf16.mxu0 0
        %1815 = vmatpush1.bf16.msra.mxu0 0
        %1816 = vmatprep.subr.bf16.mxu0 0
        %1817 = vmatpush1.bf16.msra.mxu0 0
        %1818 = vmatprep.subr.bf16.mxu0 0
        %1819 = vmatpush1.bf16.msra.mxu0 %v1801
        %1820 = vmatprep.subr.bf16.mxu0 0
        %1821 = vmatpush1.bf16.msra.mxu0 %v1800
        %1822 = vmatprep.subr.bf16.mxu0 0
        %1823 = vmatpush1.bf16.msra.mxu0 %v1799
        %1824 = vmatprep.subr.bf16.mxu0 0
        %1825 = vmatpush1.bf16.msra.mxu0 %v1798
        %1826 = vmatprep.subr.bf16.mxu0 0
        %1827 = vmatpush2.bf16.msra.mxu0 0
        %1828 = vmatprep.subr.bf16.mxu0 0
        %1829 = vmatpush2.bf16.msra.mxu0 0
        %1830 = vmatprep.subr.bf16.mxu0 0
        %1831 = vmatpush2.bf16.msra.mxu0 0
        %1832 = vmatprep.subr.bf16.mxu0 0
        %1833 = vmatpush2.bf16.msra.mxu0 0
        %1834 = vmatprep.subr.bf16.mxu0 0
        %1835 = vmatpush2.bf16.msra.mxu0 0
        %1836 = vmatprep.subr.bf16.mxu0 0
        %1837 = vmatpush2.bf16.msra.mxu0 0
        %1838 = vmatprep.subr.bf16.mxu0 0
        %1839 = vmatpush2.bf16.msra.mxu0 0
        %1840 = vmatprep.subr.bf16.mxu0 0
        %1841 = vmatpush2.bf16.msra.mxu0 0
        %1842 = vmatprep.mubr.bf16.mxu0 0
        %1843 = vmatmul.mubr.bf16.gmra.mxu0 %v1808
        %v1844 = vpop.f32.mrf.mxu0
        %v1845 = vadd.f32 %v1780, %v1844
        %v1846 = vpop.f32.mrf.mxu0
        %v1847 = vpop.f32.mrf.mxu0
        %v1848 = vpop.f32.mrf.mxu0
        %1849 = vdwg.mxu0
        %v1850 = vadd.f32 %v1845, %v1697
        %v1851 = vld [vmem:[%s12] sm:$0x1]
        %v1852 = vld [vmem:[%s13] sm:$0x1]
        %v1853 = vsel %vm520, %v1850, 0.0
        %1854 = vadd.xlane.f32.xlu0 %v1853
        %v1855 = vpop.xlane.xlu0 %1854
        %v1856 = vmul.f32 %v1855, %v1673
        %v1857 = vsub.f32 %v1850, %v1856
        %v1858 = vmul.f32 %v1857, %v1857
        %v1859 = vsel %vm520, %v1858, 0.0
        %1860 = vadd.xlane.f32.xlu0 %v1859
        %v1861 = vpop.xlane.xlu0 %1860
        %v1862 = vmul.f32 %v1861, %v1673
        %v1863 = vadd.f32 %v1862, 1e-05
        %v1864 = vrsqrt.pop %v1863
        %v1865 = vmul.f32 %v1857, %v1864
        %v1867 = vlaneseq
        %v1868 = vshrl.u32 %v1867, 7
        %v1869 = vsub.s32 0, %v1868
        %v1870 = vrot.slane %v1851, %v1869
        %v1872 = vmul.f32 %v1865, %v1870
        %v1874 = vlaneseq
        %v1875 = vshrl.u32 %v1874, 7
        %v1876 = vsub.s32 0, %v1875
        %v1877 = vrot.slane %v1852, %v1876
        %v1879 = vadd.f32 %v1872, %v1877
        %1880 = vst.msk [vmem:[%s489] sm:$0xff] %vm520, %v1879
        %s1881 = sand.u32 %s321, 1
        %s1882 = scalar_lea.sflag [#allocation6], %s1881
        %s1883 = sand.u32 %s321, 1
        %s1884 = smul.addr %s1883, 8
        %s1885 = scalar_lea.vmem [#allocation12], %s1884
        // Predicated region
        $region89: #{tpu_custom_call.1} parent=71 // pred_check
          %p1886 = pneg %p331
        $region90: #{tpu_custom_call.1} parent=71 // pred_check_branch
          %1888 = sbr.rel (%p1886) target = $region92
        $region91: #{tpu_custom_call.1} parent=71 // pred_region
          %s1890 = ssub.s32 128, 128
          %1891 = vsyncadd %s1882, %s1890
          %s1892 = smul.addr %s35, 128
          %s1893 = scalar_lea.hbm %s14, %s1892
          %s1895 = sshll.u32 %s1885, 4
          %s1896 = int_to_ptr.vmem [resolvable:$true] %s1895
          %1898 = dma.vmem_to_hbm [thread:$0]  %s1896, 128, %s1893, %s1882
        $region92: #{tpu_custom_call.1} parent=71 // pred_fallthru
          _
      $region72: #{tpu_custom_call.1} parent=5 // pred_fallthru
        _
      %p1899 = scmp.le.s32.totalorder 2, %s30
      // Predicated region
      $region93: #{tpu_custom_call.1} parent=5 // pred_check
        %p1900 = pneg %p1899
      $region94: #{tpu_custom_call.1} parent=5 // pred_check_branch
        %1902 = sbr.rel (%p1900) target = $region96
      $region95: #{tpu_custom_call.1} parent=5 // pred_region
        %s1903 = ssub.s32 %s30, 2
        // Predicated region
        $region97: #{tpu_custom_call.1} parent=95 // pred_check
          %p1904 = pneg %p337
        $region98: #{tpu_custom_call.1} parent=95 // pred_check_branch
          %1906 = sbr.rel (%p1904) target = $region100
        $region99: #{tpu_custom_call.1} parent=95 // pred_region
          %s1907 = sand.u32 %s322, 1
          %s1908 = scalar_lea.sflag [#allocation6], %s1907
          %s1909 = sand.u32 %s322, 1
          %s1910 = smul.addr %s1909, 8
          %s1911 = scalar_lea.vmem [#allocation12], %s1910
          %1912 = dma.done %s1908, 128
        $region100: #{tpu_custom_call.1} parent=95 // pred_fallthru
          _
      $region96: #{tpu_custom_call.1} parent=5 // pred_fallthru
        _
    $region6: #{tpu_custom_call.1} parent=1 // loop_footer
      %s34 = sadd.s32 1, %s30
    $region7: #{tpu_custom_call.1} parent=1 // loop_footer_branch
      %29 = sbr.rel target = $region3
    $region8: #{tpu_custom_call.1} parent=1 // loop_exit
      _
    %1913 = vsyncpa [#allocation5], 1
    %s1914 = scalar_lea.sflag [#allocation5], 1
    %1915 = vsyncpa %s1914, 1
    %1916 = vsyncpa [#allocation8], 1
    %1917 = vsyncpa [#allocation11], 1
    %1918 = vsyncpa [#allocation6], 1
    %s1919 = scalar_lea.sflag [#allocation6], 1
    %1920 = vsyncpa %s1919, 1

// kernel: tpu_custom_call.1
$region0: #{tpu_custom_call.1}
  #allocation0 [shape = 'u32[]', space=smem, size = 0x4, offset = 0x4, fixed_abs, tag = 'smem constant byte address 0x4 - core index']
  #allocation1 [shape = 'u32[144,128]{1,0:T(1,128)}', space=vmem, size = 0x12000, scoped, tag = 'internal scratch']
  #allocation2 [shape = 's32[1]{0}', space=sflag, size = 0x4, scoped, tag = 'scoped memory for tpu_custom_call.1']
  #allocation3 [shape = 'u8[512]{0}', space=smem, size = 0x200, scoped, tag = 'prefetched SMEM operand 0']
  %s0 = inlined_call_operand.hbm [shape: s32[2], index: 0, kind: input, shape index: {}]
  %s1 = inlined_call_operand.vmem [shape: f32[2,8,32], index: 1, kind: input, shape index: {}]
  %s2 = inlined_call_operand.vmem [shape: bf16[32,96], index: 2, kind: input, shape index: {}]
  %s3 = inlined_call_operand.vmem [shape: f32[1,96], index: 3, kind: input, shape index: {}]
  %s4 = inlined_call_operand.vmem [shape: bf16[32,32], index: 4, kind: input, shape index: {}]
  %s5 = inlined_call_operand.vmem [shape: f32[1,32], index: 5, kind: input, shape index: {}]
  %s6 = inlined_call_operand.hbm [shape: f32[1,32], index: 6, kind: input, shape index: {}]
  %s7 = inlined_call_operand.hbm [shape: f32[1,32], index: 7, kind: input, shape index: {}]
  %s8 = inlined_call_operand.hbm [shape: bf16[32,64], index: 8, kind: input, shape index: {}]
  %s9 = inlined_call_operand.hbm [shape: f32[1,64], index: 9, kind: input, shape index: {}]
  %s10 = inlined_call_operand.vmem [shape: bf16[64,32], index: 10, kind: input, shape index: {}]
  %s11 = inlined_call_operand.vmem [shape: f32[1,32], index: 11, kind: input, shape index: {}]
  %s12 = inlined_call_operand.vmem [shape: f32[1,32], index: 12, kind: input, shape index: {}]
  %s13 = inlined_call_operand.vmem [shape: f32[1,32], index: 13, kind: input, shape index: {}]
  %s14 = inlined_call_operand.hbm [shape: f32[2,8,32], index: 14, kind: output, shape index: {}]
  %s15 = sld [smem:[#allocation0]]
  $region101: #{tpu_custom_call.1} parent=0
    _
  %s17 = ssub.s32 1, %s15
  %s18 = scalar_select 0, %s17, %s15
  %20 = dma.hbm_to_smem %s0, 16, [#allocation3], [#allocation2]
  %21 = dma.done [#allocation2], 16
  %22 = sfence
  $region1: #{tpu_custom_call.1} parent=0
    #allocation4 [shape = 'u8[512]{0}', space=vmem, size = 0x400, scoped, tag = 'input window, operand 6, single buffered']
    #allocation5 [shape = 's32[2]{0}', space=sflag, size = 0x8, scoped, tag = 'scoped memory for tpu_custom_call.1']
    #allocation6 [shape = 's32[2]{0}', space=sflag, size = 0x8, scoped, tag = 'scoped memory for tpu_custom_call.1']
    #allocation7 [shape = 'u8[512]{0}', space=vmem, size = 0x400, scoped, tag = 'input window, operand 7, single buffered']
    #allocation8 [shape = 's32[1]{0}', space=sflag, size = 0x4, scoped, tag = 'scoped memory for tpu_custom_call.1']
    #allocation9 [shape = 'u8[8192]{0}', space=vmem, size = 0x2000, scoped, tag = 'input window, operand 8, single buffered']
    #allocation10 [shape = 'u8[512]{0}', space=vmem, size = 0x400, scoped, tag = 'input window, operand 9, single buffered']
    #allocation11 [shape = 's32[1]{0}', space=sflag, size = 0x4, scoped, tag = 'scoped memory for tpu_custom_call.1']
    #allocation12 [shape = 'u8[8192]{0}', space=vmem, size = 0x2000, scoped, tag = 'output window, operand 0']
    %23 = vsyncpa [#allocation5], 0
    %24 = vsyncpa [#allocation8], 0
    %25 = vsyncpa [#allocation11], 0
    %26 = vsyncpa [#allocation6], 0
    %s27 = scalar_lea.sflag [#allocation6], 1
    %28 = vsyncpa %s27, 0
    loop: start=0, step=1, limit=4
    $region2: #{tpu_custom_call.1} parent=1 // loop_pre_header
      _
    $region3: #{tpu_custom_call.1} parent=1 // loop_header
      %s30 = sphi 0, %s34
      %p31 = scmp.ge.s32.totalorder %s30, 4
      %s40 = sphi 0, %s42
      %s43 = sphi 0, %s40
      %s44 = sphi 0, %s43
      %s60 = sphi 0, %s44
      %s64 = sphi 0, %s64
      %s66 = sphi 0, %s64
      %s67 = sphi 0, %s66
      %s81 = sphi 0, %s67
      %s85 = sphi 0, %s85
      %s87 = sphi 0, %s85
      %s88 = sphi 0, %s87
      %s102 = sphi 0, %s88
      %s106 = sphi 0, %s106
      %s108 = sphi 0, %s106
      %s109 = sphi 0, %s108
      %s123 = sphi 0, %s109
      %s127 = sphi 0, %s127
      %s129 = sphi 0, %s127
      %s130 = sphi 0, %s129
      %s144 = sphi 0, %s130
      %s148 = sphi 0, %s148
      %s150 = sphi 0, %s148
      %s151 = sphi 0, %s150
      %s165 = sphi 0, %s151
      %s169 = sphi 0, %s169
      %s171 = sphi 0, %s169
      %s172 = sphi 0, %s171
      %s186 = sphi 0, %s172
      %s190 = sphi 0, %s190
      %s192 = sphi 0, %s190
      %s193 = sphi 0, %s192
      %s207 = sphi 0, %s193
      %s211 = sphi 0, %s211
      %s213 = sphi 0, %s211
      %s214 = sphi 0, %s213
      %s228 = sphi 0, %s214
      %s232 = sphi 0, %s232
      %s234 = sphi 0, %s232
      %s235 = sphi 0, %s234
      %s249 = sphi 0, %s235
      %s253 = sphi 0, %s253
      %s255 = sphi 0, %s253
      %s256 = sphi 0, %s255
      %s270 = sphi 0, %s256
      %s274 = sphi 0, %s274
      %s276 = sphi 0, %s274
      %s277 = sphi 0, %s276
      %s291 = sphi 0, %s277
      %s295 = sphi 0, %s295
      %s297 = sphi 0, %s295
      %s298 = sphi 0, %s297
      %s312 = sphi 0, %s298
      %s318 = sphi 0, %s320
      %s321 = sphi 0, %s318
      %s322 = sphi 0, %s321
      %s338 = sphi 0, %s322
    $region4: #{tpu_custom_call.1} parent=1 // loop_header_branch
      %33 = sbr.rel (%p31) target = $region8
    $region5: #{tpu_custom_call.1} parent=1 // loop_body
      %s35 = ssub.s32 %s30, 1
      %s36 = ssub.s32 %s30, 2
      %s37 = sadd.s32 %s30, 1
      %s38 = ssub.s32 %s30, %s37
      %p39 = scmp.eq.s32.totalorder %s38, 0
      %s41 = sadd.s32 %s40, 1
      %s42 = scalar_select %p39, %s40, %s41
      %p45 = pneg %p39
      %p46 = scmp.eq.s32.totalorder %s30, 1
      %p47 = por %p45, %p46
      %p48 = scmp.ne.s32.totalorder %s40, %s43
      %p49 = scmp.eq.s32.totalorder %s30, 0
      %p50 = por %p48, %p49
      %p51 = scmp.ne.s32.totalorder %s40, %s43
      %p52 = scmp.eq.s32.totalorder %s35, 1
      %p53 = por %p51, %p52
      %p54 = scmp.ne.s32.totalorder %s43, %s44
      %p55 = scmp.eq.s32.totalorder %s35, 0
      %p56 = por %p54, %p55
      %p57 = scmp.ne.s32.totalorder %s43, %s44
      %p58 = scmp.eq.s32.totalorder %s36, 1
      %p59 = por %p57, %p58
      %p61 = scmp.ne.s32.totalorder %s44, %s60
      %p62 = scmp.eq.s32.totalorder %s36, 0
      %p63 = por %p61, %p62
      %s65 = sadd.s32 %s64, 1
      %p68 = scmp.eq.s32.totalorder %s30, 1
      %p69 = scmp.ne.s32.totalorder %s64, %s66
      %p70 = scmp.eq.s32.totalorder %s30, 0
      %p71 = por %p69, %p70
      %p72 = scmp.ne.s32.totalorder %s64, %s66
      %p73 = scmp.eq.s32.totalorder %s35, 1
      %p74 = por %p72, %p73
      %p75 = scmp.ne.s32.totalorder %s66, %s67
      %p76 = scmp.eq.s32.totalorder %s35, 0
      %p77 = por %p75, %p76
      %p78 = scmp.ne.s32.totalorder %s66, %s67
      %p79 = scmp.eq.s32.totalorder %s36, 1
      %p80 = por %p78, %p79
      %p82 = scmp.ne.s32.totalorder %s67, %s81
      %p83 = scmp.eq.s32.totalorder %s36, 0
      %p84 = por %p82, %p83
      %s86 = sadd.s32 %s85, 1
      %p89 = scmp.eq.s32.totalorder %s30, 1
      %p90 = scmp.ne.s32.totalorder %s85, %s87
      %p91 = scmp.eq.s32.totalorder %s30, 0
      %p92 = por %p90, %p91
      %p93 = scmp.ne.s32.totalorder %s85, %s87
      %p94 = scmp.eq.s32.totalorder %s35, 1
      %p95 = por %p93, %p94
      %p96 = scmp.ne.s32.totalorder %s87, %s88
      %p97 = scmp.eq.s32.totalorder %s35, 0
      %p98 = por %p96, %p97
      %p99 = scmp.ne.s32.totalorder %s87, %s88
      %p100 = scmp.eq.s32.totalorder %s36, 1
      %p101 = por %p99, %p100
      %p103 = scmp.ne.s32.totalorder %s88, %s102
      %p104 = scmp.eq.s32.totalorder %s36, 0
      %p105 = por %p103, %p104
      %s107 = sadd.s32 %s106, 1
      %p110 = scmp.eq.s32.totalorder %s30, 1
      %p111 = scmp.ne.s32.totalorder %s106, %s108
      %p112 = scmp.eq.s32.totalorder %s30, 0
      %p113 = por %p111, %p112
      %p114 = scmp.ne.s32.totalorder %s106, %s108
      %p115 = scmp.eq.s32.totalorder %s35, 1
      %p116 = por %p114, %p115
      %p117 = scmp.ne.s32.totalorder %s108, %s109
      %p118 = scmp.eq.s32.totalorder %s35, 0
      %p119 = por %p117, %p118
      %p120 = scmp.ne.s32.totalorder %s108, %s109
      %p121 = scmp.eq.s32.totalorder %s36, 1
      %p122 = por %p120, %p121
      %p124 = scmp.ne.s32.totalorder %s109, %s123
      %p125 = scmp.eq.s32.totalorder %s36, 0
      %p126 = por %p124, %p125
      %s128 = sadd.s32 %s127, 1
      %p131 = scmp.eq.s32.totalorder %s30, 1
      %p132 = scmp.ne.s32.totalorder %s127, %s129
      %p133 = scmp.eq.s32.totalorder %s30, 0
      %p134 = por %p132, %p133
      %p135 = scmp.ne.s32.totalorder %s127, %s129
      %p136 = scmp.eq.s32.totalorder %s35, 1
      %p137 = por %p135, %p136
      %p138 = scmp.ne.s32.totalorder %s129, %s130
      %p139 = scmp.eq.s32.totalorder %s35, 0
      %p140 = por %p138, %p139
      %p141 = scmp.ne.s32.totalorder %s129, %s130
      %p142 = scmp.eq.s32.totalorder %s36, 1
      %p143 = por %p141, %p142
      %p145 = scmp.ne.s32.totalorder %s130, %s144
      %p146 = scmp.eq.s32.totalorder %s36, 0
      %p147 = por %p145, %p146
      %s149 = sadd.s32 %s148, 1
      %p152 = scmp.eq.s32.totalorder %s30, 1
      %p153 = scmp.ne.s32.totalorder %s148, %s150
      %p154 = scmp.eq.s32.totalorder %s30, 0
      %p155 = por %p153, %p154
      %p156 = scmp.ne.s32.totalorder %s148, %s150
      %p157 = scmp.eq.s32.totalorder %s35, 1
      %p158 = por %p156, %p157
      %p159 = scmp.ne.s32.totalorder %s150, %s151
      %p160 = scmp.eq.s32.totalorder %s35, 0
      %p161 = por %p159, %p160
      %p162 = scmp.ne.s32.totalorder %s150, %s151
      %p163 = scmp.eq.s32.totalorder %s36, 1
      %p164 = por %p162, %p163
      %p166 = scmp.ne.s32.totalorder %s151, %s165
      %p167 = scmp.eq.s32.totalorder %s36, 0
      %p168 = por %p166, %p167
      %s170 = sadd.s32 %s169, 1
      %p173 = scmp.eq.s32.totalorder %s30, 1
      %p174 = scmp.ne.s32.totalorder %s169, %s171
      %p175 = scmp.eq.s32.totalorder %s30, 0
      %p176 = por %p174, %p175
      %p177 = scmp.ne.s32.totalorder %s169, %s171
      %p178 = scmp.eq.s32.totalorder %s35, 1
      %p179 = por %p177, %p178
      %p180 = scmp.ne.s32.totalorder %s171, %s172
      %p181 = scmp.eq.s32.totalorder %s35, 0
      %p182 = por %p180, %p181
      %p183 = scmp.ne.s32.totalorder %s171, %s172
      %p184 = scmp.eq.s32.totalorder %s36, 1
      %p185 = por %p183, %p184
      %p187 = scmp.ne.s32.totalorder %s172, %s186
      %p188 = scmp.eq.s32.totalorder %s36, 0
      %p189 = por %p187, %p188
      %s191 = sadd.s32 %s190, 1
      %p194 = scmp.eq.s32.totalorder %s30, 1
      %p195 = scmp.ne.s32.totalorder %s190, %s192
      %p196 = scmp.eq.s32.totalorder %s30, 0
      %p197 = por %p195, %p196
      %p198 = scmp.ne.s32.totalorder %s190, %s192
      %p199 = scmp.eq.s32.totalorder %s35, 1
      %p200 = por %p198, %p199
      %p201 = scmp.ne.s32.totalorder %s192, %s193
      %p202 = scmp.eq.s32.totalorder %s35, 0
      %p203 = por %p201, %p202
      %p204 = scmp.ne.s32.totalorder %s192, %s193
      %p205 = scmp.eq.s32.totalorder %s36, 1
      %p206 = por %p204, %p205
      %p208 = scmp.ne.s32.totalorder %s193, %s207
      %p209 = scmp.eq.s32.totalorder %s36, 0
      %p210 = por %p208, %p209
      %s212 = sadd.s32 %s211, 1
      %p215 = scmp.eq.s32.totalorder %s30, 1
      %p216 = scmp.ne.s32.totalorder %s211, %s213
      %p217 = scmp.eq.s32.totalorder %s30, 0
      %p218 = por %p216, %p217
      %p219 = scmp.ne.s32.totalorder %s211, %s213
      %p220 = scmp.eq.s32.totalorder %s35, 1
      %p221 = por %p219, %p220
      %p222 = scmp.ne.s32.totalorder %s213, %s214
      %p223 = scmp.eq.s32.totalorder %s35, 0
      %p224 = por %p222, %p223
      %p225 = scmp.ne.s32.totalorder %s213, %s214
      %p226 = scmp.eq.s32.totalorder %s36, 1
      %p227 = por %p225, %p226
      %p229 = scmp.ne.s32.totalorder %s214, %s228
      %p230 = scmp.eq.s32.totalorder %s36, 0
      %p231 = por %p229, %p230
      %s233 = sadd.s32 %s232, 1
      %p236 = scmp.eq.s32.totalorder %s30, 1
      %p237 = scmp.ne.s32.totalorder %s232, %s234
      %p238 = scmp.eq.s32.totalorder %s30, 0
      %p239 = por %p237, %p238
      %p240 = scmp.ne.s32.totalorder %s232, %s234
      %p241 = scmp.eq.s32.totalorder %s35, 1
      %p242 = por %p240, %p241
      %p243 = scmp.ne.s32.totalorder %s234, %s235
      %p244 = scmp.eq.s32.totalorder %s35, 0
      %p245 = por %p243, %p244
      %p246 = scmp.ne.s32.totalorder %s234, %s235
      %p247 = scmp.eq.s32.totalorder %s36, 1
      %p248 = por %p246, %p247
      %p250 = scmp.ne.s32.totalorder %s235, %s249
      %p251 = scmp.eq.s32.totalorder %s36, 0
      %p252 = por %p250, %p251
      %s254 = sadd.s32 %s253, 1
      %p257 = scmp.eq.s32.totalorder %s30, 1
      %p258 = scmp.ne.s32.totalorder %s253, %s255
      %p259 = scmp.eq.s32.totalorder %s30, 0
      %p260 = por %p258, %p259
      %p261 = scmp.ne.s32.totalorder %s253, %s255
      %p262 = scmp.eq.s32.totalorder %s35, 1
      %p263 = por %p261, %p262
      %p264 = scmp.ne.s32.totalorder %s255, %s256
      %p265 = scmp.eq.s32.totalorder %s35, 0
      %p266 = por %p264, %p265
      %p267 = scmp.ne.s32.totalorder %s255, %s256
      %p268 = scmp.eq.s32.totalorder %s36, 1
      %p269 = por %p267, %p268
      %p271 = scmp.ne.s32.totalorder %s256, %s270
      %p272 = scmp.eq.s32.totalorder %s36, 0
      %p273 = por %p271, %p272
      %s275 = sadd.s32 %s274, 1
      %p278 = scmp.eq.s32.totalorder %s30, 1
      %p279 = scmp.ne.s32.totalorder %s274, %s276
      %p280 = scmp.eq.s32.totalorder %s30, 0
      %p281 = por %p279, %p280
      %p282 = scmp.ne.s32.totalorder %s274, %s276
      %p283 = scmp.eq.s32.totalorder %s35, 1
      %p284 = por %p282, %p283
      %p285 = scmp.ne.s32.totalorder %s276, %s277
      %p286 = scmp.eq.s32.totalorder %s35, 0
      %p287 = por %p285, %p286
      %p288 = scmp.ne.s32.totalorder %s276, %s277
      %p289 = scmp.eq.s32.totalorder %s36, 1
      %p290 = por %p288, %p289
      %p292 = scmp.ne.s32.totalorder %s277, %s291
      %p293 = scmp.eq.s32.totalorder %s36, 0
      %p294 = por %p292, %p293
      %s296 = sadd.s32 %s295, 1
      %p299 = scmp.eq.s32.totalorder %s30, 1
      %p300 = scmp.ne.s32.totalorder %s295, %s297
      %p301 = scmp.eq.s32.totalorder %s30, 0
      %p302 = por %p300, %p301
      %p303 = scmp.ne.s32.totalorder %s295, %s297
      %p304 = scmp.eq.s32.totalorder %s35, 1
      %p305 = por %p303, %p304
      %p306 = scmp.ne.s32.totalorder %s297, %s298
      %p307 = scmp.eq.s32.totalorder %s35, 0
      %p308 = por %p306, %p307
      %p309 = scmp.ne.s32.totalorder %s297, %s298
      %p310 = scmp.eq.s32.totalorder %s36, 1
      %p311 = por %p309, %p310
      %p313 = scmp.ne.s32.totalorder %s298, %s312
      %p314 = scmp.eq.s32.totalorder %s36, 0
      %p315 = por %p313, %p314
      %s316 = ssub.s32 %s30, %s37
      %p317 = scmp.eq.s32.totalorder %s316, 0
      %s319 = sadd.s32 %s318, 1
      %s320 = scalar_select %p317, %s318, %s319
      %p323 = pneg %p317
      %p324 = scmp.eq.s32.totalorder %s30, 1
      %p325 = por %p323, %p324
      %p326 = scmp.ne.s32.totalorder %s318, %s321
      %p327 = scmp.eq.s32.totalorder %s30, 0
      %p328 = por %p326, %p327
      %p329 = scmp.ne.s32.totalorder %s318, %s321
      %p330 = scmp.eq.s32.totalorder %s35, 1
      %p331 = por %p329, %p330
      %p332 = scmp.ne.s32.totalorder %s321, %s322
      %p333 = scmp.eq.s32.totalorder %s35, 0
      %p334 = por %p332, %p333
      %p335 = scmp.ne.s32.totalorder %s321, %s322
      %p336 = scmp.eq.s32.totalorder %s36, 1
      %p337 = por %p335, %p336
      %p339 = scmp.ne.s32.totalorder %s322, %s338
      %p340 = scmp.eq.s32.totalorder %s36, 0
      %p341 = por %p339, %p340
      %p342 = scmp.le.s32.totalorder 1, %s30
      %p343 = scmp.lt.s32.totalorder %s30, 3
      %p344 = pnand %p342, %p343
      %p345 = pneg %p344
      // Predicated region
      $region9: #{tpu_custom_call.1} parent=5 // pred_check
        _
      $region10: #{tpu_custom_call.1} parent=5 // pred_check_branch
        %347 = sbr.rel (%p344) target = $region12
      $region11: #{tpu_custom_call.1} parent=5 // pred_region
        %s348 = ssub.s32 %s30, 1
        // Predicated region
        $region13: #{tpu_custom_call.1} parent=11 // pred_check
          %p349 = pneg %p77
        $region14: #{tpu_custom_call.1} parent=11 // pred_check_branch
          %351 = sbr.rel (%p349) target = $region16
        $region15: #{tpu_custom_call.1} parent=11 // pred_region
          _
        $region16: #{tpu_custom_call.1} parent=11 // pred_fallthru
          _
        // Predicated region
        $region17: #{tpu_custom_call.1} parent=11 // pred_check
          %p352 = pneg %p98
        $region18: #{tpu_custom_call.1} parent=11 // pred_check_branch
          %354 = sbr.rel (%p352) target = $region20
        $region19: #{tpu_custom_call.1} parent=11 // pred_region
          _
        $region20: #{tpu_custom_call.1} parent=11 // pred_fallthru
          _
        // Predicated region
        $region21: #{tpu_custom_call.1} parent=11 // pred_check
          %p355 = pneg %p119
        $region22: #{tpu_custom_call.1} parent=11 // pred_check_branch
          %357 = sbr.rel (%p355) target = $region24
        $region23: #{tpu_custom_call.1} parent=11 // pred_region
          _
        $region24: #{tpu_custom_call.1} parent=11 // pred_fallthru
          _
        // Predicated region
        $region25: #{tpu_custom_call.1} parent=11 // pred_check
          %p358 = pneg %p140
        $region26: #{tpu_custom_call.1} parent=11 // pred_check_branch
          %360 = sbr.rel (%p358) target = $region28
        $region27: #{tpu_custom_call.1} parent=11 // pred_region
          _
        $region28: #{tpu_custom_call.1} parent=11 // pred_fallthru
          _
        // Predicated region
        $region29: #{tpu_custom_call.1} parent=11 // pred_check
          %p361 = pneg %p161
        $region30: #{tpu_custom_call.1} parent=11 // pred_check_branch
          %363 = sbr.rel (%p361) target = $region32
        $region31: #{tpu_custom_call.1} parent=11 // pred_region
          %s365 = ssub.s32 16, 16
          %366 = vsyncadd [#allocation5], %s365
          %s368 = sshll.u32 [#allocation4], 4
          %s369 = int_to_ptr.vmem [resolvable:$true] %s368
          %371 = dma.hbm_to_vmem [thread:$0]  %s6, 16, %s369, [#allocation5]
        $region32: #{tpu_custom_call.1} parent=11 // pred_fallthru
          _
        // Predicated region
        $region33: #{tpu_custom_call.1} parent=11 // pred_check
          %p372 = pneg %p182
        $region34: #{tpu_custom_call.1} parent=11 // pred_check_branch
          %374 = sbr.rel (%p372) target = $region36
        $region35: #{tpu_custom_call.1} parent=11 // pred_region
          %s376 = ssub.s32 16, 16
          %377 = vsyncadd [#allocation8], %s376
          %s379 = sshll.u32 [#allocation7], 4
          %s380 = int_to_ptr.vmem [resolvable:$true] %s379
          %382 = dma.hbm_to_vmem [thread:$0]  %s7, 16, %s380, [#allocation8]
        $region36: #{tpu_custom_call.1} parent=11 // pred_fallthru
          _
        // Predicated region
        $region37: #{tpu_custom_call.1} parent=11 // pred_check
          %p383 = pneg %p203
        $region38: #{tpu_custom_call.1} parent=11 // pred_check_branch
          %385 = sbr.rel (%p383) target = $region40
        $region39: #{tpu_custom_call.1} parent=11 // pred_region
          %s387 = ssub.s32 256, 256
          %388 = vsyncadd [#allocation8], %s387
          %s389 = sshll.u32 [#allocation9], 4
          %s390 = int_to_ptr.vmem [resolvable:$true] %s389
          %395 = dma.hbm_to_vmem [thread:$0]  %s8, 256, %s390, [#allocation8], 64, 64, 4
        $region40: #{tpu_custom_call.1} parent=11 // pred_fallthru
          _
        // Predicated region
        $region41: #{tpu_custom_call.1} parent=11 // pred_check
          %p396 = pneg %p224
        $region42: #{tpu_custom_call.1} parent=11 // pred_check_branch
          %398 = sbr.rel (%p396) target = $region44
        $region43: #{tpu_custom_call.1} parent=11 // pred_region
          %s400 = ssub.s32 16, 16
          %401 = vsyncadd [#allocation11], %s400
          %s403 = sshll.u32 [#allocation10], 4
          %s404 = int_to_ptr.vmem [resolvable:$true] %s403
          %406 = dma.hbm_to_vmem [thread:$0]  %s9, 16, %s404, [#allocation11]
        $region44: #{tpu_custom_call.1} parent=11 // pred_fallthru
          _
        // Predicated region
        $region45: #{tpu_custom_call.1} parent=11 // pred_check
          %p407 = pneg %p245
        $region46: #{tpu_custom_call.1} parent=11 // pred_check_branch
          %409 = sbr.rel (%p407) target = $region48
        $region47: #{tpu_custom_call.1} parent=11 // pred_region
          _
        $region48: #{tpu_custom_call.1} parent=11 // pred_fallthru
          _
        // Predicated region
        $region49: #{tpu_custom_call.1} parent=11 // pred_check
          %p410 = pneg %p266
        $region50: #{tpu_custom_call.1} parent=11 // pred_check_branch
          %412 = sbr.rel (%p410) target = $region52
        $region51: #{tpu_custom_call.1} parent=11 // pred_region
          _
        $region52: #{tpu_custom_call.1} parent=11 // pred_fallthru
          _
        // Predicated region
        $region53: #{tpu_custom_call.1} parent=11 // pred_check
          %p413 = pneg %p287
        $region54: #{tpu_custom_call.1} parent=11 // pred_check_branch
          %415 = sbr.rel (%p413) target = $region56
        $region55: #{tpu_custom_call.1} parent=11 // pred_region
          _
        $region56: #{tpu_custom_call.1} parent=11 // pred_fallthru
          _
        // Predicated region
        $region57: #{tpu_custom_call.1} parent=11 // pred_check
          %p416 = pneg %p308
        $region58: #{tpu_custom_call.1} parent=11 // pred_check_branch
          %418 = sbr.rel (%p416) target = $region60
        $region59: #{tpu_custom_call.1} parent=11 // pred_region
          _
        $region60: #{tpu_custom_call.1} parent=11 // pred_fallthru
          _
      $region12: #{tpu_custom_call.1} parent=5 // pred_fallthru
        _
      %p419 = scmp.lt.s32.totalorder %s30, 2
      // Predicated region
      $region61: #{tpu_custom_call.1} parent=5 // pred_check
        %p420 = pneg %p419
      $region62: #{tpu_custom_call.1} parent=5 // pred_check_branch
        %422 = sbr.rel (%p420) target = $region64
      $region63: #{tpu_custom_call.1} parent=5 // pred_region
        // Predicated region
        $region65: #{tpu_custom_call.1} parent=63 // pred_check
          %p423 = pneg %p50
        $region66: #{tpu_custom_call.1} parent=63 // pred_check_branch
          %425 = sbr.rel (%p423) target = $region68
        $region67: #{tpu_custom_call.1} parent=63 // pred_region
          %p426 = scmp.lt.s32.totalorder %s30, 1
          %s427 = scalar_select %p426, %s30, 1
          %s428 = smul.addr %s427, 8
          %s429 = scalar_lea.vmem %s1, %s428
        $region68: #{tpu_custom_call.1} parent=63 // pred_fallthru
          _
      $region64: #{tpu_custom_call.1} parent=5 // pred_fallthru
        _
      %p430 = scmp.le.s32.totalorder 1, %s30
      %p431 = scmp.lt.s32.totalorder %s30, 3
      %p432 = pnand %p430, %p431
      %p433 = pneg %p432
      // Predicated region
      $region69: #{tpu_custom_call.1} parent=5 // pred_check
        _
      $region70: #{tpu_custom_call.1} parent=5 // pred_check_branch
        %435 = sbr.rel (%p432) target = $region72
      $region71: #{tpu_custom_call.1} parent=5 // pred_region
        %s436 = ssub.s32 %s30, 1
        // Predicated region
        $region73: #{tpu_custom_call.1} parent=71 // pred_check
          %p437 = pneg %p161
        $region74: #{tpu_custom_call.1} parent=71 // pred_check_branch
          %439 = sbr.rel (%p437) target = $region76
        $region75: #{tpu_custom_call.1} parent=71 // pred_region
          %440 = dma.done [#allocation5], 16
        $region76: #{tpu_custom_call.1} parent=71 // pred_fallthru
          _
        // Predicated region
        $region77: #{tpu_custom_call.1} parent=71 // pred_check
          %p441 = pneg %p182
        $region78: #{tpu_custom_call.1} parent=71 // pred_check_branch
          %443 = sbr.rel (%p441) target = $region80
        $region79: #{tpu_custom_call.1} parent=71 // pred_region
          %444 = dma.done [#allocation8], 16
        $region80: #{tpu_custom_call.1} parent=71 // pred_fallthru
          _
        // Predicated region
        $region81: #{tpu_custom_call.1} parent=71 // pred_check
          %p445 = pneg %p203
        $region82: #{tpu_custom_call.1} parent=71 // pred_check_branch
          %447 = sbr.rel (%p445) target = $region84
        $region83: #{tpu_custom_call.1} parent=71 // pred_region
          %448 = dma.done [#allocation8], 256
        $region84: #{tpu_custom_call.1} parent=71 // pred_fallthru
          _
        // Predicated region
        $region85: #{tpu_custom_call.1} parent=71 // pred_check
          %p449 = pneg %p224
        $region86: #{tpu_custom_call.1} parent=71 // pred_check_branch
          %451 = sbr.rel (%p449) target = $region88
        $region87: #{tpu_custom_call.1} parent=71 // pred_region
          %452 = dma.done [#allocation11], 16
        $region88: #{tpu_custom_call.1} parent=71 // pred_fallthru
          _
        %p453 = scmp.lt.s32.totalorder %s35, 1
        %s454 = scalar_select %p453, %s35, 1
        %s455 = smul.addr %s454, 8
        %s456 = scalar_lea.vmem %s1, %s455
        %p457 = pneg %p56
        %p458 = pneg %p53
        %p459 = pneg %p77
        %p460 = pneg %p74
        %p461 = pneg %p98
        %p462 = pneg %p95
        %p463 = pneg %p119
        %p464 = pneg %p116
        %p465 = pneg %p140
        %p466 = pneg %p137
        %p467 = pneg %p161
        %p468 = pneg %p158
        %p469 = pneg %p182
        %p470 = pneg %p179
        %p471 = pneg %p203
        %p472 = pneg %p200
        %p473 = pneg %p224
        %p474 = pneg %p221
        %p475 = pneg %p245
        %p476 = pneg %p242
        %p477 = pneg %p266
        %p478 = pneg %p263
        %p479 = pneg %p287
        %p480 = pneg %p284
        %p481 = pneg %p308
        %p482 = pneg %p305
        %p483 = pneg %p334
        %p484 = pneg %p331
        %s485 = sand.u32 %s321, 1
        %s486 = scalar_lea.sflag [#allocation6], %s485
        %s487 = sand.u32 %s321, 1
        %s488 = smul.addr %s487, 8
        %s489 = scalar_lea.vmem [#allocation12], %s488
        %p490 = scmp.lt.s32.totalorder %s35, 1
        %s491 = scalar_select %p490, %s35, 1
        %s492 = smul.addr %s491, 8
        %s493 = scalar_lea.vmem %s1, %s492
        %v495 = vld [vmem:[%s493] sm:$0xff]
        %v496 = vpack.c.bf16 %v495, %v495
        %v497 = vld [vmem:[%s2] sm:$0xf]
        %v498 = vld [vmem:[%s2 + $0x4] sm:$0xf]
        %v499 = vld [vmem:[%s2 + $0x8] sm:$0xf]
        %v500 = vld [vmem:[%s2 + $0xc] sm:$0xf]
        %v501 = vld [vmem:[%s3] sm:$0x1]
        %v503 = vlaneseq
        %v504 = vshrl.u32 %v503, 7
        %v505 = vsub.s32 0, %v504
        %v506 = vrot.slane %v501, %v505
        %v512 = vunpack.c.l.b16 %v497
        %v513 = vunpack.c.l.b16 %v498
        %v514 = vunpack.c.l.b16 %v499
        %v515 = vunpack.c.l.b16 %v500
        %v516 = vpack.c.b16 %v513, %v512
        %v517 = vpack.c.b16 %v515, %v514
        %vm520 = vcmask 261120
        %v522 = vsel %vm520, %v496, 0
        %524 = vmatprep.subr.bf16.mxu0 0
        %525 = vmatpush1.bf16.msra.mxu0 0
        %526 = vmatprep.subr.bf16.mxu0 0
        %527 = vmatpush1.bf16.msra.mxu0 0
        %528 = vmatprep.subr.bf16.mxu0 0
        %529 = vmatpush1.bf16.msra.mxu0 0
        %530 = vmatprep.subr.bf16.mxu0 0
        %531 = vmatpush1.bf16.msra.mxu0 0
        %532 = vmatprep.subr.bf16.mxu0 0
        %533 = vmatpush1.bf16.msra.mxu0 0
        %534 = vmatprep.subr.bf16.mxu0 0
        %535 = vmatpush1.bf16.msra.mxu0 0
        %536 = vmatprep.subr.bf16.mxu0 0
        %537 = vmatpush1.bf16.msra.mxu0 %v517
        %538 = vmatprep.subr.bf16.mxu0 0
        %539 = vmatpush1.bf16.msra.mxu0 %v516
        %540 = vmatprep.subr.bf16.mxu0 0
        %541 = vmatpush2.bf16.msra.mxu0 0
        %542 = vmatprep.subr.bf16.mxu0 0
        %543 = vmatpush2.bf16.msra.mxu0 0
        %544 = vmatprep.subr.bf16.mxu0 0
        %545 = vmatpush2.bf16.msra.mxu0 0
        %546 = vmatprep.subr.bf16.mxu0 0
        %547 = vmatpush2.bf16.msra.mxu0 0
        %548 = vmatprep.subr.bf16.mxu0 0
        %549 = vmatpush2.bf16.msra.mxu0 0
        %550 = vmatprep.subr.bf16.mxu0 0
        %551 = vmatpush2.bf16.msra.mxu0 0
        %552 = vmatprep.subr.bf16.mxu0 0
        %553 = vmatpush2.bf16.msra.mxu0 0
        %554 = vmatprep.subr.bf16.mxu0 0
        %555 = vmatpush2.bf16.msra.mxu0 0
        %556 = vmatprep.mubr.bf16.mxu0 0
        %557 = vmatmul.mubr.bf16.gmra.mxu0 %v522
        %v558 = vpop.f32.mrf.mxu0
        %v559 = vadd.f32 %v506, %v558
        %v560 = vpop.f32.mrf.mxu0
        %v561 = vpop.f32.mrf.mxu0
        %v562 = vpop.f32.mrf.mxu0
        %563 = vdwg.mxu0
        %565 = vrot.lane.b32.xlu0 %v559, 120
        %v566 = vpop.permute.xlu0 %565
        %568 = vrot.lane.b32.xlu0 %v559, 112
        %v569 = vpop.permute.xlu0 %568
        %571 = vrot.lane.b32.xlu0 %v559, 104
        %v572 = vpop.permute.xlu0 %571
        %574 = vrot.lane.b32.xlu0 %v559, 96
        %v575 = vpop.permute.xlu0 %574
        %577 = vrot.lane.b32.xlu0 %v559, 88
        %v578 = vpop.permute.xlu0 %577
        %580 = vrot.lane.b32.xlu0 %v559, 80
        %v581 = vpop.permute.xlu0 %580
        %583 = vrot.lane.b32.xlu0 %v559, 72
        %v584 = vpop.permute.xlu0 %583
        %586 = vrot.lane.b32.xlu0 %v559, 64
        %v587 = vpop.permute.xlu0 %586
        %589 = vrot.lane.b32.xlu0 %v559, 56
        %v590 = vpop.permute.xlu0 %589
        %592 = vrot.lane.b32.xlu0 %v559, 48
        %v593 = vpop.permute.xlu0 %592
        %595 = vrot.lane.b32.xlu0 %v559, 40
        %v596 = vpop.permute.xlu0 %595
        %v598 = vcombine.low %v559, %v569
        %v599 = vcombine.high %v559, %v569
        %v601 = vunpack.c.l.s4 1983009808
        %v602 = vunpack.c.0.s8 %v601
        %v603 = vlaneseq
        %v604 = vshrl.u32 %v603, 7
        %v605 = vsub.s32 %v602, %v604
        %v606 = vrot.slane %v598, %v605
        %v608 = vunpack.c.l.s4 1983009808
        %v609 = vunpack.c.0.s8 %v608
        %v610 = vlaneseq
        %v611 = vshrl.u32 %v610, 7
        %v612 = vsub.s32 %v609, %v611
        %v613 = vrot.slane %v599, %v612
        %v614 = vcombine.low %v566, %v572
        %v615 = vcombine.high %v566, %v572
        %v617 = vunpack.c.l.s4 1983009808
        %v618 = vunpack.c.0.s8 %v617
        %v619 = vlaneseq
        %v620 = vshrl.u32 %v619, 7
        %v621 = vsub.s32 %v618, %v620
        %v622 = vrot.slane %v614, %v621
        %v624 = vunpack.c.l.s4 1983009808
        %v625 = vunpack.c.0.s8 %v624
        %v626 = vlaneseq
        %v627 = vshrl.u32 %v626, 7
        %v628 = vsub.s32 %v625, %v627
        %v629 = vrot.slane %v615, %v628
        %v630 = vcombine.low %v575, %v581
        %v631 = vcombine.high %v575, %v581
        %v633 = vunpack.c.l.s4 1983009808
        %v634 = vunpack.c.0.s8 %v633
        %v635 = vlaneseq
        %v636 = vshrl.u32 %v635, 7
        %v637 = vsub.s32 %v634, %v636
        %v638 = vrot.slane %v630, %v637
        %v640 = vunpack.c.l.s4 1983009808
        %v641 = vunpack.c.0.s8 %v640
        %v642 = vlaneseq
        %v643 = vshrl.u32 %v642, 7
        %v644 = vsub.s32 %v641, %v643
        %v645 = vrot.slane %v631, %v644
        %v646 = vcombine.low %v578, %v584
        %v647 = vcombine.high %v578, %v584
        %v649 = vunpack.c.l.s4 1983009808
        %v650 = vunpack.c.0.s8 %v649
        %v651 = vlaneseq
        %v652 = vshrl.u32 %v651, 7
        %v653 = vsub.s32 %v650, %v652
        %v654 = vrot.slane %v646, %v653
        %v656 = vunpack.c.l.s4 1983009808
        %v657 = vunpack.c.0.s8 %v656
        %v658 = vlaneseq
        %v659 = vshrl.u32 %v658, 7
        %v660 = vsub.s32 %v657, %v659
        %v661 = vrot.slane %v647, %v660
        %v662 = vcombine.low %v606, %v622
        %v663 = vcombine.high %v606, %v622
        %v665 = vunpack.c.l.s4 1934713408
        %v666 = vunpack.c.0.s8 %v665
        %v667 = vlaneseq
        %v668 = vshrl.u32 %v667, 7
        %v669 = vsub.s32 %v666, %v668
        %v670 = vrot.slane %v662, %v669
        %v672 = vunpack.c.l.s4 1934713408
        %v673 = vunpack.c.0.s8 %v672
        %v674 = vlaneseq
        %v675 = vshrl.u32 %v674, 7
        %v676 = vsub.s32 %v673, %v675
        %v677 = vrot.slane %v663, %v676
        %v678 = vcombine.low %v613, %v629
        %v679 = vcombine.high %v613, %v629
        %v681 = vunpack.c.l.s4 1934713408
        %v682 = vunpack.c.0.s8 %v681
        %v683 = vlaneseq
        %v684 = vshrl.u32 %v683, 7
        %v685 = vsub.s32 %v682, %v684
        %v686 = vrot.slane %v678, %v685
        %v688 = vunpack.c.l.s4 1934713408
        %v689 = vunpack.c.0.s8 %v688
        %v690 = vlaneseq
        %v691 = vshrl.u32 %v690, 7
        %v692 = vsub.s32 %v689, %v691
        %v693 = vrot.slane %v679, %v692
        %v694 = vcombine.low %v638, %v654
        %v695 = vcombine.high %v638, %v654
        %v697 = vunpack.c.l.s4 1934713408
        %v698 = vunpack.c.0.s8 %v697
        %v699 = vlaneseq
        %v700 = vshrl.u32 %v699, 7
        %v701 = vsub.s32 %v698, %v700
        %v702 = vrot.slane %v694, %v701
        %v704 = vunpack.c.l.s4 1934713408
        %v705 = vunpack.c.0.s8 %v704
        %v706 = vlaneseq
        %v707 = vshrl.u32 %v706, 7
        %v708 = vsub.s32 %v705, %v707
        %v709 = vrot.slane %v695, %v708
        %v710 = vcombine.low %v645, %v661
        %v711 = vcombine.high %v645, %v661
        %v713 = vunpack.c.l.s4 1934713408
        %v714 = vunpack.c.0.s8 %v713
        %v715 = vlaneseq
        %v716 = vshrl.u32 %v715, 7
        %v717 = vsub.s32 %v714, %v716
        %v718 = vrot.slane %v710, %v717
        %v720 = vunpack.c.l.s4 1934713408
        %v721 = vunpack.c.0.s8 %v720
        %v722 = vlaneseq
        %v723 = vshrl.u32 %v722, 7
        %v724 = vsub.s32 %v721, %v723
        %v725 = vrot.slane %v711, %v724
        %v726 = vcombine.low %v670, %v702
        %v727 = vcombine.high %v670, %v702
        %v728 = vcombine.low %v677, %v709
        %v729 = vcombine.high %v677, %v709
        %v730 = vcombine.low %v686, %v718
        %v731 = vcombine.high %v686, %v718
        %v732 = vcombine.low %v693, %v725
        %v733 = vcombine.high %v693, %v725
        %v734 = vcombine.low %v587, %v593
        %v735 = vcombine.high %v587, %v593
        %v737 = vunpack.c.l.s4 1983009808
        %v738 = vunpack.c.0.s8 %v737
        %v739 = vlaneseq
        %v740 = vshrl.u32 %v739, 7
        %v741 = vsub.s32 %v738, %v740
        %v742 = vrot.slane %v734, %v741
        %v744 = vunpack.c.l.s4 1983009808
        %v745 = vunpack.c.0.s8 %v744
        %v746 = vlaneseq
        %v747 = vshrl.u32 %v746, 7
        %v748 = vsub.s32 %v745, %v747
        %v749 = vrot.slane %v735, %v748
        %v750 = vcombine.low %v590, %v596
        %v751 = vcombine.high %v590, %v596
        %v753 = vunpack.c.l.s4 1983009808
        %v754 = vunpack.c.0.s8 %v753
        %v755 = vlaneseq
        %v756 = vshrl.u32 %v755, 7
        %v757 = vsub.s32 %v754, %v756
        %v758 = vrot.slane %v750, %v757
        %v760 = vunpack.c.l.s4 1983009808
        %v761 = vunpack.c.0.s8 %v760
        %v762 = vlaneseq
        %v763 = vshrl.u32 %v762, 7
        %v764 = vsub.s32 %v761, %v763
        %v765 = vrot.slane %v751, %v764
        %v766 = vcombine.low %v742, %v758
        %v767 = vcombine.high %v742, %v758
        %v769 = vunpack.c.l.s4 1934713408
        %v770 = vunpack.c.0.s8 %v769
        %v771 = vlaneseq
        %v772 = vshrl.u32 %v771, 7
        %v773 = vsub.s32 %v770, %v772
        %v774 = vrot.slane %v766, %v773
        %v776 = vunpack.c.l.s4 1934713408
        %v777 = vunpack.c.0.s8 %v776
        %v778 = vlaneseq
        %v779 = vshrl.u32 %v778, 7
        %v780 = vsub.s32 %v777, %v779
        %v781 = vrot.slane %v767, %v780
        %v782 = vcombine.low %v749, %v765
        %v783 = vcombine.high %v749, %v765
        %v785 = vunpack.c.l.s4 1934713408
        %v786 = vunpack.c.0.s8 %v785
        %v787 = vlaneseq
        %v788 = vshrl.u32 %v787, 7
        %v789 = vsub.s32 %v786, %v788
        %v790 = vrot.slane %v782, %v789
        %v792 = vunpack.c.l.s4 1934713408
        %v793 = vunpack.c.0.s8 %v792
        %v794 = vlaneseq
        %v795 = vshrl.u32 %v794, 7
        %v796 = vsub.s32 %v793, %v795
        %v797 = vrot.slane %v783, %v796
        %v798 = vcombine.high %v774, 0.0
        %v799 = vcombine.high %v781, 0.0
        %v800 = vcombine.high %v790, 0.0
        %v801 = vcombine.high %v797, 0.0
        %v802 = vcombine.low %v726, %v728
        %v803 = vcombine.high %v726, %v728
        %v805 = vunpack.c.l.s4 1983009808
        %v806 = vunpack.c.0.s8 %v805
        %v807 = vlaneseq
        %v808 = vshrl.u32 %v807, 7
        %v809 = vsub.s32 %v806, %v808
        %v810 = vrot.slane %v802, %v809
        %v812 = vunpack.c.l.s4 1983009808
        %v813 = vunpack.c.0.s8 %v812
        %v814 = vlaneseq
        %v815 = vshrl.u32 %v814, 7
        %v816 = vsub.s32 %v813, %v815
        %v817 = vrot.slane %v803, %v816
        %v818 = vcombine.low %v727, %v729
        %v819 = vcombine.high %v727, %v729
        %v821 = vunpack.c.l.s4 1983009808
        %v822 = vunpack.c.0.s8 %v821
        %v823 = vlaneseq
        %v824 = vshrl.u32 %v823, 7
        %v825 = vsub.s32 %v822, %v824
        %v826 = vrot.slane %v818, %v825
        %v828 = vunpack.c.l.s4 1983009808
        %v829 = vunpack.c.0.s8 %v828
        %v830 = vlaneseq
        %v831 = vshrl.u32 %v830, 7
        %v832 = vsub.s32 %v829, %v831
        %v833 = vrot.slane %v819, %v832
        %v834 = vcombine.low %v730, %v732
        %v835 = vcombine.high %v730, %v732
        %v837 = vunpack.c.l.s4 1983009808
        %v838 = vunpack.c.0.s8 %v837
        %v839 = vlaneseq
        %v840 = vshrl.u32 %v839, 7
        %v841 = vsub.s32 %v838, %v840
        %v842 = vrot.slane %v834, %v841
        %v844 = vunpack.c.l.s4 1983009808
        %v845 = vunpack.c.0.s8 %v844
        %v846 = vlaneseq
        %v847 = vshrl.u32 %v846, 7
        %v848 = vsub.s32 %v845, %v847
        %v849 = vrot.slane %v835, %v848
        %v850 = vcombine.low %v731, %v733
        %v851 = vcombine.high %v731, %v733
        %v853 = vunpack.c.l.s4 1983009808
        %v854 = vunpack.c.0.s8 %v853
        %v855 = vlaneseq
        %v856 = vshrl.u32 %v855, 7
        %v857 = vsub.s32 %v854, %v856
        %v858 = vrot.slane %v850, %v857
        %v860 = vunpack.c.l.s4 1983009808
        %v861 = vunpack.c.0.s8 %v860
        %v862 = vlaneseq
        %v863 = vshrl.u32 %v862, 7
        %v864 = vsub.s32 %v861, %v863
        %v865 = vrot.slane %v851, %v864
        %v866 = vcombine.low %v810, %v826
        %v867 = vcombine.high %v810, %v826
        %v869 = vunpack.c.l.s4 1934713408
        %v870 = vunpack.c.0.s8 %v869
        %v871 = vlaneseq
        %v872 = vshrl.u32 %v871, 7
        %v873 = vsub.s32 %v870, %v872
        %v874 = vrot.slane %v866, %v873
        %v876 = vunpack.c.l.s4 1934713408
        %v877 = vunpack.c.0.s8 %v876
        %v878 = vlaneseq
        %v879 = vshrl.u32 %v878, 7
        %v880 = vsub.s32 %v877, %v879
        %v881 = vrot.slane %v867, %v880
        %v882 = vcombine.low %v817, %v833
        %v883 = vcombine.high %v817, %v833
        %v885 = vunpack.c.l.s4 1934713408
        %v886 = vunpack.c.0.s8 %v885
        %v887 = vlaneseq
        %v888 = vshrl.u32 %v887, 7
        %v889 = vsub.s32 %v886, %v888
        %v890 = vrot.slane %v882, %v889
        %v892 = vunpack.c.l.s4 1934713408
        %v893 = vunpack.c.0.s8 %v892
        %v894 = vlaneseq
        %v895 = vshrl.u32 %v894, 7
        %v896 = vsub.s32 %v893, %v895
        %v897 = vrot.slane %v883, %v896
        %v898 = vcombine.low %v842, %v858
        %v899 = vcombine.high %v842, %v858
        %v901 = vunpack.c.l.s4 1934713408
        %v902 = vunpack.c.0.s8 %v901
        %v903 = vlaneseq
        %v904 = vshrl.u32 %v903, 7
        %v905 = vsub.s32 %v902, %v904
        %v906 = vrot.slane %v898, %v905
        %v908 = vunpack.c.l.s4 1934713408
        %v909 = vunpack.c.0.s8 %v908
        %v910 = vlaneseq
        %v911 = vshrl.u32 %v910, 7
        %v912 = vsub.s32 %v909, %v911
        %v913 = vrot.slane %v899, %v912
        %v914 = vcombine.low %v849, %v865
        %v915 = vcombine.high %v849, %v865
        %v917 = vunpack.c.l.s4 1934713408
        %v918 = vunpack.c.0.s8 %v917
        %v919 = vlaneseq
        %v920 = vshrl.u32 %v919, 7
        %v921 = vsub.s32 %v918, %v920
        %v922 = vrot.slane %v914, %v921
        %v924 = vunpack.c.l.s4 1934713408
        %v925 = vunpack.c.0.s8 %v924
        %v926 = vlaneseq
        %v927 = vshrl.u32 %v926, 7
        %v928 = vsub.s32 %v925, %v927
        %v929 = vrot.slane %v915, %v928
        %v930 = vcombine.low %v874, %v906
        %v931 = vcombine.high %v874, %v906
        %v932 = vcombine.low %v881, %v913
        %v933 = vcombine.high %v881, %v913
        %v934 = vcombine.low %v890, %v922
        %v935 = vcombine.high %v890, %v922
        %v936 = vcombine.low %v897, %v929
        %v937 = vcombine.high %v897, %v929
        %v938 = vcombine.low %v774, %v781
        %v940 = vunpack.c.l.s4 1983009808
        %v941 = vunpack.c.0.s8 %v940
        %v942 = vlaneseq
        %v943 = vshrl.u32 %v942, 7
        %v944 = vsub.s32 %v941, %v943
        %v945 = vrot.slane %v938, %v944
        %v946 = vcombine.low %v798, %v799
        %v948 = vunpack.c.l.s4 1983009808
        %v949 = vunpack.c.0.s8 %v948
        %v950 = vlaneseq
        %v951 = vshrl.u32 %v950, 7
        %v952 = vsub.s32 %v949, %v951
        %v953 = vrot.slane %v946, %v952
        %v954 = vcombine.low %v790, %v797
        %v956 = vunpack.c.l.s4 1983009808
        %v957 = vunpack.c.0.s8 %v956
        %v958 = vlaneseq
        %v959 = vshrl.u32 %v958, 7
        %v960 = vsub.s32 %v957, %v959
        %v961 = vrot.slane %v954, %v960
        %v962 = vcombine.low %v800, %v801
        %v964 = vunpack.c.l.s4 1983009808
        %v965 = vunpack.c.0.s8 %v964
        %v966 = vlaneseq
        %v967 = vshrl.u32 %v966, 7
        %v968 = vsub.s32 %v965, %v967
        %v969 = vrot.slane %v962, %v968
        %v970 = vcombine.low %v945, %v953
        %v971 = vcombine.high %v945, %v953
        %v973 = vunpack.c.l.s4 1934713408
        %v974 = vunpack.c.0.s8 %v973
        %v975 = vlaneseq
        %v976 = vshrl.u32 %v975, 7
        %v977 = vsub.s32 %v974, %v976
        %v978 = vrot.slane %v970, %v977
        %v980 = vunpack.c.l.s4 1934713408
        %v981 = vunpack.c.0.s8 %v980
        %v982 = vlaneseq
        %v983 = vshrl.u32 %v982, 7
        %v984 = vsub.s32 %v981, %v983
        %v985 = vrot.slane %v971, %v984
        %v986 = vcombine.low %v961, %v969
        %v987 = vcombine.high %v961, %v969
        %v989 = vunpack.c.l.s4 1934713408
        %v990 = vunpack.c.0.s8 %v989
        %v991 = vlaneseq
        %v992 = vshrl.u32 %v991, 7
        %v993 = vsub.s32 %v990, %v992
        %v994 = vrot.slane %v986, %v993
        %v996 = vunpack.c.l.s4 1934713408
        %v997 = vunpack.c.0.s8 %v996
        %v998 = vlaneseq
        %v999 = vshrl.u32 %v998, 7
        %v1000 = vsub.s32 %v997, %v999
        %v1001 = vrot.slane %v987, %v1000
        %v1002 = vcombine.low %v978, %v994
        %v1003 = vcombine.high %v978, %v994
        %v1004 = vcombine.low %v985, %v1001
        %v1005 = vcombine.high %v985, %v1001
        %v1006 = vpack.c.bf16 %v930, %v930
        %v1007 = vpack.c.bf16 %v931, %v931
        %v1008 = vpack.c.bf16 %v932, %v932
        %v1009 = vpack.c.bf16 %v933, %v933
        %v1010 = vpack.c.bf16 %v934, %v934
        %v1011 = vpack.c.bf16 %v935, %v935
        %v1012 = vpack.c.bf16 %v936, %v936
        %v1013 = vpack.c.bf16 %v937, %v937
        %v1014 = vpack.c.bf16 %v1002, %v1002
        %v1015 = vpack.c.bf16 %v1003, %v1003
        %v1016 = vpack.c.bf16 %v1004, %v1004
        %v1017 = vpack.c.bf16 %v1005, %v1005
        %vm1018 = vcmask 64512
        %v1020 = vsel %vm1018, %v1006, 0
        %v1023 = vsel %vm1018, %v1010, 0
        %1025 = vmatprep.subr.bf16.mxu0 0
        %1026 = vmatpush1.bf16.xpose.msra.mxu0 0
        %1027 = vmatprep.subr.bf16.mxu0 0
        %1028 = vmatpush1.bf16.xpose.msra.mxu0 0
        %1029 = vmatprep.subr.bf16.mxu0 0
        %1030 = vmatpush1.bf16.xpose.msra.mxu0 0
        %1031 = vmatprep.subr.bf16.mxu0 0
        %1032 = vmatpush1.bf16.xpose.msra.mxu0 0
        %1033 = vmatprep.subr.bf16.mxu0 0
        %1034 = vmatpush1.bf16.xpose.msra.mxu0 0
        %1035 = vmatprep.subr.bf16.mxu0 0
        %1036 = vmatpush1.bf16.xpose.msra.mxu0 0
        %1037 = vmatprep.subr.bf16.mxu0 0
        %1038 = vmatpush1.bf16.xpose.msra.mxu0 0
        %1039 = vmatprep.subr.bf16.mxu0 0
        %1040 = vmatpush1.bf16.xpose.msra.mxu0 %v1023
        %1041 = vmatprep.subr.bf16.mxu0 0
        %1042 = vmatpush2.bf16.xpose.msra.mxu0 0
        %1043 = vmatprep.subr.bf16.mxu0 0
        %1044 = vmatpush2.bf16.xpose.msra.mxu0 0
        %1045 = vmatprep.subr.bf16.mxu0 0
        %1046 = vmatpush2.bf16.xpose.msra.mxu0 0
        %1047 = vmatprep.subr.bf16.mxu0 0
        %1048 = vmatpush2.bf16.xpose.msra.mxu0 0
        %1049 = vmatprep.subr.bf16.mxu0 0
        %1050 = vmatpush2.bf16.xpose.msra.mxu0 0
        %1051 = vmatprep.subr.bf16.mxu0 0
        %1052 = vmatpush2.bf16.xpose.msra.mxu0 0
        %1053 = vmatprep.subr.bf16.mxu0 0
        %1054 = vmatpush2.bf16.xpose.msra.mxu0 0
        %1055 = vmatprep.subr.bf16.mxu0 0
        %1056 = vmatpush2.bf16.xpose.msra.mxu0 0
        %1057 = vmatprep.mubr.bf16.mxu0 0
        %1058 = vmatmul.mubr.bf16.gmra.mxu0 %v1020
        %v1059 = vpop.f32.mrf.mxu0
        %v1060 = vadd.f32 0.0, %v1059
        %v1061 = vpop.f32.mrf.mxu0
        %v1062 = vpop.f32.mrf.mxu0
        %v1063 = vpop.f32.mrf.mxu0
        %1064 = vdwg.mxu0
        %v1066 = vsel %vm1018, %v1007, 0
        %v1069 = vsel %vm1018, %v1011, 0
        %1071 = vmatprep.subr.bf16.mxu0 0
        %1072 = vmatpush1.bf16.xpose.msra.mxu0 0
        %1073 = vmatprep.subr.bf16.mxu0 0
        %1074 = vmatpush1.bf16.xpose.msra.mxu0 0
        %1075 = vmatprep.subr.bf16.mxu0 0
        %1076 = vmatpush1.bf16.xpose.msra.mxu0 0
        %1077 = vmatprep.subr.bf16.mxu0 0
        %1078 = vmatpush1.bf16.xpose.msra.mxu0 0
        %1079 = vmatprep.subr.bf16.mxu0 0
        %1080 = vmatpush1.bf16.xpose.msra.mxu0 0
        %1081 = vmatprep.subr.bf16.mxu0 0
        %1082 = vmatpush1.bf16.xpose.msra.mxu0 0
        %1083 = vmatprep.subr.bf16.mxu0 0
        %1084 = vmatpush1.bf16.xpose.msra.mxu0 0
        %1085 = vmatprep.subr.bf16.mxu0 0
        %1086 = vmatpush1.bf16.xpose.msra.mxu0 %v1069
        %1087 = vmatprep.subr.bf16.mxu0 0
        %1088 = vmatpush2.bf16.xpose.msra.mxu0 0
        %1089 = vmatprep.subr.bf16.mxu0 0
        %1090 = vmatpush2.bf16.xpose.msra.mxu0 0
        %1091 = vmatprep.subr.bf16.mxu0 0
        %1092 = vmatpush2.bf16.xpose.msra.mxu0 0
        %1093 = vmatprep.subr.bf16.mxu0 0
        %1094 = vmatpush2.bf16.xpose.msra.mxu0 0
        %1095 = vmatprep.subr.bf16.mxu0 0
        %1096 = vmatpush2.bf16.xpose.msra.mxu0 0
        %1097 = vmatprep.subr.bf16.mxu0 0
        %1098 = vmatpush2.bf16.xpose.msra.mxu0 0
        %1099 = vmatprep.subr.bf16.mxu0 0
        %1100 = vmatpush2.bf16.xpose.msra.mxu0 0
        %1101 = vmatprep.subr.bf16.mxu0 0
        %1102 = vmatpush2.bf16.xpose.msra.mxu0 0
        %1103 = vmatprep.mubr.bf16.mxu0 0
        %1104 = vmatmul.mubr.bf16.gmra.mxu0 %v1066
        %v1105 = vpop.f32.mrf.mxu0
        %v1106 = vadd.f32 0.0, %v1105
        %v1107 = vpop.f32.mrf.mxu0
        %v1108 = vpop.f32.mrf.mxu0
        %v1109 = vpop.f32.mrf.mxu0
        %1110 = vdwg.mxu0
        %v1112 = vsel %vm1018, %v1008, 0
        %v1115 = vsel %vm1018, %v1012, 0
        %1117 = vmatprep.subr.bf16.mxu0 0
        %1118 = vmatpush1.bf16.xpose.msra.mxu0 0
        %1119 = vmatprep.subr.bf16.mxu0 0
        %1120 = vmatpush1.bf16.xpose.msra.mxu0 0
        %1121 = vmatprep.subr.bf16.mxu0 0
        %1122 = vmatpush1.bf16.xpose.msra.mxu0 0
        %1123 = vmatprep.subr.bf16.mxu0 0
        %1124 = vmatpush1.bf16.xpose.msra.mxu0 0
        %1125 = vmatprep.subr.bf16.mxu0 0
        %1126 = vmatpush1.bf16.xpose.msra.mxu0 0
        %1127 = vmatprep.subr.bf16.mxu0 0
        %1128 = vmatpush1.bf16.xpose.msra.mxu0 0
        %1129 = vmatprep.subr.bf16.mxu0 0
        %1130 = vmatpush1.bf16.xpose.msra.mxu0 0
        %1131 = vmatprep.subr.bf16.mxu0 0
        %1132 = vmatpush1.bf16.xpose.msra.mxu0 %v1115
        %1133 = vmatprep.subr.bf16.mxu0 0
        %1134 = vmatpush2.bf16.xpose.msra.mxu0 0
        %1135 = vmatprep.subr.bf16.mxu0 0
        %1136 = vmatpush2.bf16.xpose.msra.mxu0 0
        %1137 = vmatprep.subr.bf16.mxu0 0
        %1138 = vmatpush2.bf16.xpose.msra.mxu0 0
        %1139 = vmatprep.subr.bf16.mxu0 0
        %1140 = vmatpush2.bf16.xpose.msra.mxu0 0
        %1141 = vmatprep.subr.bf16.mxu0 0
        %1142 = vmatpush2.bf16.xpose.msra.mxu0 0
        %1143 = vmatprep.subr.bf16.mxu0 0
        %1144 = vmatpush2.bf16.xpose.msra.mxu0 0
        %1145 = vmatprep.subr.bf16.mxu0 0
        %1146 = vmatpush2.bf16.xpose.msra.mxu0 0
        %1147 = vmatprep.subr.bf16.mxu0 0
        %1148 = vmatpush2.bf16.xpose.msra.mxu0 0
        %1149 = vmatprep.mubr.bf16.mxu0 0
        %1150 = vmatmul.mubr.bf16.gmra.mxu0 %v1112
        %v1151 = vpop.f32.mrf.mxu0
        %v1152 = vadd.f32 0.0, %v1151
        %v1153 = vpop.f32.mrf.mxu0
        %v1154 = vpop.f32.mrf.mxu0
        %v1155 = vpop.f32.mrf.mxu0
        %1156 = vdwg.mxu0
        %v1158 = vsel %vm1018, %v1009, 0
        %v1161 = vsel %vm1018, %v1013, 0
        %1163 = vmatprep.subr.bf16.mxu0 0
        %1164 = vmatpush1.bf16.xpose.msra.mxu0 0
        %1165 = vmatprep.subr.bf16.mxu0 0
        %1166 = vmatpush1.bf16.xpose.msra.mxu0 0
        %1167 = vmatprep.subr.bf16.mxu0 0
        %1168 = vmatpush1.bf16.xpose.msra.mxu0 0
        %1169 = vmatprep.subr.bf16.mxu0 0
        %1170 = vmatpush1.bf16.xpose.msra.mxu0 0
        %1171 = vmatprep.subr.bf16.mxu0 0
        %1172 = vmatpush1.bf16.xpose.msra.mxu0 0
        %1173 = vmatprep.subr.bf16.mxu0 0
        %1174 = vmatpush1.bf16.xpose.msra.mxu0 0
        %1175 = vmatprep.subr.bf16.mxu0 0
        %1176 = vmatpush1.bf16.xpose.msra.mxu0 0
        %1177 = vmatprep.subr.bf16.mxu0 0
        %1178 = vmatpush1.bf16.xpose.msra.mxu0 %v1161
        %1179 = vmatprep.subr.bf16.mxu0 0
        %1180 = vmatpush2.bf16.xpose.msra.mxu0 0
        %1181 = vmatprep.subr.bf16.mxu0 0
        %1182 = vmatpush2.bf16.xpose.msra.mxu0 0
        %1183 = vmatprep.subr.bf16.mxu0 0
        %1184 = vmatpush2.bf16.xpose.msra.mxu0 0
        %1185 = vmatprep.subr.bf16.mxu0 0
        %1186 = vmatpush2.bf16.xpose.msra.mxu0 0
        %1187 = vmatprep.subr.bf16.mxu0 0
        %1188 = vmatpush2.bf16.xpose.msra.mxu0 0
        %1189 = vmatprep.subr.bf16.mxu0 0
        %1190 = vmatpush2.bf16.xpose.msra.mxu0 0
        %1191 = vmatprep.subr.bf16.mxu0 0
        %1192 = vmatpush2.bf16.xpose.msra.mxu0 0
        %1193 = vmatprep.subr.bf16.mxu0 0
        %1194 = vmatpush2.bf16.xpose.msra.mxu0 0
        %1195 = vmatprep.mubr.bf16.mxu0 0
        %1196 = vmatmul.mubr.bf16.gmra.mxu0 %v1158
        %v1197 = vpop.f32.mrf.mxu0
        %v1198 = vadd.f32 0.0, %v1197
        %v1199 = vpop.f32.mrf.mxu0
        %v1200 = vpop.f32.mrf.mxu0
        %v1201 = vpop.f32.mrf.mxu0
        %1202 = vdwg.mxu0
        %s1203 = sld [smem:[#allocation3 + %s35]]
        %v1204 = vlaneseq
        %v1205 = vand.u32 %v1204, 127
        %v1206 = vstv %s1203
        %vm1207 = vcmp.lt.s32.totalorder %v1205, %v1206
        %v1208 = vsel %vm1207, 1, 0
        %vm1209 = vcmp.eq.s32.totalorder %v1208, 1
        %v1210 = vsel %vm1209, %v1060, -1000000.0
        %v1211 = vsel %vm1209, %v1106, -1000000.0
        %v1212 = vsel %vm1209, %v1152, -1000000.0
        %v1213 = vsel %vm1209, %v1198, -1000000.0
        %v1214 = vsel %vm1018, %v1210, -inf
        %1215 = vmax.xlane.f32.xlu0 %v1214
        %v1216 = vpop.xlane.xlu0 %1215
        %v1217 = vsel %vm1018, %v1211, -inf
        %1218 = vmax.xlane.f32.xlu0 %v1217
        %v1219 = vpop.xlane.xlu0 %1218
        %v1220 = vsel %vm1018, %v1212, -inf
        %1221 = vmax.xlane.f32.xlu0 %v1220
        %v1222 = vpop.xlane.xlu0 %1221
        %v1223 = vsel %vm1018, %v1213, -inf
        %1224 = vmax.xlane.f32.xlu0 %v1223
        %v1225 = vpop.xlane.xlu0 %1224
        %v1226 = vsub.f32 %v1210, %v1216
        %v1227 = vsub.f32 %v1211, %v1219
        %v1228 = vsub.f32 %v1212, %v1222
        %v1229 = vsub.f32 %v1213, %v1225
        %v1230 = vmul.f32 %v1226, 1.442695
        %v1231 = vpow.pop %v1230
        %v1232 = vmul.f32 %v1227, 1.442695
        %v1233 = vpow.pop %v1232
        %v1234 = vmul.f32 %v1228, 1.442695
        %v1235 = vpow.pop %v1234
        %v1236 = vmul.f32 %v1229, 1.442695
        %v1237 = vpow.pop %v1236
        %v1238 = vsel %vm1018, %v1231, 0.0
        %1239 = vadd.xlane.f32.xlu0 %v1238
        %v1240 = vpop.xlane.xlu0 %1239
        %v1241 = vsel %vm1018, %v1233, 0.0
        %1242 = vadd.xlane.f32.xlu0 %v1241
        %v1243 = vpop.xlane.xlu0 %1242
        %v1244 = vsel %vm1018, %v1235, 0.0
        %1245 = vadd.xlane.f32.xlu0 %v1244
        %v1246 = vpop.xlane.xlu0 %1245
        %v1247 = vsel %vm1018, %v1237, 0.0
        %1248 = vadd.xlane.f32.xlu0 %v1247
        %v1249 = vpop.xlane.xlu0 %1248
        %v1250 = vpack.c.bf16 %v1231, %v1231
        %v1251 = vpack.c.bf16 %v1233, %v1233
        %v1252 = vpack.c.bf16 %v1235, %v1235
        %v1253 = vpack.c.bf16 %v1237, %v1237
        %v1255 = vsel %vm1018, %v1250, 0
        %vm1257 = vcmask 1043456
        %v1259 = vsel %vm1257, %v1014, 0
        %1261 = vmatprep.subr.bf16.mxu0 0
        %1262 = vmatpush1.bf16.msra.mxu0 0
        %1263 = vmatprep.subr.bf16.mxu0 0
        %1264 = vmatpush1.bf16.msra.mxu0 0
        %1265 = vmatprep.subr.bf16.mxu0 0
        %1266 = vmatpush1.bf16.msra.mxu0 0
        %1267 = vmatprep.subr.bf16.mxu0 0
        %1268 = vmatpush1.bf16.msra.mxu0 0
        %1269 = vmatprep.subr.bf16.mxu0 0
        %1270 = vmatpush1.bf16.msra.mxu0 0
        %1271 = vmatprep.subr.bf16.mxu0 0
        %1272 = vmatpush1.bf16.msra.mxu0 0
        %1273 = vmatprep.subr.bf16.mxu0 0
        %1274 = vmatpush1.bf16.msra.mxu0 0
        %1275 = vmatprep.subr.bf16.mxu0 0
        %1276 = vmatpush1.bf16.msra.mxu0 %v1259
        %1277 = vmatprep.subr.bf16.mxu0 0
        %1278 = vmatpush2.bf16.msra.mxu0 0
        %1279 = vmatprep.subr.bf16.mxu0 0
        %1280 = vmatpush2.bf16.msra.mxu0 0
        %1281 = vmatprep.subr.bf16.mxu0 0
        %1282 = vmatpush2.bf16.msra.mxu0 0
        %1283 = vmatprep.subr.bf16.mxu0 0
        %1284 = vmatpush2.bf16.msra.mxu0 0
        %1285 = vmatprep.subr.bf16.mxu0 0
        %1286 = vmatpush2.bf16.msra.mxu0 0
        %1287 = vmatprep.subr.bf16.mxu0 0
        %1288 = vmatpush2.bf16.msra.mxu0 0
        %1289 = vmatprep.subr.bf16.mxu0 0
        %1290 = vmatpush2.bf16.msra.mxu0 0
        %1291 = vmatprep.subr.bf16.mxu0 0
        %1292 = vmatpush2.bf16.msra.mxu0 0
        %1293 = vmatprep.mubr.bf16.mxu0 0
        %1294 = vmatmul.mubr.bf16.gmra.mxu0 %v1255
        %v1295 = vpop.f32.mrf.mxu0
        %v1296 = vadd.f32 0.0, %v1295
        %v1297 = vpop.f32.mrf.mxu0
        %v1298 = vpop.f32.mrf.mxu0
        %v1299 = vpop.f32.mrf.mxu0
        %1300 = vdwg.mxu0
        %v1302 = vsel %vm1018, %v1251, 0
        %v1305 = vsel %vm1257, %v1015, 0
        %1307 = vmatprep.subr.bf16.mxu0 0
        %1308 = vmatpush1.bf16.msra.mxu0 0
        %1309 = vmatprep.subr.bf16.mxu0 0
        %1310 = vmatpush1.bf16.msra.mxu0 0
        %1311 = vmatprep.subr.bf16.mxu0 0
        %1312 = vmatpush1.bf16.msra.mxu0 0
        %1313 = vmatprep.subr.bf16.mxu0 0
        %1314 = vmatpush1.bf16.msra.mxu0 0
        %1315 = vmatprep.subr.bf16.mxu0 0
        %1316 = vmatpush1.bf16.msra.mxu0 0
        %1317 = vmatprep.subr.bf16.mxu0 0
        %1318 = vmatpush1.bf16.msra.mxu0 0
        %1319 = vmatprep.subr.bf16.mxu0 0
        %1320 = vmatpush1.bf16.msra.mxu0 0
        %1321 = vmatprep.subr.bf16.mxu0 0
        %1322 = vmatpush1.bf16.msra.mxu0 %v1305
        %1323 = vmatprep.subr.bf16.mxu0 0
        %1324 = vmatpush2.bf16.msra.mxu0 0
        %1325 = vmatprep.subr.bf16.mxu0 0
        %1326 = vmatpush2.bf16.msra.mxu0 0
        %1327 = vmatprep.subr.bf16.mxu0 0
        %1328 = vmatpush2.bf16.msra.mxu0 0
        %1329 = vmatprep.subr.bf16.mxu0 0
        %1330 = vmatpush2.bf16.msra.mxu0 0
        %1331 = vmatprep.subr.bf16.mxu0 0
        %1332 = vmatpush2.bf16.msra.mxu0 0
        %1333 = vmatprep.subr.bf16.mxu0 0
        %1334 = vmatpush2.bf16.msra.mxu0 0
        %1335 = vmatprep.subr.bf16.mxu0 0
        %1336 = vmatpush2.bf16.msra.mxu0 0
        %1337 = vmatprep.subr.bf16.mxu0 0
        %1338 = vmatpush2.bf16.msra.mxu0 0
        %1339 = vmatprep.mubr.bf16.mxu0 0
        %1340 = vmatmul.mubr.bf16.gmra.mxu0 %v1302
        %v1341 = vpop.f32.mrf.mxu0
        %v1342 = vadd.f32 0.0, %v1341
        %v1343 = vpop.f32.mrf.mxu0
        %v1344 = vpop.f32.mrf.mxu0
        %v1345 = vpop.f32.mrf.mxu0
        %1346 = vdwg.mxu0
        %v1348 = vsel %vm1018, %v1252, 0
        %v1351 = vsel %vm1257, %v1016, 0
        %1353 = vmatprep.subr.bf16.mxu0 0
        %1354 = vmatpush1.bf16.msra.mxu0 0
        %1355 = vmatprep.subr.bf16.mxu0 0
        %1356 = vmatpush1.bf16.msra.mxu0 0
        %1357 = vmatprep.subr.bf16.mxu0 0
        %1358 = vmatpush1.bf16.msra.mxu0 0
        %1359 = vmatprep.subr.bf16.mxu0 0
        %1360 = vmatpush1.bf16.msra.mxu0 0
        %1361 = vmatprep.subr.bf16.mxu0 0
        %1362 = vmatpush1.bf16.msra.mxu0 0
        %1363 = vmatprep.subr.bf16.mxu0 0
        %1364 = vmatpush1.bf16.msra.mxu0 0
        %1365 = vmatprep.subr.bf16.mxu0 0
        %1366 = vmatpush1.bf16.msra.mxu0 0
        %1367 = vmatprep.subr.bf16.mxu0 0
        %1368 = vmatpush1.bf16.msra.mxu0 %v1351
        %1369 = vmatprep.subr.bf16.mxu0 0
        %1370 = vmatpush2.bf16.msra.mxu0 0
        %1371 = vmatprep.subr.bf16.mxu0 0
        %1372 = vmatpush2.bf16.msra.mxu0 0
        %1373 = vmatprep.subr.bf16.mxu0 0
        %1374 = vmatpush2.bf16.msra.mxu0 0
        %1375 = vmatprep.subr.bf16.mxu0 0
        %1376 = vmatpush2.bf16.msra.mxu0 0
        %1377 = vmatprep.subr.bf16.mxu0 0
        %1378 = vmatpush2.bf16.msra.mxu0 0
        %1379 = vmatprep.subr.bf16.mxu0 0
        %1380 = vmatpush2.bf16.msra.mxu0 0
        %1381 = vmatprep.subr.bf16.mxu0 0
        %1382 = vmatpush2.bf16.msra.mxu0 0
        %1383 = vmatprep.subr.bf16.mxu0 0
        %1384 = vmatpush2.bf16.msra.mxu0 0
        %1385 = vmatprep.mubr.bf16.mxu0 0
        %1386 = vmatmul.mubr.bf16.gmra.mxu0 %v1348
        %v1387 = vpop.f32.mrf.mxu0
        %v1388 = vadd.f32 0.0, %v1387
        %v1389 = vpop.f32.mrf.mxu0
        %v1390 = vpop.f32.mrf.mxu0
        %v1391 = vpop.f32.mrf.mxu0
        %1392 = vdwg.mxu0
        %v1394 = vsel %vm1018, %v1253, 0
        %v1397 = vsel %vm1257, %v1017, 0
        %1399 = vmatprep.subr.bf16.mxu0 0
        %1400 = vmatpush1.bf16.msra.mxu0 0
        %1401 = vmatprep.subr.bf16.mxu0 0
        %1402 = vmatpush1.bf16.msra.mxu0 0
        %1403 = vmatprep.subr.bf16.mxu0 0
        %1404 = vmatpush1.bf16.msra.mxu0 0
        %1405 = vmatprep.subr.bf16.mxu0 0
        %1406 = vmatpush1.bf16.msra.mxu0 0
        %1407 = vmatprep.subr.bf16.mxu0 0
        %1408 = vmatpush1.bf16.msra.mxu0 0
        %1409 = vmatprep.subr.bf16.mxu0 0
        %1410 = vmatpush1.bf16.msra.mxu0 0
        %1411 = vmatprep.subr.bf16.mxu0 0
        %1412 = vmatpush1.bf16.msra.mxu0 0
        %1413 = vmatprep.subr.bf16.mxu0 0
        %1414 = vmatpush1.bf16.msra.mxu0 %v1397
        %1415 = vmatprep.subr.bf16.mxu0 0
        %1416 = vmatpush2.bf16.msra.mxu0 0
        %1417 = vmatprep.subr.bf16.mxu0 0
        %1418 = vmatpush2.bf16.msra.mxu0 0
        %1419 = vmatprep.subr.bf16.mxu0 0
        %1420 = vmatpush2.bf16.msra.mxu0 0
        %1421 = vmatprep.subr.bf16.mxu0 0
        %1422 = vmatpush2.bf16.msra.mxu0 0
        %1423 = vmatprep.subr.bf16.mxu0 0
        %1424 = vmatpush2.bf16.msra.mxu0 0
        %1425 = vmatprep.subr.bf16.mxu0 0
        %1426 = vmatpush2.bf16.msra.mxu0 0
        %1427 = vmatprep.subr.bf16.mxu0 0
        %1428 = vmatpush2.bf16.msra.mxu0 0
        %1429 = vmatprep.subr.bf16.mxu0 0
        %1430 = vmatpush2.bf16.msra.mxu0 0
        %1431 = vmatprep.mubr.bf16.mxu0 0
        %1432 = vmatmul.mubr.bf16.gmra.mxu0 %v1394
        %v1433 = vpop.f32.mrf.mxu0
        %v1434 = vadd.f32 0.0, %v1433
        %v1435 = vpop.f32.mrf.mxu0
        %v1436 = vpop.f32.mrf.mxu0
        %v1437 = vpop.f32.mrf.mxu0
        %1438 = vdwg.mxu0
        %v1439 = vrcp.pop %v1240
        %v1440 = vrcp.pop %v1243
        %v1441 = vrcp.pop %v1246
        %v1442 = vrcp.pop %v1249
        %v1443 = vmul.f32 %v1296, %v1439
        %v1444 = vmul.f32 %v1342, %v1440
        %v1445 = vmul.f32 %v1388, %v1441
        %v1446 = vmul.f32 %v1434, %v1442
        %v1447 = vcombine.low %v1443, %v1445
        %v1448 = vcombine.high %v1443, %v1445
        %v1450 = vunpack.c.l.s4 1983009808
        %v1451 = vunpack.c.0.s8 %v1450
        %v1452 = vlaneseq
        %v1453 = vshrl.u32 %v1452, 7
        %v1454 = vsub.s32 %v1451, %v1453
        %v1455 = vrot.slane %v1447, %v1454
        %v1457 = vunpack.c.l.s4 1983009808
        %v1458 = vunpack.c.0.s8 %v1457
        %v1459 = vlaneseq
        %v1460 = vshrl.u32 %v1459, 7
        %v1461 = vsub.s32 %v1458, %v1460
        %v1462 = vrot.slane %v1448, %v1461
        %v1463 = vcombine.low %v1444, %v1446
        %v1464 = vcombine.high %v1444, %v1446
        %v1466 = vunpack.c.l.s4 1983009808
        %v1467 = vunpack.c.0.s8 %v1466
        %v1468 = vlaneseq
        %v1469 = vshrl.u32 %v1468, 7
        %v1470 = vsub.s32 %v1467, %v1469
        %v1471 = vrot.slane %v1463, %v1470
        %v1473 = vunpack.c.l.s4 1983009808
        %v1474 = vunpack.c.0.s8 %v1473
        %v1475 = vlaneseq
        %v1476 = vshrl.u32 %v1475, 7
        %v1477 = vsub.s32 %v1474, %v1476
        %v1478 = vrot.slane %v1464, %v1477
        %v1479 = vcombine.low %v1455, %v1471
        %v1480 = vcombine.high %v1455, %v1471
        %v1482 = vunpack.c.l.s4 1934713408
        %v1483 = vunpack.c.0.s8 %v1482
        %v1484 = vlaneseq
        %v1485 = vshrl.u32 %v1484, 7
        %v1486 = vsub.s32 %v1483, %v1485
        %v1487 = vrot.slane %v1479, %v1486
        %v1489 = vunpack.c.l.s4 1934713408
        %v1490 = vunpack.c.0.s8 %v1489
        %v1491 = vlaneseq
        %v1492 = vshrl.u32 %v1491, 7
        %v1493 = vsub.s32 %v1490, %v1492
        %v1494 = vrot.slane %v1480, %v1493
        %v1495 = vcombine.low %v1462, %v1478
        %v1496 = vcombine.high %v1462, %v1478
        %v1498 = vunpack.c.l.s4 1934713408
        %v1499 = vunpack.c.0.s8 %v1498
        %v1500 = vlaneseq
        %v1501 = vshrl.u32 %v1500, 7
        %v1502 = vsub.s32 %v1499, %v1501
        %v1503 = vrot.slane %v1495, %v1502
        %v1505 = vunpack.c.l.s4 1934713408
        %v1506 = vunpack.c.0.s8 %v1505
        %v1507 = vlaneseq
        %v1508 = vshrl.u32 %v1507, 7
        %v1509 = vsub.s32 %v1506, %v1508
        %v1510 = vrot.slane %v1496, %v1509
        %v1511 = vcombine.high %v1487, 0.0
        %v1512 = vcombine.high %v1494, 0.0
        %v1513 = vcombine.high %v1503, 0.0
        %v1514 = vcombine.high %v1510, 0.0
        %v1515 = vcombine.low %v1487, %v1494
        %v1517 = vunpack.c.l.s4 1983009808
        %v1518 = vunpack.c.0.s8 %v1517
        %v1519 = vlaneseq
        %v1520 = vshrl.u32 %v1519, 7
        %v1521 = vsub.s32 %v1518, %v1520
        %v1522 = vrot.slane %v1515, %v1521
        %v1523 = vcombine.low %v1511, %v1512
        %v1525 = vunpack.c.l.s4 1983009808
        %v1526 = vunpack.c.0.s8 %v1525
        %v1527 = vlaneseq
        %v1528 = vshrl.u32 %v1527, 7
        %v1529 = vsub.s32 %v1526, %v1528
        %v1530 = vrot.slane %v1523, %v1529
        %v1531 = vcombine.low %v1503, %v1510
        %v1533 = vunpack.c.l.s4 1983009808
        %v1534 = vunpack.c.0.s8 %v1533
        %v1535 = vlaneseq
        %v1536 = vshrl.u32 %v1535, 7
        %v1537 = vsub.s32 %v1534, %v1536
        %v1538 = vrot.slane %v1531, %v1537
        %v1539 = vcombine.low %v1513, %v1514
        %v1541 = vunpack.c.l.s4 1983009808
        %v1542 = vunpack.c.0.s8 %v1541
        %v1543 = vlaneseq
        %v1544 = vshrl.u32 %v1543, 7
        %v1545 = vsub.s32 %v1542, %v1544
        %v1546 = vrot.slane %v1539, %v1545
        %v1547 = vcombine.low %v1522, %v1530
        %v1548 = vcombine.high %v1522, %v1530
        %v1550 = vunpack.c.l.s4 1934713408
        %v1551 = vunpack.c.0.s8 %v1550
        %v1552 = vlaneseq
        %v1553 = vshrl.u32 %v1552, 7
        %v1554 = vsub.s32 %v1551, %v1553
        %v1555 = vrot.slane %v1547, %v1554
        %v1557 = vunpack.c.l.s4 1934713408
        %v1558 = vunpack.c.0.s8 %v1557
        %v1559 = vlaneseq
        %v1560 = vshrl.u32 %v1559, 7
        %v1561 = vsub.s32 %v1558, %v1560
        %v1562 = vrot.slane %v1548, %v1561
        %v1563 = vcombine.low %v1538, %v1546
        %v1564 = vcombine.high %v1538, %v1546
        %v1566 = vunpack.c.l.s4 1934713408
        %v1567 = vunpack.c.0.s8 %v1566
        %v1568 = vlaneseq
        %v1569 = vshrl.u32 %v1568, 7
        %v1570 = vsub.s32 %v1567, %v1569
        %v1571 = vrot.slane %v1563, %v1570
        %v1573 = vunpack.c.l.s4 1934713408
        %v1574 = vunpack.c.0.s8 %v1573
        %v1575 = vlaneseq
        %v1576 = vshrl.u32 %v1575, 7
        %v1577 = vsub.s32 %v1574, %v1576
        %v1578 = vrot.slane %v1564, %v1577
        %v1579 = vcombine.low %v1555, %v1571
        %v1580 = vcombine.high %v1555, %v1571
        %v1581 = vcombine.low %v1562, %v1578
        %v1582 = vcombine.high %v1562, %v1578
        %1584 = vrot.lane.b32.xlu0 %v1580, 8
        %v1585 = vpop.permute.xlu0 %1584
        %1588 = vrot.lane.b32.xlu0 %v1581, 16
        %v1589 = vpop.permute.xlu0 %1588
        %1592 = vrot.lane.b32.xlu0 %v1582, 24
        %v1593 = vpop.permute.xlu0 %1592
        %v1595 = vsel %vm1018, %v1579, %v1585
        %vm1596 = vcmask 130048
        %v1597 = vsel %vm1596, %v1595, %v1589
        %vm1598 = vcmask 195584
        %v1599 = vsel %vm1598, %v1597, %v1593
        %v1600 = vpack.c.bf16 %v1599, %v1599
        %v1601 = vld [vmem:[%s4] sm:$0xf]
        %v1602 = vld [vmem:[%s4 + $0x4] sm:$0xf]
        %v1603 = vld [vmem:[%s4 + $0x8] sm:$0xf]
        %v1604 = vld [vmem:[%s4 + $0xc] sm:$0xf]
        %v1605 = vld [vmem:[%s5] sm:$0x1]
        %v1607 = vlaneseq
        %v1608 = vshrl.u32 %v1607, 7
        %v1609 = vsub.s32 0, %v1608
        %v1610 = vrot.slane %v1605, %v1609
        %v1616 = vunpack.c.l.b16 %v1601
        %v1617 = vunpack.c.l.b16 %v1602
        %v1618 = vunpack.c.l.b16 %v1603
        %v1619 = vunpack.c.l.b16 %v1604
        %v1620 = vpack.c.b16 %v1617, %v1616
        %v1621 = vpack.c.b16 %v1619, %v1618
        %v1625 = vsel %vm520, %v1600, 0
        %1627 = vmatprep.subr.bf16.mxu0 0
        %1628 = vmatpush1.bf16.msra.mxu0 0
        %1629 = vmatprep.subr.bf16.mxu0 0
        %1630 = vmatpush1.bf16.msra.mxu0 0
        %1631 = vmatprep.subr.bf16.mxu0 0
        %1632 = vmatpush1.bf16.msra.mxu0 0
        %1633 = vmatprep.subr.bf16.mxu0 0
        %1634 = vmatpush1.bf16.msra.mxu0 0
        %1635 = vmatprep.subr.bf16.mxu0 0
        %1636 = vmatpush1.bf16.msra.mxu0 0
        %1637 = vmatprep.subr.bf16.mxu0 0
        %1638 = vmatpush1.bf16.msra.mxu0 0
        %1639 = vmatprep.subr.bf16.mxu0 0
        %1640 = vmatpush1.bf16.msra.mxu0 %v1621
        %1641 = vmatprep.subr.bf16.mxu0 0
        %1642 = vmatpush1.bf16.msra.mxu0 %v1620
        %1643 = vmatprep.subr.bf16.mxu0 0
        %1644 = vmatpush2.bf16.msra.mxu0 0
        %1645 = vmatprep.subr.bf16.mxu0 0
        %1646 = vmatpush2.bf16.msra.mxu0 0
        %1647 = vmatprep.subr.bf16.mxu0 0
        %1648 = vmatpush2.bf16.msra.mxu0 0
        %1649 = vmatprep.subr.bf16.mxu0 0
        %1650 = vmatpush2.bf16.msra.mxu0 0
        %1651 = vmatprep.subr.bf16.mxu0 0
        %1652 = vmatpush2.bf16.msra.mxu0 0
        %1653 = vmatprep.subr.bf16.mxu0 0
        %1654 = vmatpush2.bf16.msra.mxu0 0
        %1655 = vmatprep.subr.bf16.mxu0 0
        %1656 = vmatpush2.bf16.msra.mxu0 0
        %1657 = vmatprep.subr.bf16.mxu0 0
        %1658 = vmatpush2.bf16.msra.mxu0 0
        %1659 = vmatprep.mubr.bf16.mxu0 0
        %1660 = vmatmul.mubr.bf16.gmra.mxu0 %v1625
        %v1661 = vpop.f32.mrf.mxu0
        %v1662 = vadd.f32 %v1610, %v1661
        %v1663 = vpop.f32.mrf.mxu0
        %v1664 = vpop.f32.mrf.mxu0
        %v1665 = vpop.f32.mrf.mxu0
        %1666 = vdwg.mxu0
        %v1667 = vadd.f32 %v1662, %v495
        %v1668 = vld [vmem:[#allocation4] sm:$0x1]
        %v1669 = vld [vmem:[#allocation7] sm:$0x1]
        %v1670 = vsel %vm520, %v1667, 0.0
        %1671 = vadd.xlane.f32.xlu0 %v1670
        %v1672 = vpop.xlane.xlu0 %1671
        %v1673 = vrcp.pop 32.0
        %v1674 = vmul.f32 %v1672, %v1673
        %v1675 = vsub.f32 %v1667, %v1674
        %v1676 = vmul.f32 %v1675, %v1675
        %v1677 = vsel %vm520, %v1676, 0.0
        %1678 = vadd.xlane.f32.xlu0 %v1677
        %v1679 = vpop.xlane.xlu0 %1678
        %v1680 = vmul.f32 %v1679, %v1673
        %v1681 = vadd.f32 %v1680, 1e-05
        %v1682 = vrsqrt.pop %v1681
        %v1683 = vmul.f32 %v1675, %v1682
        %v1685 = vlaneseq
        %v1686 = vshrl.u32 %v1685, 7
        %v1687 = vsub.s32 0, %v1686
        %v1688 = vrot.slane %v1668, %v1687
        %v1690 = vmul.f32 %v1683, %v1688
        %v1692 = vlaneseq
        %v1693 = vshrl.u32 %v1692, 7
        %v1694 = vsub.s32 0, %v1693
        %v1695 = vrot.slane %v1669, %v1694
        %v1697 = vadd.f32 %v1690, %v1695
        %v1698 = vpack.c.bf16 %v1697, %v1697
        %v1699 = vld [vmem:[#allocation9] sm:$0xf]
        %v1700 = vld [vmem:[#allocation9 + $0x4] sm:$0xf]
        %v1701 = vld [vmem:[#allocation9 + $0x8] sm:$0xf]
        %v1702 = vld [vmem:[#allocation9 + $0xc] sm:$0xf]
        %v1703 = vld [vmem:[#allocation10] sm:$0x1]
        %v1705 = vlaneseq
        %v1706 = vshrl.u32 %v1705, 7
        %v1707 = vsub.s32 0, %v1706
        %v1708 = vrot.slane %v1703, %v1707
        %v1714 = vunpack.c.l.b16 %v1699
        %v1715 = vunpack.c.l.b16 %v1700
        %v1716 = vunpack.c.l.b16 %v1701
        %v1717 = vunpack.c.l.b16 %v1702
        %v1718 = vpack.c.b16 %v1715, %v1714
        %v1719 = vpack.c.b16 %v1717, %v1716
        %v1723 = vsel %vm520, %v1698, 0
        %1725 = vmatprep.subr.bf16.mxu0 0
        %1726 = vmatpush1.bf16.msra.mxu0 0
        %1727 = vmatprep.subr.bf16.mxu0 0
        %1728 = vmatpush1.bf16.msra.mxu0 0
        %1729 = vmatprep.subr.bf16.mxu0 0
        %1730 = vmatpush1.bf16.msra.mxu0 0
        %1731 = vmatprep.subr.bf16.mxu0 0
        %1732 = vmatpush1.bf16.msra.mxu0 0
        %1733 = vmatprep.subr.bf16.mxu0 0
        %1734 = vmatpush1.bf16.msra.mxu0 0
        %1735 = vmatprep.subr.bf16.mxu0 0
        %1736 = vmatpush1.bf16.msra.mxu0 0
        %1737 = vmatprep.subr.bf16.mxu0 0
        %1738 = vmatpush1.bf16.msra.mxu0 %v1719
        %1739 = vmatprep.subr.bf16.mxu0 0
        %1740 = vmatpush1.bf16.msra.mxu0 %v1718
        %1741 = vmatprep.subr.bf16.mxu0 0
        %1742 = vmatpush2.bf16.msra.mxu0 0
        %1743 = vmatprep.subr.bf16.mxu0 0
        %1744 = vmatpush2.bf16.msra.mxu0 0
        %1745 = vmatprep.subr.bf16.mxu0 0
        %1746 = vmatpush2.bf16.msra.mxu0 0
        %1747 = vmatprep.subr.bf16.mxu0 0
        %1748 = vmatpush2.bf16.msra.mxu0 0
        %1749 = vmatprep.subr.bf16.mxu0 0
        %1750 = vmatpush2.bf16.msra.mxu0 0
        %1751 = vmatprep.subr.bf16.mxu0 0
        %1752 = vmatpush2.bf16.msra.mxu0 0
        %1753 = vmatprep.subr.bf16.mxu0 0
        %1754 = vmatpush2.bf16.msra.mxu0 0
        %1755 = vmatprep.subr.bf16.mxu0 0
        %1756 = vmatpush2.bf16.msra.mxu0 0
        %1757 = vmatprep.mubr.bf16.mxu0 0
        %1758 = vmatmul.mubr.bf16.gmra.mxu0 %v1723
        %v1759 = vpop.f32.mrf.mxu0
        %v1760 = vadd.f32 %v1708, %v1759
        %v1761 = vpop.f32.mrf.mxu0
        %v1762 = vpop.f32.mrf.mxu0
        %v1763 = vpop.f32.mrf.mxu0
        %1764 = vdwg.mxu0
        %v1765 = vmax.f32 %v1760, 0.0
        %v1766 = vpack.c.bf16 %v1765, %v1765
        %v1767 = vld [vmem:[%s10] sm:$0xf]
        %v1768 = vld [vmem:[%s10 + $0x4] sm:$0xf]
        %v1769 = vld [vmem:[%s10 + $0x8] sm:$0xf]
        %v1770 = vld [vmem:[%s10 + $0xc] sm:$0xf]
        %v1771 = vld [vmem:[%s10 + $0x10] sm:$0xf]
        %v1772 = vld [vmem:[%s10 + $0x14] sm:$0xf]
        %v1773 = vld [vmem:[%s10 + $0x18] sm:$0xf]
        %v1774 = vld [vmem:[%s10 + $0x1c] sm:$0xf]
        %v1775 = vld [vmem:[%s11] sm:$0x1]
        %v1777 = vlaneseq
        %v1778 = vshrl.u32 %v1777, 7
        %v1779 = vsub.s32 0, %v1778
        %v1780 = vrot.slane %v1775, %v1779
        %v1790 = vunpack.c.l.b16 %v1767
        %v1791 = vunpack.c.l.b16 %v1768
        %v1792 = vunpack.c.l.b16 %v1769
        %v1793 = vunpack.c.l.b16 %v1770
        %v1794 = vunpack.c.l.b16 %v1771
        %v1795 = vunpack.c.l.b16 %v1772
        %v1796 = vunpack.c.l.b16 %v1773
        %v1797 = vunpack.c.l.b16 %v1774
        %v1798 = vpack.c.b16 %v1791, %v1790
        %v1799 = vpack.c.b16 %v1793, %v1792
        %v1800 = vpack.c.b16 %v1795, %v1794
        %v1801 = vpack.c.b16 %v1797, %v1796
        %vm1806 = vcmask 523264
        %v1808 = vsel %vm1806, %v1766, 0
        %1810 = vmatprep.subr.bf16.mxu0 0
        %1811 = vmatpush1.bf16.msra.mxu0 0
        %1812 = vmatprep.subr.bf16.mxu0 0
        %1813 = vmatpush1.bf16.msra.mxu0 0
        %1814 = vmatprep.subr.bf16.mxu0 0
        %1815 = vmatpush1.bf16.msra.mxu0 0
        %1816 = vmatprep.subr.bf16.mxu0 0
        %1817 = vmatpush1.bf16.msra.mxu0 0
        %1818 = vmatprep.subr.bf16.mxu0 0
        %1819 = vmatpush1.bf16.msra.mxu0 %v1801
        %1820 = vmatprep.subr.bf16.mxu0 0
        %1821 = vmatpush1.bf16.msra.mxu0 %v1800
        %1822 = vmatprep.subr.bf16.mxu0 0
        %1823 = vmatpush1.bf16.msra.mxu0 %v1799
        %1824 = vmatprep.subr.bf16.mxu0 0
        %1825 = vmatpush1.bf16.msra.mxu0 %v1798
        %1826 = vmatprep.subr.bf16.mxu0 0
        %1827 = vmatpush2.bf16.msra.mxu0 0
        %1828 = vmatprep.subr.bf16.mxu0 0
        %1829 = vmatpush2.bf16.msra.mxu0 0
        %1830 = vmatprep.subr.bf16.mxu0 0
        %1831 = vmatpush2.bf16.msra.mxu0 0
        %1832 = vmatprep.subr.bf16.mxu0 0
        %1833 = vmatpush2.bf16.msra.mxu0 0
        %1834 = vmatprep.subr.bf16.mxu0 0
        %1835 = vmatpush2.bf16.msra.mxu0 0
        %1836 = vmatprep.subr.bf16.mxu0 0
        %1837 = vmatpush2.bf16.msra.mxu0 0
        %1838 = vmatprep.subr.bf16.mxu0 0
        %1839 = vmatpush2.bf16.msra.mxu0 0
        %1840 = vmatprep.subr.bf16.mxu0 0
        %1841 = vmatpush2.bf16.msra.mxu0 0
        %1842 = vmatprep.mubr.bf16.mxu0 0
        %1843 = vmatmul.mubr.bf16.gmra.mxu0 %v1808
        %v1844 = vpop.f32.mrf.mxu0
        %v1845 = vadd.f32 %v1780, %v1844
        %v1846 = vpop.f32.mrf.mxu0
        %v1847 = vpop.f32.mrf.mxu0
        %v1848 = vpop.f32.mrf.mxu0
        %1849 = vdwg.mxu0
        %v1850 = vadd.f32 %v1845, %v1697
        %v1851 = vld [vmem:[%s12] sm:$0x1]
        %v1852 = vld [vmem:[%s13] sm:$0x1]
        %v1853 = vsel %vm520, %v1850, 0.0
        %1854 = vadd.xlane.f32.xlu0 %v1853
        %v1855 = vpop.xlane.xlu0 %1854
        %v1856 = vmul.f32 %v1855, %v1673
        %v1857 = vsub.f32 %v1850, %v1856
        %v1858 = vmul.f32 %v1857, %v1857
        %v1859 = vsel %vm520, %v1858, 0.0
        %1860 = vadd.xlane.f32.xlu0 %v1859
        %v1861 = vpop.xlane.xlu0 %1860
        %v1862 = vmul.f32 %v1861, %v1673
        %v1863 = vadd.f32 %v1862, 1e-05
        %v1864 = vrsqrt.pop %v1863
        %v1865 = vmul.f32 %v1857, %v1864
        %v1867 = vlaneseq
        %v1868 = vshrl.u32 %v1867, 7
        %v1869 = vsub.s32 0, %v1868
        %v1870 = vrot.slane %v1851, %v1869
        %v1872 = vmul.f32 %v1865, %v1870
        %v1874 = vlaneseq
        %v1875 = vshrl.u32 %v1874, 7
        %v1876 = vsub.s32 0, %v1875
        %v1877 = vrot.slane %v1852, %v1876
        %v1879 = vadd.f32 %v1872, %v1877
        %1880 = vst.msk [vmem:[%s489] sm:$0xff] %vm520, %v1879
        %s1881 = sand.u32 %s321, 1
        %s1882 = scalar_lea.sflag [#allocation6], %s1881
        %s1883 = sand.u32 %s321, 1
        %s1884 = smul.addr %s1883, 8
        %s1885 = scalar_lea.vmem [#allocation12], %s1884
        // Predicated region
        $region89: #{tpu_custom_call.1} parent=71 // pred_check
          %p1886 = pneg %p331
        $region90: #{tpu_custom_call.1} parent=71 // pred_check_branch
          %1888 = sbr.rel (%p1886) target = $region92
        $region91: #{tpu_custom_call.1} parent=71 // pred_region
          %s1890 = ssub.s32 128, 128
          %1891 = vsyncadd %s1882, %s1890
          %s1892 = smul.addr %s35, 128
          %s1893 = scalar_lea.hbm %s14, %s1892
          %s1895 = sshll.u32 %s1885, 4
          %s1896 = int_to_ptr.vmem [resolvable:$true] %s1895
          %1898 = dma.vmem_to_hbm [thread:$0]  %s1896, 128, %s1893, %s1882
        $region92: #{tpu_custom_call.1} parent=71 // pred_fallthru
          _
      $region72: #{tpu_custom_call.1} parent=5 // pred_fallthru
        _
      %p1899 = scmp.le.s32.totalorder 2, %s30
      // Predicated region
      $region93: #{tpu_custom_call.1} parent=5 // pred_check
        %p1900 = pneg %p1899
      $region94: #{tpu_custom_call.1} parent=5 // pred_check_branch
        %1902 = sbr.rel (%p1900) target = $region96
      $region95: #{tpu_custom_call.1} parent=5 // pred_region
        %s1903 = ssub.s32 %s30, 2
        // Predicated region
        $region97: #{tpu_custom_call.1} parent=95 // pred_check
          %p1904 = pneg %p337
        $region98: #{tpu_custom_call.1} parent=95 // pred_check_branch
          %1906 = sbr.rel (%p1904) target = $region100
        $region99: #{tpu_custom_call.1} parent=95 // pred_region
          %s1907 = sand.u32 %s322, 1
          %s1908 = scalar_lea.sflag [#allocation6], %s1907
          %s1909 = sand.u32 %s322, 1
          %s1910 = smul.addr %s1909, 8
          %s1911 = scalar_lea.vmem [#allocation12], %s1910
          %1912 = dma.done %s1908, 128
        $region100: #{tpu_custom_call.1} parent=95 // pred_fallthru
          _
      $region96: #{tpu_custom_call.1} parent=5 // pred_fallthru
        _
    $region6: #{tpu_custom_call.1} parent=1 // loop_footer
      %s34 = sadd.s32 1, %s30
    $region7: #{tpu_custom_call.1} parent=1 // loop_footer_branch
      %29 = sbr.rel target = $region3
    $region8: #{tpu_custom_call.1} parent=1 // loop_exit
      _
    %1913 = vsyncpa [#allocation5], 1
    %s1914 = scalar_lea.sflag [#allocation5], 1
    %1915 = vsyncpa %s1914, 1
    %1916 = vsyncpa [#allocation8], 1
    %1917 = vsyncpa [#allocation11], 1
    %1918 = vsyncpa [#allocation6], 1
    %s1919 = scalar_lea.sflag [#allocation6], 1
    %1920 = vsyncpa %s1919, 1

</llo_original>
